<compile_context>
chip_gen: v6e
topology: v6e:2x2x1
jax: 0.10.0
libtpu: 0.0.40
codegen_flags: <defaults>
</compile_context>

<pallas_src>
import functools

import jax
import jax.numpy as jnp
from jax.experimental import pallas as pl
from jax.experimental.pallas import tpu as pltpu


def vae_policy_kernel(
    # batch-tiled inputs
    sa_ref, state_ref, noise_ref,
    # weights (bf16) + biases (f32), VMEM-resident across grid steps
    w_e1_ref, b_e1_ref,
    w_e2_ref, b_e2_ref,
    w_head_ref, b_head_ref,
    w_d1s_ref, w_d1z_ref, b_d1_ref,
    w_d2_ref, b_d2_ref,
    w_d3_ref, b_d3_ref,
    # packed output: [TB, out_width] = [u | mean | std | zero padding]
    out_ref,
    *, action_dim, latent_dim, out_width,
):
    f32 = jnp.float32
    bf16 = jnp.bfloat16

    # ---- encoder ----
    # z = relu(e1(cat([state, action], 1)))  (cat done in the wrapper)
    sa = sa_ref[...].astype(bf16)
    h = jnp.dot(sa, w_e1_ref[...], preferred_element_type=f32) + b_e1_ref[...]
    h = jnp.maximum(h, 0.0).astype(bf16)
    # z = relu(e2(z))
    h = jnp.dot(h, w_e2_ref[...], preferred_element_type=f32) + b_e2_ref[...]
    h = jnp.maximum(h, 0.0).astype(bf16)

    # fused mean / log_std heads: one matmul, then lane slices
    ms = jnp.dot(h, w_head_ref[...], preferred_element_type=f32) + b_head_ref[...]
    mean = ms[:, :latent_dim]
    log_std = jnp.clip(ms[:, latent_dim:], -4.0, 15.0)
    std = jnp.exp(log_std)

    # reparameterize: z = mean + std * N(0, 1)   (noise supplied from outside)
    z = mean + std * noise_ref[...]

    # ---- decoder ----
    # a = relu(d1(cat([state, z], 1)))  (split-weight form)
    s = state_ref[...].astype(bf16)
    d = (jnp.dot(s, w_d1s_ref[...], preferred_element_type=f32)
         + jnp.dot(z.astype(bf16), w_d1z_ref[...], preferred_element_type=f32)
         + b_d1_ref[...])
    d = jnp.maximum(d, 0.0).astype(bf16)
    # a = relu(d2(a))
    d = jnp.dot(d, w_d2_ref[...], preferred_element_type=f32) + b_d2_ref[...]
    d = jnp.maximum(d, 0.0).astype(bf16)
    # u = tanh(d3(a))  (max_action == 1.0)
    u = jnp.tanh(jnp.dot(d, w_d3_ref[...], preferred_element_type=f32) + b_d3_ref[...])

    # single lane-dense store: [u | mean | std | zeros]
    pad_w = out_width - (action_dim + 2 * latent_dim)
    pad = jnp.zeros((u.shape[0], pad_w), f32)
    out_ref[...] = jnp.concatenate([u, mean, std, pad], axis=1)


def _round_up(x, m):
    return (x + m - 1) // m * m


def vae_policy_forward(state, action, noise, params):
    """Runs the full VAEPolicy.forward. Returns (u, mean, std)."""
    B, obs_dim = state.shape
    action_dim = action.shape[1]
    latent_dim = noise.shape[1]
    out_width = 128  # lane-dense packed output (action_dim + 2*latent <= 128)

    # batch tiling: small batches run as a single (sublane-aligned) tile;
    # large batches are tiled at 128 rows and sharded across TCs via "parallel".
    tb = 128 if B >= 128 else _round_up(B, 8)
    b_pad = _round_up(B, tb)
    num_tiles = b_pad // tb

    sa = jnp.concatenate([state, action], axis=1)

    def pad_batch(x):
        return jnp.pad(x, ((0, b_pad - B), (0, 0))) if b_pad != B else x

    sa = pad_batch(sa)
    state_p = pad_batch(state)
    noise_p = pad_batch(noise)

    weights = (
        params["w_e1"], params["b_e1"],
        params["w_e2"], params["b_e2"],
        params["w_head"], params["b_head"],
        params["w_d1s"], params["w_d1z"], params["b_d1"],
        params["w_d2"], params["b_d2"],
        params["w_d3"], params["b_d3"],
    )

    def batch_spec(width):
        return pl.BlockSpec((tb, width), lambda i: (i, 0))

    def const_spec(shape):
        return pl.BlockSpec(shape, lambda i: (0, 0))

    in_specs = [batch_spec(sa.shape[1]), batch_spec(obs_dim), batch_spec(latent_dim)]
    in_specs += [const_spec(w.shape) for w in weights]

    kernel = functools.partial(
        vae_policy_kernel,
        action_dim=action_dim, latent_dim=latent_dim, out_width=out_width)

    packed = pl.pallas_call(
        kernel,
        out_shape=jax.ShapeDtypeStruct((b_pad, out_width), jnp.float32),
        grid=(num_tiles,),
        in_specs=in_specs,
        out_specs=pl.BlockSpec((tb, out_width), lambda i: (i, 0)),
        compiler_params=pltpu.CompilerParams(
            dimension_semantics=("parallel",),
            vmem_limit_bytes=16 * 1024 * 1024,
        ),
    )(sa, state_p, noise_p, *weights)

    u = packed[:B, :action_dim]
    mean = packed[:B, action_dim:action_dim + latent_dim]
    std = packed[:B, action_dim + latent_dim:action_dim + 2 * latent_dim]
    return u, mean, std


def init_params(key, obs_dim, action_dim, latent_dim, hidden=750, hidden_pad=768):
    """Synthetic init (uniform +-1/sqrt(fan_in), like PyTorch Linear) for a
    750-hidden network, zero-padded to 768 hidden units (function-preserving)
    and cast to bf16 (weights only)."""
    def linear(k, fan_in, fan_out):
        kw, kb = jax.random.split(k)
        bound = 1.0 / (fan_in ** 0.5)
        w = jax.random.uniform(kw, (fan_in, fan_out), jnp.float32, -bound, bound)
        b = jax.random.uniform(kb, (1, fan_out), jnp.float32, -bound, bound)
        return w, b

    def pad_out(w, b):   # zero-pad output features (hidden) -> hidden_pad
        pc = hidden_pad - w.shape[1]
        return jnp.pad(w, ((0, 0), (0, pc))), jnp.pad(b, ((0, 0), (0, pc)))

    def pad_in(w):       # zero-pad input features (hidden) -> hidden_pad
        pr = hidden_pad - w.shape[0]
        return jnp.pad(w, ((0, pr), (0, 0)))

    keys = jax.random.split(key, 7)
    w_e1, b_e1 = linear(keys[0], obs_dim + action_dim, hidden)
    w_e2, b_e2 = linear(keys[1], hidden, hidden)
    w_mean, b_mean = linear(keys[2], hidden, latent_dim)
    w_ls, b_ls = linear(keys[3], hidden, latent_dim)
    w_d1, b_d1 = linear(keys[4], obs_dim + latent_dim, hidden)
    w_d2, b_d2 = linear(keys[5], hidden, hidden)
    w_d3, b_d3 = linear(keys[6], hidden, action_dim)

    # pad hidden 750 -> 768 (zero rows/cols + zero biases == identical function)
    w_e1, b_e1 = pad_out(w_e1, b_e1)
    w_e2, b_e2 = pad_out(pad_in(w_e2), b_e2)
    w_head = pad_in(jnp.concatenate([w_mean, w_ls], axis=1))       # [768, 2*latent]
    b_head = jnp.concatenate([b_mean, b_ls], axis=1)               # [1, 2*latent]
    w_d1, b_d1 = pad_out(w_d1, b_d1)
    w_d2, b_d2 = pad_out(pad_in(w_d2), b_d2)
    w_d3 = pad_in(w_d3)

    bf16 = jnp.bfloat16
    return dict(
        w_e1=w_e1.astype(bf16), b_e1=b_e1,
        w_e2=w_e2.astype(bf16), b_e2=b_e2,
        w_head=w_head.astype(bf16), b_head=b_head,
        w_d1s=w_d1[:obs_dim].astype(bf16), w_d1z=w_d1[obs_dim:].astype(bf16), b_d1=b_d1,
        w_d2=w_d2.astype(bf16), b_d2=b_d2,
        w_d3=w_d3.astype(bf16), b_d3=b_d3,
    )


if __name__ == "__main__":
    obs_dim, action_dim, latent_dim = 16, 4, 8
    batch = 8

    key = jax.random.PRNGKey(0)
    k_params, k_state, k_action, k_noise = jax.random.split(key, 4)

    params = init_params(k_params, obs_dim, action_dim, latent_dim)
    state = jax.random.normal(k_state, (batch, obs_dim), jnp.float32)
    action = jax.random.normal(k_action, (batch, action_dim), jnp.float32)
    # np.random.normal(0, 1, size=std.size()) in the torch code -> deterministic
    # standard-normal noise generated outside the kernel.
    noise = jax.random.normal(k_noise, (batch, latent_dim), jnp.float32)

    u, mean, std = vae_policy_forward(state, action, noise, params)
    jax.block_until_ready((u, mean, std))

    assert u.shape == (batch, action_dim)
    assert mean.shape == (batch, latent_dim)
    assert std.shape == (batch, latent_dim)
    assert bool(jnp.all(jnp.abs(u) <= 1.0))
    assert bool(jnp.all(std > 0.0))
    assert bool(jnp.all(jnp.isfinite(u))) and bool(jnp.all(jnp.isfinite(mean)))

    print("KERNEL_OK")
</pallas_src>

<mosaic_0001>
module attributes {stable_mosaic.version = 11 : i64} {
  func.func @vae_policy_kernel(%arg0: i32, %arg1: memref<8x20xf32, #tpu.memory_space<vmem>>, %arg2: memref<8x16xf32, #tpu.memory_space<vmem>>, %arg3: memref<8x8xf32, #tpu.memory_space<vmem>>, %arg4: memref<20x768xbf16, #tpu.memory_space<vmem>>, %arg5: memref<1x768xf32, #tpu.memory_space<vmem>>, %arg6: memref<768x768xbf16, #tpu.memory_space<vmem>>, %arg7: memref<1x768xf32, #tpu.memory_space<vmem>>, %arg8: memref<768x16xbf16, #tpu.memory_space<vmem>>, %arg9: memref<1x16xf32, #tpu.memory_space<vmem>>, %arg10: memref<16x768xbf16, #tpu.memory_space<vmem>>, %arg11: memref<8x768xbf16, #tpu.memory_space<vmem>>, %arg12: memref<1x768xf32, #tpu.memory_space<vmem>>, %arg13: memref<768x768xbf16, #tpu.memory_space<vmem>>, %arg14: memref<1x768xf32, #tpu.memory_space<vmem>>, %arg15: memref<768x4xbf16, #tpu.memory_space<vmem>>, %arg16: memref<1x4xf32, #tpu.memory_space<vmem>>, %arg17: memref<8x128xf32, #tpu.memory_space<vmem>>) attributes {dimension_semantics = [#tpu.dimension_semantics<parallel>], iteration_bounds = array<i64: 1>, scalar_prefetch = 0 : i64, scratch_operands = 0 : i64, tpu.core_type = #tpu.core_type<tc>, window_params = [{transform_indices = @transform_0, window_bounds = array<i64: 8, 20>}, {transform_indices = @transform_1, window_bounds = array<i64: 8, 16>}, {transform_indices = @transform_2, window_bounds = array<i64: 8, 8>}, {pipeline_mode = #tpu.pipeline_mode<synchronous>, transform_indices = @transform_3, window_bounds = array<i64: 20, 768>}, {pipeline_mode = #tpu.pipeline_mode<synchronous>, transform_indices = @transform_4, window_bounds = array<i64: 1, 768>}, {pipeline_mode = #tpu.pipeline_mode<synchronous>, transform_indices = @transform_5, window_bounds = array<i64: 768, 768>}, {pipeline_mode = #tpu.pipeline_mode<synchronous>, transform_indices = @transform_6, window_bounds = array<i64: 1, 768>}, {pipeline_mode = #tpu.pipeline_mode<synchronous>, transform_indices = @transform_7, window_bounds = array<i64: 768, 16>}, {pipeline_mode = #tpu.pipeline_mode<synchronous>, transform_indices = @transform_8, window_bounds = array<i64: 1, 16>}, {pipeline_mode = #tpu.pipeline_mode<synchronous>, transform_indices = @transform_9, window_bounds = array<i64: 16, 768>}, {pipeline_mode = #tpu.pipeline_mode<synchronous>, transform_indices = @transform_10, window_bounds = array<i64: 8, 768>}, {pipeline_mode = #tpu.pipeline_mode<synchronous>, transform_indices = @transform_11, window_bounds = array<i64: 1, 768>}, {pipeline_mode = #tpu.pipeline_mode<synchronous>, transform_indices = @transform_12, window_bounds = array<i64: 768, 768>}, {pipeline_mode = #tpu.pipeline_mode<synchronous>, transform_indices = @transform_13, window_bounds = array<i64: 1, 768>}, {pipeline_mode = #tpu.pipeline_mode<synchronous>, transform_indices = @transform_14, window_bounds = array<i64: 768, 4>}, {pipeline_mode = #tpu.pipeline_mode<synchronous>, transform_indices = @transform_15, window_bounds = array<i64: 1, 4>}, {transform_indices = @transform_16, window_bounds = array<i64: 8, 128>}]} {
    %c0 = arith.constant 0 : index
    %c0_0 = arith.constant 0 : index
    %0 = vector.load %arg1[%c0, %c0_0] : memref<8x20xf32, #tpu.memory_space<vmem>>, vector<8x20xf32>
    %1 = arith.truncf %0 : vector<8x20xf32> to vector<8x20xbf16>
    %c0_1 = arith.constant 0 : index
    %c0_2 = arith.constant 0 : index
    %2 = vector.load %arg4[%c0_1, %c0_2] : memref<20x768xbf16, #tpu.memory_space<vmem>>, vector<20x768xbf16>
    %cst = arith.constant dense<0.000000e+00> : vector<8x768xf32>
    %3 = tpu.matmul %1, %2, %cst {dimension_numbers = #tpu.dot_dimension_numbers<[1], [0], [0], [1], [0, 0, 1, 1], [], []>} : vector<8x20xbf16>, vector<20x768xbf16>, vector<8x768xf32> -> vector<8x768xf32>
    %c0_3 = arith.constant 0 : index
    %c0_4 = arith.constant 0 : index
    %4 = vector.load %arg5[%c0_3, %c0_4] : memref<1x768xf32, #tpu.memory_space<vmem>>, vector<1x768xf32>
    %5 = vector.broadcast %4 : vector<1x768xf32> to vector<8x768xf32>
    %6 = arith.addf %3, %5 : vector<8x768xf32>
    %cst_5 = arith.constant 0.000000e+00 : f32
    %7 = vector.broadcast %cst_5 : f32 to vector<8x768xf32>
    %8 = arith.maximumf %6, %7 : vector<8x768xf32>
    %9 = arith.truncf %8 : vector<8x768xf32> to vector<8x768xbf16>
    %c0_6 = arith.constant 0 : index
    %c0_7 = arith.constant 0 : index
    %10 = vector.load %arg6[%c0_6, %c0_7] : memref<768x768xbf16, #tpu.memory_space<vmem>>, vector<768x768xbf16>
    %cst_8 = arith.constant dense<0.000000e+00> : vector<8x768xf32>
    %11 = tpu.matmul %9, %10, %cst_8 {dimension_numbers = #tpu.dot_dimension_numbers<[1], [0], [0], [1], [0, 0, 1, 1], [], []>} : vector<8x768xbf16>, vector<768x768xbf16>, vector<8x768xf32> -> vector<8x768xf32>
    %c0_9 = arith.constant 0 : index
    %c0_10 = arith.constant 0 : index
    %12 = vector.load %arg7[%c0_9, %c0_10] : memref<1x768xf32, #tpu.memory_space<vmem>>, vector<1x768xf32>
    %13 = vector.broadcast %12 : vector<1x768xf32> to vector<8x768xf32>
    %14 = arith.addf %11, %13 : vector<8x768xf32>
    %cst_11 = arith.constant 0.000000e+00 : f32
    %15 = vector.broadcast %cst_11 : f32 to vector<8x768xf32>
    %16 = arith.maximumf %14, %15 : vector<8x768xf32>
    %17 = arith.truncf %16 : vector<8x768xf32> to vector<8x768xbf16>
    %c0_12 = arith.constant 0 : index
    %c0_13 = arith.constant 0 : index
    %18 = vector.load %arg8[%c0_12, %c0_13] : memref<768x16xbf16, #tpu.memory_space<vmem>>, vector<768x16xbf16>
    %cst_14 = arith.constant dense<0.000000e+00> : vector<8x16xf32>
    %19 = tpu.matmul %17, %18, %cst_14 {dimension_numbers = #tpu.dot_dimension_numbers<[1], [0], [0], [1], [0, 0, 1, 1], [], []>} : vector<8x768xbf16>, vector<768x16xbf16>, vector<8x16xf32> -> vector<8x16xf32>
    %c0_15 = arith.constant 0 : index
    %c0_16 = arith.constant 0 : index
    %20 = vector.load %arg9[%c0_15, %c0_16] : memref<1x16xf32, #tpu.memory_space<vmem>>, vector<1x16xf32>
    %21 = vector.broadcast %20 : vector<1x16xf32> to vector<8x16xf32>
    %22 = arith.addf %19, %21 : vector<8x16xf32>
    %23 = vector.extract_strided_slice %22 {offsets = [0, 0], sizes = [8, 8], strides = [1, 1]} : vector<8x16xf32> to vector<8x8xf32>
    %24 = vector.extract_strided_slice %22 {offsets = [0, 8], sizes = [8, 8], strides = [1, 1]} : vector<8x16xf32> to vector<8x8xf32>
    %cst_17 = arith.constant -4.000000e+00 : f32
    %cst_18 = arith.constant 1.500000e+01 : f32
    %25 = vector.broadcast %cst_17 : f32 to vector<8x8xf32>
    %26 = arith.maximumf %25, %24 : vector<8x8xf32>
    %27 = vector.broadcast %cst_18 : f32 to vector<8x8xf32>
    %28 = arith.minimumf %27, %26 : vector<8x8xf32>
    %29 = math.exp %28 : vector<8x8xf32>
    %c0_19 = arith.constant 0 : index
    %c0_20 = arith.constant 0 : index
    %30 = vector.load %arg3[%c0_19, %c0_20] : memref<8x8xf32, #tpu.memory_space<vmem>>, vector<8x8xf32>
    %31 = arith.mulf %29, %30 : vector<8x8xf32>
    %32 = arith.addf %23, %31 : vector<8x8xf32>
    %c0_21 = arith.constant 0 : index
    %c0_22 = arith.constant 0 : index
    %33 = vector.load %arg2[%c0_21, %c0_22] : memref<8x16xf32, #tpu.memory_space<vmem>>, vector<8x16xf32>
    %34 = arith.truncf %33 : vector<8x16xf32> to vector<8x16xbf16>
    %c0_23 = arith.constant 0 : index
    %c0_24 = arith.constant 0 : index
    %35 = vector.load %arg10[%c0_23, %c0_24] : memref<16x768xbf16, #tpu.memory_space<vmem>>, vector<16x768xbf16>
    %cst_25 = arith.constant dense<0.000000e+00> : vector<8x768xf32>
    %36 = tpu.matmul %34, %35, %cst_25 {dimension_numbers = #tpu.dot_dimension_numbers<[1], [0], [0], [1], [0, 0, 1, 1], [], []>} : vector<8x16xbf16>, vector<16x768xbf16>, vector<8x768xf32> -> vector<8x768xf32>
    %37 = arith.truncf %32 : vector<8x8xf32> to vector<8x8xbf16>
    %c0_26 = arith.constant 0 : index
    %c0_27 = arith.constant 0 : index
    %38 = vector.load %arg11[%c0_26, %c0_27] : memref<8x768xbf16, #tpu.memory_space<vmem>>, vector<8x768xbf16>
    %cst_28 = arith.constant dense<0.000000e+00> : vector<8x768xf32>
    %39 = tpu.matmul %37, %38, %cst_28 {dimension_numbers = #tpu.dot_dimension_numbers<[1], [0], [0], [1], [0, 0, 1, 1], [], []>} : vector<8x8xbf16>, vector<8x768xbf16>, vector<8x768xf32> -> vector<8x768xf32>
    %40 = arith.addf %36, %39 : vector<8x768xf32>
    %c0_29 = arith.constant 0 : index
    %c0_30 = arith.constant 0 : index
    %41 = vector.load %arg12[%c0_29, %c0_30] : memref<1x768xf32, #tpu.memory_space<vmem>>, vector<1x768xf32>
    %42 = vector.broadcast %41 : vector<1x768xf32> to vector<8x768xf32>
    %43 = arith.addf %40, %42 : vector<8x768xf32>
    %cst_31 = arith.constant 0.000000e+00 : f32
    %44 = vector.broadcast %cst_31 : f32 to vector<8x768xf32>
    %45 = arith.maximumf %43, %44 : vector<8x768xf32>
    %46 = arith.truncf %45 : vector<8x768xf32> to vector<8x768xbf16>
    %c0_32 = arith.constant 0 : index
    %c0_33 = arith.constant 0 : index
    %47 = vector.load %arg13[%c0_32, %c0_33] : memref<768x768xbf16, #tpu.memory_space<vmem>>, vector<768x768xbf16>
    %cst_34 = arith.constant dense<0.000000e+00> : vector<8x768xf32>
    %48 = tpu.matmul %46, %47, %cst_34 {dimension_numbers = #tpu.dot_dimension_numbers<[1], [0], [0], [1], [0, 0, 1, 1], [], []>} : vector<8x768xbf16>, vector<768x768xbf16>, vector<8x768xf32> -> vector<8x768xf32>
    %c0_35 = arith.constant 0 : index
    %c0_36 = arith.constant 0 : index
    %49 = vector.load %arg14[%c0_35, %c0_36] : memref<1x768xf32, #tpu.memory_space<vmem>>, vector<1x768xf32>
    %50 = vector.broadcast %49 : vector<1x768xf32> to vector<8x768xf32>
    %51 = arith.addf %48, %50 : vector<8x768xf32>
    %cst_37 = arith.constant 0.000000e+00 : f32
    %52 = vector.broadcast %cst_37 : f32 to vector<8x768xf32>
    %53 = arith.maximumf %51, %52 : vector<8x768xf32>
    %54 = arith.truncf %53 : vector<8x768xf32> to vector<8x768xbf16>
    %c0_38 = arith.constant 0 : index
    %c0_39 = arith.constant 0 : index
    %55 = vector.load %arg15[%c0_38, %c0_39] : memref<768x4xbf16, #tpu.memory_space<vmem>>, vector<768x4xbf16>
    %cst_40 = arith.constant dense<0.000000e+00> : vector<8x4xf32>
    %56 = tpu.matmul %54, %55, %cst_40 {dimension_numbers = #tpu.dot_dimension_numbers<[1], [0], [0], [1], [0, 0, 1, 1], [], []>} : vector<8x768xbf16>, vector<768x4xbf16>, vector<8x4xf32> -> vector<8x4xf32>
    %c0_41 = arith.constant 0 : index
    %c0_42 = arith.constant 0 : index
    %57 = vector.load %arg16[%c0_41, %c0_42] : memref<1x4xf32, #tpu.memory_space<vmem>>, vector<1x4xf32>
    %58 = vector.broadcast %57 : vector<1x4xf32> to vector<8x4xf32>
    %59 = arith.addf %56, %58 : vector<8x4xf32>
    %60 = math.tanh %59 : vector<8x4xf32>
    %cst_43 = arith.constant 0.000000e+00 : f32
    %61 = vector.broadcast %cst_43 : f32 to vector<8x108xf32>
    %62 = tpu.concatenate %60, %23, %29, %61 in 1 : vector<8x4xf32>, vector<8x8xf32>, vector<8x8xf32>, vector<8x108xf32> -> vector<8x128xf32>
    %c0_44 = arith.constant 0 : index
    %c0_45 = arith.constant 0 : index
    %63 = vector.load %arg17[%c0_44, %c0_45] : memref<8x128xf32, #tpu.memory_space<vmem>>, vector<8x128xf32>
    tpu.vector_store %arg17[%c0_44, %c0_45], %62 {strides = array<i32>} : memref<8x128xf32, #tpu.memory_space<vmem>>, vector<8x128xf32>,
    return
  }
  func.func @transform_0(%arg0: i32) -> (i32, i32) {
    %c0_i32 = arith.constant 0 : i32
    %c0_i32_0 = arith.constant 0 : i32
    return %arg0, %c0_i32 : i32, i32
  }
  func.func @transform_1(%arg0: i32) -> (i32, i32) {
    %c0_i32 = arith.constant 0 : i32
    %c0_i32_0 = arith.constant 0 : i32
    return %arg0, %c0_i32 : i32, i32
  }
  func.func @transform_2(%arg0: i32) -> (i32, i32) {
    %c0_i32 = arith.constant 0 : i32
    %c0_i32_0 = arith.constant 0 : i32
    return %arg0, %c0_i32 : i32, i32
  }
  func.func @transform_3(%arg0: i32) -> (i32, i32) {
    %c0_i32 = arith.constant 0 : i32
    %c0_i32_0 = arith.constant 0 : i32
    %c0_i32_1 = arith.constant 0 : i32
    return %c0_i32, %c0_i32_0 : i32, i32
  }
  func.func @transform_4(%arg0: i32) -> (i32, i32) {
    %c0_i32 = arith.constant 0 : i32
    %c0_i32_0 = arith.constant 0 : i32
    %c0_i32_1 = arith.constant 0 : i32
    return %c0_i32, %c0_i32_0 : i32, i32
  }
  func.func @transform_5(%arg0: i32) -> (i32, i32) {
    %c0_i32 = arith.constant 0 : i32
    %c0_i32_0 = arith.constant 0 : i32
    %c0_i32_1 = arith.constant 0 : i32
    return %c0_i32, %c0_i32_0 : i32, i32
  }
  func.func @transform_6(%arg0: i32) -> (i32, i32) {
    %c0_i32 = arith.constant 0 : i32
    %c0_i32_0 = arith.constant 0 : i32
    %c0_i32_1 = arith.constant 0 : i32
    return %c0_i32, %c0_i32_0 : i32, i32
  }
  func.func @transform_7(%arg0: i32) -> (i32, i32) {
    %c0_i32 = arith.constant 0 : i32
    %c0_i32_0 = arith.constant 0 : i32
    %c0_i32_1 = arith.constant 0 : i32
    return %c0_i32, %c0_i32_0 : i32, i32
  }
  func.func @transform_8(%arg0: i32) -> (i32, i32) {
    %c0_i32 = arith.constant 0 : i32
    %c0_i32_0 = arith.constant 0 : i32
    %c0_i32_1 = arith.constant 0 : i32
    return %c0_i32, %c0_i32_0 : i32, i32
  }
  func.func @transform_9(%arg0: i32) -> (i32, i32) {
    %c0_i32 = arith.constant 0 : i32
    %c0_i32_0 = arith.constant 0 : i32
    %c0_i32_1 = arith.constant 0 : i32
    return %c0_i32, %c0_i32_0 : i32, i32
  }
  func.func @transform_10(%arg0: i32) -> (i32, i32) {
    %c0_i32 = arith.constant 0 : i32
    %c0_i32_0 = arith.constant 0 : i32
    %c0_i32_1 = arith.constant 0 : i32
    return %c0_i32, %c0_i32_0 : i32, i32
  }
  func.func @transform_11(%arg0: i32) -> (i32, i32) {
    %c0_i32 = arith.constant 0 : i32
    %c0_i32_0 = arith.constant 0 : i32
    %c0_i32_1 = arith.constant 0 : i32
    return %c0_i32, %c0_i32_0 : i32, i32
  }
  func.func @transform_12(%arg0: i32) -> (i32, i32) {
    %c0_i32 = arith.constant 0 : i32
    %c0_i32_0 = arith.constant 0 : i32
    %c0_i32_1 = arith.constant 0 : i32
    return %c0_i32, %c0_i32_0 : i32, i32
  }
  func.func @transform_13(%arg0: i32) -> (i32, i32) {
    %c0_i32 = arith.constant 0 : i32
    %c0_i32_0 = arith.constant 0 : i32
    %c0_i32_1 = arith.constant 0 : i32
    return %c0_i32, %c0_i32_0 : i32, i32
  }
  func.func @transform_14(%arg0: i32) -> (i32, i32) {
    %c0_i32 = arith.constant 0 : i32
    %c0_i32_0 = arith.constant 0 : i32
    %c0_i32_1 = arith.constant 0 : i32
    return %c0_i32, %c0_i32_0 : i32, i32
  }
  func.func @transform_15(%arg0: i32) -> (i32, i32) {
    %c0_i32 = arith.constant 0 : i32
    %c0_i32_0 = arith.constant 0 : i32
    %c0_i32_1 = arith.constant 0 : i32
    return %c0_i32, %c0_i32_0 : i32, i32
  }
  func.func @transform_16(%arg0: i32) -> (i32, i32) {
    %c0_i32 = arith.constant 0 : i32
    %c0_i32_0 = arith.constant 0 : i32
    return %arg0, %c0_i32 : i32, i32
  }
}

</mosaic_0001>

<llo_original>
// kernel: tpu_custom_call.1
$region0: #{tpu_custom_call.1}
  #allocation0 [shape = 'u32[]', space=smem, size = 0x4, offset = 0x4, fixed_abs, tag = 'smem constant byte address 0x4 - core index']
  #allocation1 [shape = 'u32[144,128]{1,0:T(1,128)}', space=vmem, size = 0x12000, scoped, tag = 'internal scratch']
  %s0 = inlined_call_operand.hbm [shape: f32[8,20], index: 0, kind: input, shape index: {}]
  %s1 = inlined_call_operand.hbm [shape: f32[8,16], index: 1, kind: input, shape index: {}]
  %s2 = inlined_call_operand.hbm [shape: f32[8,8], index: 2, kind: input, shape index: {}]
  %s3 = inlined_call_operand.hbm [shape: bf16[20,768], index: 3, kind: input, shape index: {}]
  %s4 = inlined_call_operand.hbm [shape: f32[1,768], index: 4, kind: input, shape index: {}]
  %s5 = inlined_call_operand.hbm [shape: bf16[768,768], index: 5, kind: input, shape index: {}]
  %s6 = inlined_call_operand.hbm [shape: f32[1,768], index: 6, kind: input, shape index: {}]
  %s7 = inlined_call_operand.vmem [shape: bf16[768,16], index: 7, kind: input, shape index: {}]
  %s8 = inlined_call_operand.hbm [shape: f32[1,16], index: 8, kind: input, shape index: {}]
  %s9 = inlined_call_operand.hbm [shape: bf16[16,768], index: 9, kind: input, shape index: {}]
  %s10 = inlined_call_operand.hbm [shape: bf16[8,768], index: 10, kind: input, shape index: {}]
  %s11 = inlined_call_operand.hbm [shape: f32[1,768], index: 11, kind: input, shape index: {}]
  %s12 = inlined_call_operand.hbm [shape: bf16[768,768], index: 12, kind: input, shape index: {}]
  %s13 = inlined_call_operand.hbm [shape: f32[1,768], index: 13, kind: input, shape index: {}]
  %s14 = inlined_call_operand.vmem [shape: bf16[768,4], index: 14, kind: input, shape index: {}]
  %s15 = inlined_call_operand.hbm [shape: f32[1,4], index: 15, kind: input, shape index: {}]
  %s16 = inlined_call_operand.hbm [shape: f32[8,128], index: 16, kind: output, shape index: {}]
  %s17 = sld [smem:[#allocation0]]
  $region130: #{tpu_custom_call.1} parent=0
    _
  %s19 = ssub.s32 1, %s17
  %s20 = scalar_select 0, %s19, %s17
  $region1: #{tpu_custom_call.1} parent=0
    #allocation2 [shape = 'u8[4096]{0}', space=vmem, size = 0x1000, scoped, tag = 'input window, operand 0, single buffered']
    #allocation3 [shape = 's32[1]{0}', space=sflag, size = 0x4, scoped, tag = 'scoped memory for tpu_custom_call.1']
    #allocation4 [shape = 's32[1]{0}', space=sflag, size = 0x4, scoped, tag = 'scoped memory for tpu_custom_call.1']
    #allocation5 [shape = 'u8[4096]{0}', space=vmem, size = 0x1000, scoped, tag = 'input window, operand 1, single buffered']
    #allocation6 [shape = 's32[1]{0}', space=sflag, size = 0x4, scoped, tag = 'scoped memory for tpu_custom_call.1']
    #allocation7 [shape = 'u8[4096]{0}', space=vmem, size = 0x1000, scoped, tag = 'input window, operand 2, single buffered']
    #allocation8 [shape = 'u8[36864]{0}', space=vmem, size = 0x9000, scoped, tag = 'input window, operand 3, single buffered']
    #allocation9 [shape = 's32[1]{0}', space=sflag, size = 0x4, scoped, tag = 'scoped memory for tpu_custom_call.1']
    #allocation10 [shape = 'u8[3072]{0}', space=vmem, size = 0xc00, scoped, tag = 'input window, operand 4, single buffered']
    #allocation11 [shape = 'u8[1179648]{0}', space=vmem, size = 0x120000, scoped, tag = 'input window, operand 5, single buffered']
    #allocation12 [shape = 's32[1]{0}', space=sflag, size = 0x4, scoped, tag = 'scoped memory for tpu_custom_call.1']
    #allocation13 [shape = 'u8[3072]{0}', space=vmem, size = 0xc00, scoped, tag = 'input window, operand 6, single buffered']
    #allocation14 [shape = 'u8[512]{0}', space=vmem, size = 0x400, scoped, tag = 'input window, operand 8, single buffered']
    #allocation15 [shape = 's32[1]{0}', space=sflag, size = 0x4, scoped, tag = 'scoped memory for tpu_custom_call.1']
    #allocation16 [shape = 'u8[24576]{0}', space=vmem, size = 0x6000, scoped, tag = 'input window, operand 9, single buffered']
    #allocation17 [shape = 'u8[12288]{0}', space=vmem, size = 0x3000, scoped, tag = 'input window, operand 10, single buffered']
    #allocation18 [shape = 's32[1]{0}', space=sflag, size = 0x4, scoped, tag = 'scoped memory for tpu_custom_call.1']
    #allocation19 [shape = 'u8[3072]{0}', space=vmem, size = 0xc00, scoped, tag = 'input window, operand 11, single buffered']
    #allocation20 [shape = 'u8[1179648]{0}', space=vmem, size = 0x120000, scoped, tag = 'input window, operand 12, single buffered']
    #allocation21 [shape = 's32[1]{0}', space=sflag, size = 0x4, scoped, tag = 'scoped memory for tpu_custom_call.1']
    #allocation22 [shape = 'u8[3072]{0}', space=vmem, size = 0xc00, scoped, tag = 'input window, operand 13, single buffered']
    #allocation23 [shape = 'u8[512]{0}', space=vmem, size = 0x400, scoped, tag = 'input window, operand 15, single buffered']
    #allocation24 [shape = 's32[1]{0}', space=sflag, size = 0x4, scoped, tag = 'scoped memory for tpu_custom_call.1']
    #allocation25 [shape = 'u8[4096]{0}', space=vmem, size = 0x1000, scoped, tag = 'output window, operand 0, single buffered']
    %21 = vsyncpa [#allocation3], 0
    %22 = vsyncpa [#allocation6], 0
    %23 = vsyncpa [#allocation9], 0
    %24 = vsyncpa [#allocation12], 0
    %25 = vsyncpa [#allocation15], 0
    %26 = vsyncpa [#allocation18], 0
    %27 = vsyncpa [#allocation21], 0
    %28 = vsyncpa [#allocation24], 0
    %29 = vsyncpa [#allocation4], 0
    // Predicated region
    $region2: #{tpu_custom_call.1} parent=1 // pred_check
      _
    $region3: #{tpu_custom_call.1} parent=1 // pred_check_branch
      %31 = sbr.rel (0) target = $region5
    $region4: #{tpu_custom_call.1} parent=1 // pred_region
      %s33 = ssub.s32 128, 128
      %34 = vsyncadd [#allocation3], %s33
      %s36 = sshll.u32 [#allocation2], 4
      %s37 = int_to_ptr.vmem [resolvable:$true] %s36
      %39 = dma.hbm_to_vmem [thread:$0]  %s0, 128, %s37, [#allocation3]
    $region5: #{tpu_custom_call.1} parent=1 // pred_fallthru
      _
    // Predicated region
    $region6: #{tpu_custom_call.1} parent=1 // pred_check
      _
    $region7: #{tpu_custom_call.1} parent=1 // pred_check_branch
      %41 = sbr.rel (0) target = $region9
    $region8: #{tpu_custom_call.1} parent=1 // pred_region
      %s43 = ssub.s32 128, 128
      %44 = vsyncadd [#allocation6], %s43
      %s46 = sshll.u32 [#allocation5], 4
      %s47 = int_to_ptr.vmem [resolvable:$true] %s46
      %49 = dma.hbm_to_vmem [thread:$0]  %s1, 128, %s47, [#allocation6]
    $region9: #{tpu_custom_call.1} parent=1 // pred_fallthru
      _
    // Predicated region
    $region10: #{tpu_custom_call.1} parent=1 // pred_check
      _
    $region11: #{tpu_custom_call.1} parent=1 // pred_check_branch
      %51 = sbr.rel (0) target = $region13
    $region12: #{tpu_custom_call.1} parent=1 // pred_region
      %s53 = ssub.s32 128, 128
      %54 = vsyncadd [#allocation6], %s53
      %s56 = sshll.u32 [#allocation7], 4
      %s57 = int_to_ptr.vmem [resolvable:$true] %s56
      %59 = dma.hbm_to_vmem [thread:$0]  %s2, 128, %s57, [#allocation6]
    $region13: #{tpu_custom_call.1} parent=1 // pred_fallthru
      _
    // Predicated region
    $region14: #{tpu_custom_call.1} parent=1 // pred_check
      _
    $region15: #{tpu_custom_call.1} parent=1 // pred_check_branch
      %61 = sbr.rel (0) target = $region17
    $region16: #{tpu_custom_call.1} parent=1 // pred_region
      %s63 = ssub.s32 1152, 1152
      %64 = vsyncadd [#allocation9], %s63
      %s65 = sshll.u32 [#allocation8], 4
      %s66 = int_to_ptr.vmem [resolvable:$true] %s65
      %71 = dma.hbm_to_vmem [thread:$0]  %s3, 1152, %s66, [#allocation9], 384, 384, 24
    $region17: #{tpu_custom_call.1} parent=1 // pred_fallthru
      _
    // Predicated region
    $region18: #{tpu_custom_call.1} parent=1 // pred_check
      _
    $region19: #{tpu_custom_call.1} parent=1 // pred_check_branch
      %73 = sbr.rel (0) target = $region21
    $region20: #{tpu_custom_call.1} parent=1 // pred_region
      %s75 = ssub.s32 96, 96
      %76 = vsyncadd [#allocation9], %s75
      %s78 = sshll.u32 [#allocation10], 4
      %s79 = int_to_ptr.vmem [resolvable:$true] %s78
      %81 = dma.hbm_to_vmem [thread:$0]  %s4, 96, %s79, [#allocation9]
    $region21: #{tpu_custom_call.1} parent=1 // pred_fallthru
      _
    // Predicated region
    $region22: #{tpu_custom_call.1} parent=1 // pred_check
      _
    $region23: #{tpu_custom_call.1} parent=1 // pred_check_branch
      %83 = sbr.rel (0) target = $region25
    $region24: #{tpu_custom_call.1} parent=1 // pred_region
      %s85 = ssub.s32 36864, 36864
      %86 = vsyncadd [#allocation12], %s85
      %s87 = sshll.u32 [#allocation11], 4
      %s88 = int_to_ptr.vmem [resolvable:$true] %s87
      %93 = dma.hbm_to_vmem [thread:$0]  %s5, 36864, %s88, [#allocation12], 384, 384, 24
    $region25: #{tpu_custom_call.1} parent=1 // pred_fallthru
      _
    // Predicated region
    $region26: #{tpu_custom_call.1} parent=1 // pred_check
      _
    $region27: #{tpu_custom_call.1} parent=1 // pred_check_branch
      %95 = sbr.rel (0) target = $region29
    $region28: #{tpu_custom_call.1} parent=1 // pred_region
      %s97 = ssub.s32 96, 96
      %98 = vsyncadd [#allocation12], %s97
      %s100 = sshll.u32 [#allocation13], 4
      %s101 = int_to_ptr.vmem [resolvable:$true] %s100
      %103 = dma.hbm_to_vmem [thread:$0]  %s6, 96, %s101, [#allocation12]
    $region29: #{tpu_custom_call.1} parent=1 // pred_fallthru
      _
    // Predicated region
    $region30: #{tpu_custom_call.1} parent=1 // pred_check
      _
    $region31: #{tpu_custom_call.1} parent=1 // pred_check_branch
      %105 = sbr.rel (0) target = $region33
    $region32: #{tpu_custom_call.1} parent=1 // pred_region
      _
    $region33: #{tpu_custom_call.1} parent=1 // pred_fallthru
      _
    // Predicated region
    $region34: #{tpu_custom_call.1} parent=1 // pred_check
      _
    $region35: #{tpu_custom_call.1} parent=1 // pred_check_branch
      %107 = sbr.rel (0) target = $region37
    $region36: #{tpu_custom_call.1} parent=1 // pred_region
      %s109 = ssub.s32 16, 16
      %110 = vsyncadd [#allocation15], %s109
      %s112 = sshll.u32 [#allocation14], 4
      %s113 = int_to_ptr.vmem [resolvable:$true] %s112
      %115 = dma.hbm_to_vmem [thread:$0]  %s8, 16, %s113, [#allocation15]
    $region37: #{tpu_custom_call.1} parent=1 // pred_fallthru
      _
    // Predicated region
    $region38: #{tpu_custom_call.1} parent=1 // pred_check
      _
    $region39: #{tpu_custom_call.1} parent=1 // pred_check_branch
      %117 = sbr.rel (0) target = $region41
    $region40: #{tpu_custom_call.1} parent=1 // pred_region
      %s119 = ssub.s32 768, 768
      %120 = vsyncadd [#allocation15], %s119
      %s121 = sshll.u32 [#allocation16], 4
      %s122 = int_to_ptr.vmem [resolvable:$true] %s121
      %127 = dma.hbm_to_vmem [thread:$0]  %s9, 768, %s122, [#allocation15], 384, 384, 24
    $region41: #{tpu_custom_call.1} parent=1 // pred_fallthru
      _
    // Predicated region
    $region42: #{tpu_custom_call.1} parent=1 // pred_check
      _
    $region43: #{tpu_custom_call.1} parent=1 // pred_check_branch
      %129 = sbr.rel (0) target = $region45
    $region44: #{tpu_custom_call.1} parent=1 // pred_region
      %s131 = ssub.s32 384, 384
      %132 = vsyncadd [#allocation18], %s131
      %s134 = sshll.u32 [#allocation17], 4
      %s135 = int_to_ptr.vmem [resolvable:$true] %s134
      %137 = dma.hbm_to_vmem [thread:$0]  %s10, 384, %s135, [#allocation18]
    $region45: #{tpu_custom_call.1} parent=1 // pred_fallthru
      _
    // Predicated region
    $region46: #{tpu_custom_call.1} parent=1 // pred_check
      _
    $region47: #{tpu_custom_call.1} parent=1 // pred_check_branch
      %139 = sbr.rel (0) target = $region49
    $region48: #{tpu_custom_call.1} parent=1 // pred_region
      %s141 = ssub.s32 96, 96
      %142 = vsyncadd [#allocation18], %s141
      %s144 = sshll.u32 [#allocation19], 4
      %s145 = int_to_ptr.vmem [resolvable:$true] %s144
      %147 = dma.hbm_to_vmem [thread:$0]  %s11, 96, %s145, [#allocation18]
    $region49: #{tpu_custom_call.1} parent=1 // pred_fallthru
      _
    // Predicated region
    $region50: #{tpu_custom_call.1} parent=1 // pred_check
      _
    $region51: #{tpu_custom_call.1} parent=1 // pred_check_branch
      %149 = sbr.rel (0) target = $region53
    $region52: #{tpu_custom_call.1} parent=1 // pred_region
      %s151 = ssub.s32 36864, 36864
      %152 = vsyncadd [#allocation21], %s151
      %s153 = sshll.u32 [#allocation20], 4
      %s154 = int_to_ptr.vmem [resolvable:$true] %s153
      %159 = dma.hbm_to_vmem [thread:$0]  %s12, 36864, %s154, [#allocation21], 384, 384, 24
    $region53: #{tpu_custom_call.1} parent=1 // pred_fallthru
      _
    // Predicated region
    $region54: #{tpu_custom_call.1} parent=1 // pred_check
      _
    $region55: #{tpu_custom_call.1} parent=1 // pred_check_branch
      %161 = sbr.rel (0) target = $region57
    $region56: #{tpu_custom_call.1} parent=1 // pred_region
      %s163 = ssub.s32 96, 96
      %164 = vsyncadd [#allocation21], %s163
      %s166 = sshll.u32 [#allocation22], 4
      %s167 = int_to_ptr.vmem [resolvable:$true] %s166
      %169 = dma.hbm_to_vmem [thread:$0]  %s13, 96, %s167, [#allocation21]
    $region57: #{tpu_custom_call.1} parent=1 // pred_fallthru
      _
    // Predicated region
    $region58: #{tpu_custom_call.1} parent=1 // pred_check
      _
    $region59: #{tpu_custom_call.1} parent=1 // pred_check_branch
      %171 = sbr.rel (0) target = $region61
    $region60: #{tpu_custom_call.1} parent=1 // pred_region
      _
    $region61: #{tpu_custom_call.1} parent=1 // pred_fallthru
      _
    // Predicated region
    $region62: #{tpu_custom_call.1} parent=1 // pred_check
      _
    $region63: #{tpu_custom_call.1} parent=1 // pred_check_branch
      %173 = sbr.rel (0) target = $region65
    $region64: #{tpu_custom_call.1} parent=1 // pred_region
      %s175 = ssub.s32 16, 16
      %176 = vsyncadd [#allocation24], %s175
      %s178 = sshll.u32 [#allocation23], 4
      %s179 = int_to_ptr.vmem [resolvable:$true] %s178
      %181 = dma.hbm_to_vmem [thread:$0]  %s15, 16, %s179, [#allocation24]
    $region65: #{tpu_custom_call.1} parent=1 // pred_fallthru
      _
    // Predicated region
    $region66: #{tpu_custom_call.1} parent=1 // pred_check
      _
    $region67: #{tpu_custom_call.1} parent=1 // pred_check_branch
      %183 = sbr.rel (0) target = $region69
    $region68: #{tpu_custom_call.1} parent=1 // pred_region
      %184 = dma.done [#allocation3], 128
    $region69: #{tpu_custom_call.1} parent=1 // pred_fallthru
      _
    // Predicated region
    $region70: #{tpu_custom_call.1} parent=1 // pred_check
      _
    $region71: #{tpu_custom_call.1} parent=1 // pred_check_branch
      %186 = sbr.rel (0) target = $region73
    $region72: #{tpu_custom_call.1} parent=1 // pred_region
      %187 = dma.done [#allocation6], 128
    $region73: #{tpu_custom_call.1} parent=1 // pred_fallthru
      _
    // Predicated region
    $region74: #{tpu_custom_call.1} parent=1 // pred_check
      _
    $region75: #{tpu_custom_call.1} parent=1 // pred_check_branch
      %189 = sbr.rel (0) target = $region77
    $region76: #{tpu_custom_call.1} parent=1 // pred_region
      %190 = dma.done [#allocation6], 128
    $region77: #{tpu_custom_call.1} parent=1 // pred_fallthru
      _
    // Predicated region
    $region78: #{tpu_custom_call.1} parent=1 // pred_check
      _
    $region79: #{tpu_custom_call.1} parent=1 // pred_check_branch
      %192 = sbr.rel (0) target = $region81
    $region80: #{tpu_custom_call.1} parent=1 // pred_region
      %193 = dma.done [#allocation9], 1152
    $region81: #{tpu_custom_call.1} parent=1 // pred_fallthru
      _
    // Predicated region
    $region82: #{tpu_custom_call.1} parent=1 // pred_check
      _
    $region83: #{tpu_custom_call.1} parent=1 // pred_check_branch
      %195 = sbr.rel (0) target = $region85
    $region84: #{tpu_custom_call.1} parent=1 // pred_region
      %196 = dma.done [#allocation9], 96
    $region85: #{tpu_custom_call.1} parent=1 // pred_fallthru
      _
    // Predicated region
    $region86: #{tpu_custom_call.1} parent=1 // pred_check
      _
    $region87: #{tpu_custom_call.1} parent=1 // pred_check_branch
      %198 = sbr.rel (0) target = $region89
    $region88: #{tpu_custom_call.1} parent=1 // pred_region
      %199 = dma.done [#allocation12], 36864
    $region89: #{tpu_custom_call.1} parent=1 // pred_fallthru
      _
    // Predicated region
    $region90: #{tpu_custom_call.1} parent=1 // pred_check
      _
    $region91: #{tpu_custom_call.1} parent=1 // pred_check_branch
      %201 = sbr.rel (0) target = $region93
    $region92: #{tpu_custom_call.1} parent=1 // pred_region
      %202 = dma.done [#allocation12], 96
    $region93: #{tpu_custom_call.1} parent=1 // pred_fallthru
      _
    // Predicated region
    $region94: #{tpu_custom_call.1} parent=1 // pred_check
      _
    $region95: #{tpu_custom_call.1} parent=1 // pred_check_branch
      %204 = sbr.rel (0) target = $region97
    $region96: #{tpu_custom_call.1} parent=1 // pred_region
      %205 = dma.done [#allocation15], 16
    $region97: #{tpu_custom_call.1} parent=1 // pred_fallthru
      _
    // Predicated region
    $region98: #{tpu_custom_call.1} parent=1 // pred_check
      _
    $region99: #{tpu_custom_call.1} parent=1 // pred_check_branch
      %207 = sbr.rel (0) target = $region101
    $region100: #{tpu_custom_call.1} parent=1 // pred_region
      %208 = dma.done [#allocation15], 768
    $region101: #{tpu_custom_call.1} parent=1 // pred_fallthru
      _
    // Predicated region
    $region102: #{tpu_custom_call.1} parent=1 // pred_check
      _
    $region103: #{tpu_custom_call.1} parent=1 // pred_check_branch
      %210 = sbr.rel (0) target = $region105
    $region104: #{tpu_custom_call.1} parent=1 // pred_region
      %211 = dma.done [#allocation18], 384
    $region105: #{tpu_custom_call.1} parent=1 // pred_fallthru
      _
    // Predicated region
    $region106: #{tpu_custom_call.1} parent=1 // pred_check
      _
    $region107: #{tpu_custom_call.1} parent=1 // pred_check_branch
      %213 = sbr.rel (0) target = $region109
    $region108: #{tpu_custom_call.1} parent=1 // pred_region
      %214 = dma.done [#allocation18], 96
    $region109: #{tpu_custom_call.1} parent=1 // pred_fallthru
      _
    // Predicated region
    $region110: #{tpu_custom_call.1} parent=1 // pred_check
      _
    $region111: #{tpu_custom_call.1} parent=1 // pred_check_branch
      %216 = sbr.rel (0) target = $region113
    $region112: #{tpu_custom_call.1} parent=1 // pred_region
      %217 = dma.done [#allocation21], 36864
    $region113: #{tpu_custom_call.1} parent=1 // pred_fallthru
      _
    // Predicated region
    $region114: #{tpu_custom_call.1} parent=1 // pred_check
      _
    $region115: #{tpu_custom_call.1} parent=1 // pred_check_branch
      %219 = sbr.rel (0) target = $region117
    $region116: #{tpu_custom_call.1} parent=1 // pred_region
      %220 = dma.done [#allocation21], 96
    $region117: #{tpu_custom_call.1} parent=1 // pred_fallthru
      _
    // Predicated region
    $region118: #{tpu_custom_call.1} parent=1 // pred_check
      _
    $region119: #{tpu_custom_call.1} parent=1 // pred_check_branch
      %222 = sbr.rel (0) target = $region121
    $region120: #{tpu_custom_call.1} parent=1 // pred_region
      %223 = dma.done [#allocation24], 16
    $region121: #{tpu_custom_call.1} parent=1 // pred_fallthru
      _
    %v225 = vld [vmem:[#allocation2] sm:$0xff]
    %v226 = vpack.c.bf16 %v225, %v225
    %v227 = vld [vmem:[#allocation8] sm:$0xff]
    %v228 = vld [vmem:[#allocation8 + $0x8] sm:$0xff]
    %v229 = vld [vmem:[#allocation8 + $0x10] sm:$0xff]
    %v230 = vld [vmem:[#allocation8 + $0x18] sm:$0xff]
    %v231 = vld [vmem:[#allocation8 + $0x20] sm:$0xff]
    %v232 = vld [vmem:[#allocation8 + $0x28] sm:$0xff]
    %v233 = vld [vmem:[#allocation8 + $0x30] sm:$0x33]
    %v234 = vld [vmem:[#allocation8 + $0x38] sm:$0x33]
    %v235 = vld [vmem:[#allocation8 + $0x40] sm:$0x33]
    %v236 = vld [vmem:[#allocation10] sm:$0x3f]
    %v238 = vlaneseq
    %v239 = vshrl.u32 %v238, 7
    %v240 = vsub.s32 0, %v239
    %v241 = vrot.slane %v236, %v240
    %v242 = vlaneseq
    %v243 = vshrl.u32 %v242, 7
    %v244 = vsub.s32 1, %v243
    %v245 = vrot.slane %v236, %v244
    %v246 = vlaneseq
    %v247 = vshrl.u32 %v246, 7
    %v248 = vsub.s32 2, %v247
    %v249 = vrot.slane %v236, %v248
    %v250 = vlaneseq
    %v251 = vshrl.u32 %v250, 7
    %v252 = vsub.s32 3, %v251
    %v253 = vrot.slane %v236, %v252
    %v254 = vlaneseq
    %v255 = vshrl.u32 %v254, 7
    %v256 = vsub.s32 4, %v255
    %v257 = vrot.slane %v236, %v256
    %v258 = vlaneseq
    %v259 = vshrl.u32 %v258, 7
    %v260 = vsub.s32 5, %v259
    %v261 = vrot.slane %v236, %v260
    %v277 = vunpack.c.l.b16 %v227
    %v278 = vunpack.c.h.b16 %v227
    %v279 = vunpack.c.l.b16 %v228
    %v280 = vunpack.c.h.b16 %v228
    %v281 = vunpack.c.l.b16 %v229
    %v282 = vunpack.c.h.b16 %v229
    %v283 = vunpack.c.l.b16 %v230
    %v284 = vunpack.c.h.b16 %v230
    %v285 = vunpack.c.l.b16 %v231
    %v286 = vunpack.c.h.b16 %v231
    %v287 = vunpack.c.l.b16 %v232
    %v288 = vunpack.c.h.b16 %v232
    %v289 = vunpack.c.l.b16 %v233
    %v290 = vunpack.c.h.b16 %v233
    %v291 = vunpack.c.l.b16 %v234
    %v292 = vunpack.c.h.b16 %v234
    %v293 = vunpack.c.l.b16 %v235
    %v294 = vunpack.c.h.b16 %v235
    %v295 = vpack.c.b16 %v283, %v277
    %v296 = vpack.c.b16 %v284, %v278
    %v297 = vpack.c.b16 %v285, %v279
    %v298 = vpack.c.b16 %v286, %v280
    %v299 = vpack.c.b16 %v287, %v281
    %v300 = vpack.c.b16 %v288, %v282
    %v301 = vpack.c.b16 %v289, %v289
    %v302 = vpack.c.b16 %v290, %v290
    %v303 = vpack.c.b16 %v291, %v291
    %v304 = vpack.c.b16 %v292, %v292
    %v305 = vpack.c.b16 %v293, %v293
    %v306 = vpack.c.b16 %v294, %v294
    %vm313 = vcmask 162816
    %v315 = vsel %vm313, %v226, 0
    %vm317 = vcmask 1041408
    %v319 = vsel %vm317, %v301, 0
    %v322 = vsel %vm317, %v302, 0
    %v325 = vsel %vm317, %v303, 0
    %v328 = vsel %vm317, %v304, 0
    %v331 = vsel %vm317, %v305, 0
    %v334 = vsel %vm317, %v306, 0
    %336 = vmatprep.subr.bf16.mxu0 0
    %337 = vmatpush1.bf16.msra.mxu0 0
    %338 = vmatprep.subr.bf16.mxu0 0
    %339 = vmatpush1.bf16.msra.mxu0 0
    %340 = vmatprep.subr.bf16.mxu0 0
    %341 = vmatpush1.bf16.msra.mxu0 0
    %342 = vmatprep.subr.bf16.mxu0 0
    %343 = vmatpush1.bf16.msra.mxu0 0
    %344 = vmatprep.subr.bf16.mxu0 0
    %345 = vmatpush1.bf16.msra.mxu0 0
    %346 = vmatprep.subr.bf16.mxu0 0
    %347 = vmatpush1.bf16.msra.mxu0 0
    %348 = vmatprep.subr.bf16.mxu0 %v322
    %349 = vmatpush1.bf16.msra.mxu0 %v319
    %350 = vmatprep.subr.bf16.mxu0 %v296
    %351 = vmatpush1.bf16.msra.mxu0 %v295
    %352 = vmatprep.subr.bf16.mxu0 0
    %353 = vmatpush2.bf16.msra.mxu0 0
    %354 = vmatprep.subr.bf16.mxu0 0
    %355 = vmatpush2.bf16.msra.mxu0 0
    %356 = vmatprep.subr.bf16.mxu0 0
    %357 = vmatpush2.bf16.msra.mxu0 0
    %358 = vmatprep.subr.bf16.mxu0 0
    %359 = vmatpush2.bf16.msra.mxu0 0
    %360 = vmatprep.subr.bf16.mxu0 0
    %361 = vmatpush2.bf16.msra.mxu0 0
    %362 = vmatprep.subr.bf16.mxu0 0
    %363 = vmatpush2.bf16.msra.mxu0 0
    %364 = vmatprep.subr.bf16.mxu0 0
    %365 = vmatpush2.bf16.msra.mxu0 0
    %366 = vmatprep.subr.bf16.mxu0 0
    %367 = vmatpush2.bf16.msra.mxu0 0
    %368 = vmatprep.mubr.bf16.mxu0 0
    %369 = vmatmul.mubr.bf16.gmra.mxu0 %v315
    %v370 = vpop.f32.mrf.mxu0
    %v371 = vadd.f32 %v241, %v370
    %v372 = vpop.f32.mrf.mxu0
    %v373 = vadd.f32 %v245, %v372
    %v374 = vpop.f32.mrf.mxu0
    %v375 = vpop.f32.mrf.mxu0
    %376 = vdwg.mxu0
    %377 = vmatprep.subr.bf16.mxu0 0
    %378 = vmatpush1.bf16.msra.mxu0 0
    %379 = vmatprep.subr.bf16.mxu0 0
    %380 = vmatpush1.bf16.msra.mxu0 0
    %381 = vmatprep.subr.bf16.mxu0 0
    %382 = vmatpush1.bf16.msra.mxu0 0
    %383 = vmatprep.subr.bf16.mxu0 0
    %384 = vmatpush1.bf16.msra.mxu0 0
    %385 = vmatprep.subr.bf16.mxu0 0
    %386 = vmatpush1.bf16.msra.mxu0 0
    %387 = vmatprep.subr.bf16.mxu0 0
    %388 = vmatpush1.bf16.msra.mxu0 0
    %389 = vmatprep.subr.bf16.mxu0 %v328
    %390 = vmatpush1.bf16.msra.mxu0 %v325
    %391 = vmatprep.subr.bf16.mxu0 %v298
    %392 = vmatpush1.bf16.msra.mxu0 %v297
    %393 = vmatprep.subr.bf16.mxu0 0
    %394 = vmatpush2.bf16.msra.mxu0 0
    %395 = vmatprep.subr.bf16.mxu0 0
    %396 = vmatpush2.bf16.msra.mxu0 0
    %397 = vmatprep.subr.bf16.mxu0 0
    %398 = vmatpush2.bf16.msra.mxu0 0
    %399 = vmatprep.subr.bf16.mxu0 0
    %400 = vmatpush2.bf16.msra.mxu0 0
    %401 = vmatprep.subr.bf16.mxu0 0
    %402 = vmatpush2.bf16.msra.mxu0 0
    %403 = vmatprep.subr.bf16.mxu0 0
    %404 = vmatpush2.bf16.msra.mxu0 0
    %405 = vmatprep.subr.bf16.mxu0 0
    %406 = vmatpush2.bf16.msra.mxu0 0
    %407 = vmatprep.subr.bf16.mxu0 0
    %408 = vmatpush2.bf16.msra.mxu0 0
    %409 = vmatprep.mubr.bf16.mxu0 0
    %410 = vmatmul.mubr.bf16.gmra.mxu0 %v315
    %v411 = vpop.f32.mrf.mxu0
    %v412 = vadd.f32 %v249, %v411
    %v413 = vpop.f32.mrf.mxu0
    %v414 = vadd.f32 %v253, %v413
    %v415 = vpop.f32.mrf.mxu0
    %v416 = vpop.f32.mrf.mxu0
    %417 = vdwg.mxu0
    %418 = vmatprep.subr.bf16.mxu0 0
    %419 = vmatpush1.bf16.msra.mxu0 0
    %420 = vmatprep.subr.bf16.mxu0 0
    %421 = vmatpush1.bf16.msra.mxu0 0
    %422 = vmatprep.subr.bf16.mxu0 0
    %423 = vmatpush1.bf16.msra.mxu0 0
    %424 = vmatprep.subr.bf16.mxu0 0
    %425 = vmatpush1.bf16.msra.mxu0 0
    %426 = vmatprep.subr.bf16.mxu0 0
    %427 = vmatpush1.bf16.msra.mxu0 0
    %428 = vmatprep.subr.bf16.mxu0 0
    %429 = vmatpush1.bf16.msra.mxu0 0
    %430 = vmatprep.subr.bf16.mxu0 %v334
    %431 = vmatpush1.bf16.msra.mxu0 %v331
    %432 = vmatprep.subr.bf16.mxu0 %v300
    %433 = vmatpush1.bf16.msra.mxu0 %v299
    %434 = vmatprep.subr.bf16.mxu0 0
    %435 = vmatpush2.bf16.msra.mxu0 0
    %436 = vmatprep.subr.bf16.mxu0 0
    %437 = vmatpush2.bf16.msra.mxu0 0
    %438 = vmatprep.subr.bf16.mxu0 0
    %439 = vmatpush2.bf16.msra.mxu0 0
    %440 = vmatprep.subr.bf16.mxu0 0
    %441 = vmatpush2.bf16.msra.mxu0 0
    %442 = vmatprep.subr.bf16.mxu0 0
    %443 = vmatpush2.bf16.msra.mxu0 0
    %444 = vmatprep.subr.bf16.mxu0 0
    %445 = vmatpush2.bf16.msra.mxu0 0
    %446 = vmatprep.subr.bf16.mxu0 0
    %447 = vmatpush2.bf16.msra.mxu0 0
    %448 = vmatprep.subr.bf16.mxu0 0
    %449 = vmatpush2.bf16.msra.mxu0 0
    %450 = vmatprep.mubr.bf16.mxu0 0
    %451 = vmatmul.mubr.bf16.gmra.mxu0 %v315
    %v452 = vpop.f32.mrf.mxu0
    %v453 = vadd.f32 %v257, %v452
    %v454 = vpop.f32.mrf.mxu0
    %v455 = vadd.f32 %v261, %v454
    %v456 = vpop.f32.mrf.mxu0
    %v457 = vpop.f32.mrf.mxu0
    %458 = vdwg.mxu0
    %v459 = vmax.f32 %v371, 0.0
    %v460 = vmax.f32 %v373, 0.0
    %v461 = vmax.f32 %v412, 0.0
    %v462 = vmax.f32 %v414, 0.0
    %v463 = vmax.f32 %v453, 0.0
    %v464 = vmax.f32 %v455, 0.0
    %v465 = vpack.c.bf16 %v459, %v459
    %v466 = vpack.c.bf16 %v460, %v460
    %v467 = vpack.c.bf16 %v461, %v461
    %v468 = vpack.c.bf16 %v462, %v462
    %v469 = vpack.c.bf16 %v463, %v463
    %v470 = vpack.c.bf16 %v464, %v464
    %v471 = vld [vmem:[#allocation11] sm:$0xff]
    %v472 = vld [vmem:[#allocation11 + $0x8] sm:$0xff]
    %v473 = vld [vmem:[#allocation11 + $0x10] sm:$0xff]
    %v474 = vld [vmem:[#allocation11 + $0x18] sm:$0xff]
    %v475 = vld [vmem:[#allocation11 + $0x20] sm:$0xff]
    %v476 = vld [vmem:[#allocation11 + $0x28] sm:$0xff]
    %v477 = vld [vmem:[#allocation11 + $0x30] sm:$0xff]
    %v478 = vld [vmem:[#allocation11 + $0x38] sm:$0xff]
    %v479 = vld [vmem:[#allocation11 + $0x40] sm:$0xff]
    %v480 = vld [vmem:[#allocation11 + $0x48] sm:$0xff]
    %v481 = vld [vmem:[#allocation11 + $0x50] sm:$0xff]
    %v482 = vld [vmem:[#allocation11 + $0x58] sm:$0xff]
    %v483 = vld [vmem:[#allocation11 + $0x60] sm:$0xff]
    %v484 = vld [vmem:[#allocation11 + $0x68] sm:$0xff]
    %v485 = vld [vmem:[#allocation11 + $0x70] sm:$0xff]
    %v486 = vld [vmem:[#allocation11 + $0x78] sm:$0xff]
    %v487 = vld [vmem:[#allocation11 + $0x80] sm:$0xff]
    %v488 = vld [vmem:[#allocation11 + $0x88] sm:$0xff]
    %v489 = vld [vmem:[#allocation11 + $0x90] sm:$0xff]
    %v490 = vld [vmem:[#allocation11 + $0x98] sm:$0xff]
    %v491 = vld [vmem:[#allocation11 + $0xa0] sm:$0xff]
    %v492 = vld [vmem:[#allocation11 + $0xa8] sm:$0xff]
    %v493 = vld [vmem:[#allocation11 + $0xb0] sm:$0xff]
    %v494 = vld [vmem:[#allocation11 + $0xb8] sm:$0xff]
    %v495 = vld [vmem:[#allocation11 + $0xc0] sm:$0xff]
    %v496 = vld [vmem:[#allocation11 + $0xc8] sm:$0xff]
    %v497 = vld [vmem:[#allocation11 + $0xd0] sm:$0xff]
    %v498 = vld [vmem:[#allocation11 + $0xd8] sm:$0xff]
    %v499 = vld [vmem:[#allocation11 + $0xe0] sm:$0xff]
    %v500 = vld [vmem:[#allocation11 + $0xe8] sm:$0xff]
    %v501 = vld [vmem:[#allocation11 + $0xf0] sm:$0xff]
    %v502 = vld [vmem:[#allocation11 + $0xf8] sm:$0xff]
    %v503 = vld [vmem:[#allocation11 + $0x100] sm:$0xff]
    %v504 = vld [vmem:[#allocation11 + $0x108] sm:$0xff]
    %v505 = vld [vmem:[#allocation11 + $0x110] sm:$0xff]
    %v506 = vld [vmem:[#allocation11 + $0x118] sm:$0xff]
    %v507 = vld [vmem:[#allocation11 + $0x120] sm:$0xff]
    %v508 = vld [vmem:[#allocation11 + $0x128] sm:$0xff]
    %v509 = vld [vmem:[#allocation11 + $0x130] sm:$0xff]
    %v510 = vld [vmem:[#allocation11 + $0x138] sm:$0xff]
    %v511 = vld [vmem:[#allocation11 + $0x140] sm:$0xff]
    %v512 = vld [vmem:[#allocation11 + $0x148] sm:$0xff]
    %v513 = vld [vmem:[#allocation11 + $0x150] sm:$0xff]
    %v514 = vld [vmem:[#allocation11 + $0x158] sm:$0xff]
    %v515 = vld [vmem:[#allocation11 + $0x160] sm:$0xff]
    %v516 = vld [vmem:[#allocation11 + $0x168] sm:$0xff]
    %v517 = vld [vmem:[#allocation11 + $0x170] sm:$0xff]
    %v518 = vld [vmem:[#allocation11 + $0x178] sm:$0xff]
    %v519 = vld [vmem:[#allocation11 + $0x180] sm:$0xff]
    %v520 = vld [vmem:[#allocation11 + $0x188] sm:$0xff]
    %v521 = vld [vmem:[#allocation11 + $0x190] sm:$0xff]
    %v522 = vld [vmem:[#allocation11 + $0x198] sm:$0xff]
    %v523 = vld [vmem:[#allocation11 + $0x1a0] sm:$0xff]
    %v524 = vld [vmem:[#allocation11 + $0x1a8] sm:$0xff]
    %v525 = vld [vmem:[#allocation11 + $0x1b0] sm:$0xff]
    %v526 = vld [vmem:[#allocation11 + $0x1b8] sm:$0xff]
    %v527 = vld [vmem:[#allocation11 + $0x1c0] sm:$0xff]
    %v528 = vld [vmem:[#allocation11 + $0x1c8] sm:$0xff]
    %v529 = vld [vmem:[#allocation11 + $0x1d0] sm:$0xff]
    %v530 = vld [vmem:[#allocation11 + $0x1d8] sm:$0xff]
    %v531 = vld [vmem:[#allocation11 + $0x1e0] sm:$0xff]
    %v532 = vld [vmem:[#allocation11 + $0x1e8] sm:$0xff]
    %v533 = vld [vmem:[#allocation11 + $0x1f0] sm:$0xff]
    %v534 = vld [vmem:[#allocation11 + $0x1f8] sm:$0xff]
    %v535 = vld [vmem:[#allocation11 + $0x200] sm:$0xff]
    %v536 = vld [vmem:[#allocation11 + $0x208] sm:$0xff]
    %v537 = vld [vmem:[#allocation11 + $0x210] sm:$0xff]
    %v538 = vld [vmem:[#allocation11 + $0x218] sm:$0xff]
    %v539 = vld [vmem:[#allocation11 + $0x220] sm:$0xff]
    %v540 = vld [vmem:[#allocation11 + $0x228] sm:$0xff]
    %v541 = vld [vmem:[#allocation11 + $0x230] sm:$0xff]
    %v542 = vld [vmem:[#allocation11 + $0x238] sm:$0xff]
    %v543 = vld [vmem:[#allocation11 + $0x240] sm:$0xff]
    %v544 = vld [vmem:[#allocation11 + $0x248] sm:$0xff]
    %v545 = vld [vmem:[#allocation11 + $0x250] sm:$0xff]
    %v546 = vld [vmem:[#allocation11 + $0x258] sm:$0xff]
    %v547 = vld [vmem:[#allocation11 + $0x260] sm:$0xff]
    %v548 = vld [vmem:[#allocation11 + $0x268] sm:$0xff]
    %v549 = vld [vmem:[#allocation11 + $0x270] sm:$0xff]
    %v550 = vld [vmem:[#allocation11 + $0x278] sm:$0xff]
    %v551 = vld [vmem:[#allocation11 + $0x280] sm:$0xff]
    %v552 = vld [vmem:[#allocation11 + $0x288] sm:$0xff]
    %v553 = vld [vmem:[#allocation11 + $0x290] sm:$0xff]
    %v554 = vld [vmem:[#allocation11 + $0x298] sm:$0xff]
    %v555 = vld [vmem:[#allocation11 + $0x2a0] sm:$0xff]
    %v556 = vld [vmem:[#allocation11 + $0x2a8] sm:$0xff]
    %v557 = vld [vmem:[#allocation11 + $0x2b0] sm:$0xff]
    %v558 = vld [vmem:[#allocation11 + $0x2b8] sm:$0xff]
    %v559 = vld [vmem:[#allocation11 + $0x2c0] sm:$0xff]
    %v560 = vld [vmem:[#allocation11 + $0x2c8] sm:$0xff]
    %v561 = vld [vmem:[#allocation11 + $0x2d0] sm:$0xff]
    %v562 = vld [vmem:[#allocation11 + $0x2d8] sm:$0xff]
    %v563 = vld [vmem:[#allocation11 + $0x2e0] sm:$0xff]
    %v564 = vld [vmem:[#allocation11 + $0x2e8] sm:$0xff]
    %v565 = vld [vmem:[#allocation11 + $0x2f0] sm:$0xff]
    %v566 = vld [vmem:[#allocation11 + $0x2f8] sm:$0xff]
    %v567 = vld [vmem:[#allocation11 + $0x300] sm:$0xff]
    %v568 = vld [vmem:[#allocation11 + $0x308] sm:$0xff]
    %v569 = vld [vmem:[#allocation11 + $0x310] sm:$0xff]
    %v570 = vld [vmem:[#allocation11 + $0x318] sm:$0xff]
    %v571 = vld [vmem:[#allocation11 + $0x320] sm:$0xff]
    %v572 = vld [vmem:[#allocation11 + $0x328] sm:$0xff]
    %v573 = vld [vmem:[#allocation11 + $0x330] sm:$0xff]
    %v574 = vld [vmem:[#allocation11 + $0x338] sm:$0xff]
    %v575 = vld [vmem:[#allocation11 + $0x340] sm:$0xff]
    %v576 = vld [vmem:[#allocation11 + $0x348] sm:$0xff]
    %v577 = vld [vmem:[#allocation11 + $0x350] sm:$0xff]
    %v578 = vld [vmem:[#allocation11 + $0x358] sm:$0xff]
    %v579 = vld [vmem:[#allocation11 + $0x360] sm:$0xff]
    %v580 = vld [vmem:[#allocation11 + $0x368] sm:$0xff]
    %v581 = vld [vmem:[#allocation11 + $0x370] sm:$0xff]
    %v582 = vld [vmem:[#allocation11 + $0x378] sm:$0xff]
    %v583 = vld [vmem:[#allocation11 + $0x380] sm:$0xff]
    %v584 = vld [vmem:[#allocation11 + $0x388] sm:$0xff]
    %v585 = vld [vmem:[#allocation11 + $0x390] sm:$0xff]
    %v586 = vld [vmem:[#allocation11 + $0x398] sm:$0xff]
    %v587 = vld [vmem:[#allocation11 + $0x3a0] sm:$0xff]
    %v588 = vld [vmem:[#allocation11 + $0x3a8] sm:$0xff]
    %v589 = vld [vmem:[#allocation11 + $0x3b0] sm:$0xff]
    %v590 = vld [vmem:[#allocation11 + $0x3b8] sm:$0xff]
    %v591 = vld [vmem:[#allocation11 + $0x3c0] sm:$0xff]
    %v592 = vld [vmem:[#allocation11 + $0x3c8] sm:$0xff]
    %v593 = vld [vmem:[#allocation11 + $0x3d0] sm:$0xff]
    %v594 = vld [vmem:[#allocation11 + $0x3d8] sm:$0xff]
    %v595 = vld [vmem:[#allocation11 + $0x3e0] sm:$0xff]
    %v596 = vld [vmem:[#allocation11 + $0x3e8] sm:$0xff]
    %v597 = vld [vmem:[#allocation11 + $0x3f0] sm:$0xff]
    %v598 = vld [vmem:[#allocation11 + $0x3f8] sm:$0xff]
    %v599 = vld [vmem:[#allocation11 + $0x400] sm:$0xff]
    %v600 = vld [vmem:[#allocation11 + $0x408] sm:$0xff]
    %v601 = vld [vmem:[#allocation11 + $0x410] sm:$0xff]
    %v602 = vld [vmem:[#allocation11 + $0x418] sm:$0xff]
    %v603 = vld [vmem:[#allocation11 + $0x420] sm:$0xff]
    %v604 = vld [vmem:[#allocation11 + $0x428] sm:$0xff]
    %v605 = vld [vmem:[#allocation11 + $0x430] sm:$0xff]
    %v606 = vld [vmem:[#allocation11 + $0x438] sm:$0xff]
    %v607 = vld [vmem:[#allocation11 + $0x440] sm:$0xff]
    %v608 = vld [vmem:[#allocation11 + $0x448] sm:$0xff]
    %v609 = vld [vmem:[#allocation11 + $0x450] sm:$0xff]
    %v610 = vld [vmem:[#allocation11 + $0x458] sm:$0xff]
    %v611 = vld [vmem:[#allocation11 + $0x460] sm:$0xff]
    %v612 = vld [vmem:[#allocation11 + $0x468] sm:$0xff]
    %v613 = vld [vmem:[#allocation11 + $0x470] sm:$0xff]
    %v614 = vld [vmem:[#allocation11 + $0x478] sm:$0xff]
    %v615 = vld [vmem:[#allocation11 + $0x480] sm:$0xff]
    %v616 = vld [vmem:[#allocation11 + $0x488] sm:$0xff]
    %v617 = vld [vmem:[#allocation11 + $0x490] sm:$0xff]
    %v618 = vld [vmem:[#allocation11 + $0x498] sm:$0xff]
    %v619 = vld [vmem:[#allocation11 + $0x4a0] sm:$0xff]
    %v620 = vld [vmem:[#allocation11 + $0x4a8] sm:$0xff]
    %v621 = vld [vmem:[#allocation11 + $0x4b0] sm:$0xff]
    %v622 = vld [vmem:[#allocation11 + $0x4b8] sm:$0xff]
    %v623 = vld [vmem:[#allocation11 + $0x4c0] sm:$0xff]
    %v624 = vld [vmem:[#allocation11 + $0x4c8] sm:$0xff]
    %v625 = vld [vmem:[#allocation11 + $0x4d0] sm:$0xff]
    %v626 = vld [vmem:[#allocation11 + $0x4d8] sm:$0xff]
    %v627 = vld [vmem:[#allocation11 + $0x4e0] sm:$0xff]
    %v628 = vld [vmem:[#allocation11 + $0x4e8] sm:$0xff]
    %v629 = vld [vmem:[#allocation11 + $0x4f0] sm:$0xff]
    %v630 = vld [vmem:[#allocation11 + $0x4f8] sm:$0xff]
    %v631 = vld [vmem:[#allocation11 + $0x500] sm:$0xff]
    %v632 = vld [vmem:[#allocation11 + $0x508] sm:$0xff]
    %v633 = vld [vmem:[#allocation11 + $0x510] sm:$0xff]
    %v634 = vld [vmem:[#allocation11 + $0x518] sm:$0xff]
    %v635 = vld [vmem:[#allocation11 + $0x520] sm:$0xff]
    %v636 = vld [vmem:[#allocation11 + $0x528] sm:$0xff]
    %v637 = vld [vmem:[#allocation11 + $0x530] sm:$0xff]
    %v638 = vld [vmem:[#allocation11 + $0x538] sm:$0xff]
    %v639 = vld [vmem:[#allocation11 + $0x540] sm:$0xff]
    %v640 = vld [vmem:[#allocation11 + $0x548] sm:$0xff]
    %v641 = vld [vmem:[#allocation11 + $0x550] sm:$0xff]
    %v642 = vld [vmem:[#allocation11 + $0x558] sm:$0xff]
    %v643 = vld [vmem:[#allocation11 + $0x560] sm:$0xff]
    %v644 = vld [vmem:[#allocation11 + $0x568] sm:$0xff]
    %v645 = vld [vmem:[#allocation11 + $0x570] sm:$0xff]
    %v646 = vld [vmem:[#allocation11 + $0x578] sm:$0xff]
    %v647 = vld [vmem:[#allocation11 + $0x580] sm:$0xff]
    %v648 = vld [vmem:[#allocation11 + $0x588] sm:$0xff]
    %v649 = vld [vmem:[#allocation11 + $0x590] sm:$0xff]
    %v650 = vld [vmem:[#allocation11 + $0x598] sm:$0xff]
    %v651 = vld [vmem:[#allocation11 + $0x5a0] sm:$0xff]
    %v652 = vld [vmem:[#allocation11 + $0x5a8] sm:$0xff]
    %v653 = vld [vmem:[#allocation11 + $0x5b0] sm:$0xff]
    %v654 = vld [vmem:[#allocation11 + $0x5b8] sm:$0xff]
    %v655 = vld [vmem:[#allocation11 + $0x5c0] sm:$0xff]
    %v656 = vld [vmem:[#allocation11 + $0x5c8] sm:$0xff]
    %v657 = vld [vmem:[#allocation11 + $0x5d0] sm:$0xff]
    %v658 = vld [vmem:[#allocation11 + $0x5d8] sm:$0xff]
    %v659 = vld [vmem:[#allocation11 + $0x5e0] sm:$0xff]
    %v660 = vld [vmem:[#allocation11 + $0x5e8] sm:$0xff]
    %v661 = vld [vmem:[#allocation11 + $0x5f0] sm:$0xff]
    %v662 = vld [vmem:[#allocation11 + $0x5f8] sm:$0xff]
    %v663 = vld [vmem:[#allocation11 + $0x600] sm:$0xff]
    %v664 = vld [vmem:[#allocation11 + $0x608] sm:$0xff]
    %v665 = vld [vmem:[#allocation11 + $0x610] sm:$0xff]
    %v666 = vld [vmem:[#allocation11 + $0x618] sm:$0xff]
    %v667 = vld [vmem:[#allocation11 + $0x620] sm:$0xff]
    %v668 = vld [vmem:[#allocation11 + $0x628] sm:$0xff]
    %v669 = vld [vmem:[#allocation11 + $0x630] sm:$0xff]
    %v670 = vld [vmem:[#allocation11 + $0x638] sm:$0xff]
    %v671 = vld [vmem:[#allocation11 + $0x640] sm:$0xff]
    %v672 = vld [vmem:[#allocation11 + $0x648] sm:$0xff]
    %v673 = vld [vmem:[#allocation11 + $0x650] sm:$0xff]
    %v674 = vld [vmem:[#allocation11 + $0x658] sm:$0xff]
    %v675 = vld [vmem:[#allocation11 + $0x660] sm:$0xff]
    %v676 = vld [vmem:[#allocation11 + $0x668] sm:$0xff]
    %v677 = vld [vmem:[#allocation11 + $0x670] sm:$0xff]
    %v678 = vld [vmem:[#allocation11 + $0x678] sm:$0xff]
    %v679 = vld [vmem:[#allocation11 + $0x680] sm:$0xff]
    %v680 = vld [vmem:[#allocation11 + $0x688] sm:$0xff]
    %v681 = vld [vmem:[#allocation11 + $0x690] sm:$0xff]
    %v682 = vld [vmem:[#allocation11 + $0x698] sm:$0xff]
    %v683 = vld [vmem:[#allocation11 + $0x6a0] sm:$0xff]
    %v684 = vld [vmem:[#allocation11 + $0x6a8] sm:$0xff]
    %v685 = vld [vmem:[#allocation11 + $0x6b0] sm:$0xff]
    %v686 = vld [vmem:[#allocation11 + $0x6b8] sm:$0xff]
    %v687 = vld [vmem:[#allocation11 + $0x6c0] sm:$0xff]
    %v688 = vld [vmem:[#allocation11 + $0x6c8] sm:$0xff]
    %v689 = vld [vmem:[#allocation11 + $0x6d0] sm:$0xff]
    %v690 = vld [vmem:[#allocation11 + $0x6d8] sm:$0xff]
    %v691 = vld [vmem:[#allocation11 + $0x6e0] sm:$0xff]
    %v692 = vld [vmem:[#allocation11 + $0x6e8] sm:$0xff]
    %v693 = vld [vmem:[#allocation11 + $0x6f0] sm:$0xff]
    %v694 = vld [vmem:[#allocation11 + $0x6f8] sm:$0xff]
    %v695 = vld [vmem:[#allocation11 + $0x700] sm:$0xff]
    %v696 = vld [vmem:[#allocation11 + $0x708] sm:$0xff]
    %v697 = vld [vmem:[#allocation11 + $0x710] sm:$0xff]
    %v698 = vld [vmem:[#allocation11 + $0x718] sm:$0xff]
    %v699 = vld [vmem:[#allocation11 + $0x720] sm:$0xff]
    %v700 = vld [vmem:[#allocation11 + $0x728] sm:$0xff]
    %v701 = vld [vmem:[#allocation11 + $0x730] sm:$0xff]
    %v702 = vld [vmem:[#allocation11 + $0x738] sm:$0xff]
    %v703 = vld [vmem:[#allocation11 + $0x740] sm:$0xff]
    %v704 = vld [vmem:[#allocation11 + $0x748] sm:$0xff]
    %v705 = vld [vmem:[#allocation11 + $0x750] sm:$0xff]
    %v706 = vld [vmem:[#allocation11 + $0x758] sm:$0xff]
    %v707 = vld [vmem:[#allocation11 + $0x760] sm:$0xff]
    %v708 = vld [vmem:[#allocation11 + $0x768] sm:$0xff]
    %v709 = vld [vmem:[#allocation11 + $0x770] sm:$0xff]
    %v710 = vld [vmem:[#allocation11 + $0x778] sm:$0xff]
    %v711 = vld [vmem:[#allocation11 + $0x780] sm:$0xff]
    %v712 = vld [vmem:[#allocation11 + $0x788] sm:$0xff]
    %v713 = vld [vmem:[#allocation11 + $0x790] sm:$0xff]
    %v714 = vld [vmem:[#allocation11 + $0x798] sm:$0xff]
    %v715 = vld [vmem:[#allocation11 + $0x7a0] sm:$0xff]
    %v716 = vld [vmem:[#allocation11 + $0x7a8] sm:$0xff]
    %v717 = vld [vmem:[#allocation11 + $0x7b0] sm:$0xff]
    %v718 = vld [vmem:[#allocation11 + $0x7b8] sm:$0xff]
    %v719 = vld [vmem:[#allocation11 + $0x7c0] sm:$0xff]
    %v720 = vld [vmem:[#allocation11 + $0x7c8] sm:$0xff]
    %v721 = vld [vmem:[#allocation11 + $0x7d0] sm:$0xff]
    %v722 = vld [vmem:[#allocation11 + $0x7d8] sm:$0xff]
    %v723 = vld [vmem:[#allocation11 + $0x7e0] sm:$0xff]
    %v724 = vld [vmem:[#allocation11 + $0x7e8] sm:$0xff]
    %v725 = vld [vmem:[#allocation11 + $0x7f0] sm:$0xff]
    %v726 = vld [vmem:[#allocation11 + $0x7f8] sm:$0xff]
    %v727 = vld [vmem:[#allocation11 + $0x800] sm:$0xff]
    %v728 = vld [vmem:[#allocation11 + $0x808] sm:$0xff]
    %v729 = vld [vmem:[#allocation11 + $0x810] sm:$0xff]
    %v730 = vld [vmem:[#allocation11 + $0x818] sm:$0xff]
    %v731 = vld [vmem:[#allocation11 + $0x820] sm:$0xff]
    %v732 = vld [vmem:[#allocation11 + $0x828] sm:$0xff]
    %v733 = vld [vmem:[#allocation11 + $0x830] sm:$0xff]
    %v734 = vld [vmem:[#allocation11 + $0x838] sm:$0xff]
    %v735 = vld [vmem:[#allocation11 + $0x840] sm:$0xff]
    %v736 = vld [vmem:[#allocation11 + $0x848] sm:$0xff]
    %v737 = vld [vmem:[#allocation11 + $0x850] sm:$0xff]
    %v738 = vld [vmem:[#allocation11 + $0x858] sm:$0xff]
    %v739 = vld [vmem:[#allocation11 + $0x860] sm:$0xff]
    %v740 = vld [vmem:[#allocation11 + $0x868] sm:$0xff]
    %v741 = vld [vmem:[#allocation11 + $0x870] sm:$0xff]
    %v742 = vld [vmem:[#allocation11 + $0x878] sm:$0xff]
    %v743 = vld [vmem:[#allocation11 + $0x880] sm:$0xff]
    %v744 = vld [vmem:[#allocation11 + $0x888] sm:$0xff]
    %v745 = vld [vmem:[#allocation11 + $0x890] sm:$0xff]
    %v746 = vld [vmem:[#allocation11 + $0x898] sm:$0xff]
    %v747 = vld [vmem:[#allocation11 + $0x8a0] sm:$0xff]
    %v748 = vld [vmem:[#allocation11 + $0x8a8] sm:$0xff]
    %v749 = vld [vmem:[#allocation11 + $0x8b0] sm:$0xff]
    %v750 = vld [vmem:[#allocation11 + $0x8b8] sm:$0xff]
    %v751 = vld [vmem:[#allocation11 + $0x8c0] sm:$0xff]
    %v752 = vld [vmem:[#allocation11 + $0x8c8] sm:$0xff]
    %v753 = vld [vmem:[#allocation11 + $0x8d0] sm:$0xff]
    %v754 = vld [vmem:[#allocation11 + $0x8d8] sm:$0xff]
    %v755 = vld [vmem:[#allocation11 + $0x8e0] sm:$0xff]
    %v756 = vld [vmem:[#allocation11 + $0x8e8] sm:$0xff]
    %v757 = vld [vmem:[#allocation11 + $0x8f0] sm:$0xff]
    %v758 = vld [vmem:[#allocation11 + $0x8f8] sm:$0xff]
    %v759 = vld [vmem:[#allocation13] sm:$0x3f]
    %v761 = vlaneseq
    %v762 = vshrl.u32 %v761, 7
    %v763 = vsub.s32 0, %v762
    %v764 = vrot.slane %v759, %v763
    %v765 = vlaneseq
    %v766 = vshrl.u32 %v765, 7
    %v767 = vsub.s32 1, %v766
    %v768 = vrot.slane %v759, %v767
    %v769 = vlaneseq
    %v770 = vshrl.u32 %v769, 7
    %v771 = vsub.s32 2, %v770
    %v772 = vrot.slane %v759, %v771
    %v773 = vlaneseq
    %v774 = vshrl.u32 %v773, 7
    %v775 = vsub.s32 3, %v774
    %v776 = vrot.slane %v759, %v775
    %v777 = vlaneseq
    %v778 = vshrl.u32 %v777, 7
    %v779 = vsub.s32 4, %v778
    %v780 = vrot.slane %v759, %v779
    %v781 = vlaneseq
    %v782 = vshrl.u32 %v781, 7
    %v783 = vsub.s32 5, %v782
    %v784 = vrot.slane %v759, %v783
    %v1079 = vunpack.c.l.b16 %v471
    %v1080 = vunpack.c.h.b16 %v471
    %v1081 = vunpack.c.l.b16 %v472
    %v1082 = vunpack.c.h.b16 %v472
    %v1083 = vunpack.c.l.b16 %v473
    %v1084 = vunpack.c.h.b16 %v473
    %v1085 = vunpack.c.l.b16 %v474
    %v1086 = vunpack.c.h.b16 %v474
    %v1087 = vunpack.c.l.b16 %v475
    %v1088 = vunpack.c.h.b16 %v475
    %v1089 = vunpack.c.l.b16 %v476
    %v1090 = vunpack.c.h.b16 %v476
    %v1091 = vunpack.c.l.b16 %v477
    %v1092 = vunpack.c.h.b16 %v477
    %v1093 = vunpack.c.l.b16 %v478
    %v1094 = vunpack.c.h.b16 %v478
    %v1095 = vunpack.c.l.b16 %v479
    %v1096 = vunpack.c.h.b16 %v479
    %v1097 = vunpack.c.l.b16 %v480
    %v1098 = vunpack.c.h.b16 %v480
    %v1099 = vunpack.c.l.b16 %v481
    %v1100 = vunpack.c.h.b16 %v481
    %v1101 = vunpack.c.l.b16 %v482
    %v1102 = vunpack.c.h.b16 %v482
    %v1103 = vunpack.c.l.b16 %v483
    %v1104 = vunpack.c.h.b16 %v483
    %v1105 = vunpack.c.l.b16 %v484
    %v1106 = vunpack.c.h.b16 %v484
    %v1107 = vunpack.c.l.b16 %v485
    %v1108 = vunpack.c.h.b16 %v485
    %v1109 = vunpack.c.l.b16 %v486
    %v1110 = vunpack.c.h.b16 %v486
    %v1111 = vunpack.c.l.b16 %v487
    %v1112 = vunpack.c.h.b16 %v487
    %v1113 = vunpack.c.l.b16 %v488
    %v1114 = vunpack.c.h.b16 %v488
    %v1115 = vunpack.c.l.b16 %v489
    %v1116 = vunpack.c.h.b16 %v489
    %v1117 = vunpack.c.l.b16 %v490
    %v1118 = vunpack.c.h.b16 %v490
    %v1119 = vunpack.c.l.b16 %v491
    %v1120 = vunpack.c.h.b16 %v491
    %v1121 = vunpack.c.l.b16 %v492
    %v1122 = vunpack.c.h.b16 %v492
    %v1123 = vunpack.c.l.b16 %v493
    %v1124 = vunpack.c.h.b16 %v493
    %v1125 = vunpack.c.l.b16 %v494
    %v1126 = vunpack.c.h.b16 %v494
    %v1127 = vunpack.c.l.b16 %v495
    %v1128 = vunpack.c.h.b16 %v495
    %v1129 = vunpack.c.l.b16 %v496
    %v1130 = vunpack.c.h.b16 %v496
    %v1131 = vunpack.c.l.b16 %v497
    %v1132 = vunpack.c.h.b16 %v497
    %v1133 = vunpack.c.l.b16 %v498
    %v1134 = vunpack.c.h.b16 %v498
    %v1135 = vunpack.c.l.b16 %v499
    %v1136 = vunpack.c.h.b16 %v499
    %v1137 = vunpack.c.l.b16 %v500
    %v1138 = vunpack.c.h.b16 %v500
    %v1139 = vunpack.c.l.b16 %v501
    %v1140 = vunpack.c.h.b16 %v501
    %v1141 = vunpack.c.l.b16 %v502
    %v1142 = vunpack.c.h.b16 %v502
    %v1143 = vunpack.c.l.b16 %v503
    %v1144 = vunpack.c.h.b16 %v503
    %v1145 = vunpack.c.l.b16 %v504
    %v1146 = vunpack.c.h.b16 %v504
    %v1147 = vunpack.c.l.b16 %v505
    %v1148 = vunpack.c.h.b16 %v505
    %v1149 = vunpack.c.l.b16 %v506
    %v1150 = vunpack.c.h.b16 %v506
    %v1151 = vunpack.c.l.b16 %v507
    %v1152 = vunpack.c.h.b16 %v507
    %v1153 = vunpack.c.l.b16 %v508
    %v1154 = vunpack.c.h.b16 %v508
    %v1155 = vunpack.c.l.b16 %v509
    %v1156 = vunpack.c.h.b16 %v509
    %v1157 = vunpack.c.l.b16 %v510
    %v1158 = vunpack.c.h.b16 %v510
    %v1159 = vunpack.c.l.b16 %v511
    %v1160 = vunpack.c.h.b16 %v511
    %v1161 = vunpack.c.l.b16 %v512
    %v1162 = vunpack.c.h.b16 %v512
    %v1163 = vunpack.c.l.b16 %v513
    %v1164 = vunpack.c.h.b16 %v513
    %v1165 = vunpack.c.l.b16 %v514
    %v1166 = vunpack.c.h.b16 %v514
    %v1167 = vunpack.c.l.b16 %v515
    %v1168 = vunpack.c.h.b16 %v515
    %v1169 = vunpack.c.l.b16 %v516
    %v1170 = vunpack.c.h.b16 %v516
    %v1171 = vunpack.c.l.b16 %v517
    %v1172 = vunpack.c.h.b16 %v517
    %v1173 = vunpack.c.l.b16 %v518
    %v1174 = vunpack.c.h.b16 %v518
    %v1175 = vunpack.c.l.b16 %v519
    %v1176 = vunpack.c.h.b16 %v519
    %v1177 = vunpack.c.l.b16 %v520
    %v1178 = vunpack.c.h.b16 %v520
    %v1179 = vunpack.c.l.b16 %v521
    %v1180 = vunpack.c.h.b16 %v521
    %v1181 = vunpack.c.l.b16 %v522
    %v1182 = vunpack.c.h.b16 %v522
    %v1183 = vunpack.c.l.b16 %v523
    %v1184 = vunpack.c.h.b16 %v523
    %v1185 = vunpack.c.l.b16 %v524
    %v1186 = vunpack.c.h.b16 %v524
    %v1187 = vunpack.c.l.b16 %v525
    %v1188 = vunpack.c.h.b16 %v525
    %v1189 = vunpack.c.l.b16 %v526
    %v1190 = vunpack.c.h.b16 %v526
    %v1191 = vunpack.c.l.b16 %v527
    %v1192 = vunpack.c.h.b16 %v527
    %v1193 = vunpack.c.l.b16 %v528
    %v1194 = vunpack.c.h.b16 %v528
    %v1195 = vunpack.c.l.b16 %v529
    %v1196 = vunpack.c.h.b16 %v529
    %v1197 = vunpack.c.l.b16 %v530
    %v1198 = vunpack.c.h.b16 %v530
    %v1199 = vunpack.c.l.b16 %v531
    %v1200 = vunpack.c.h.b16 %v531
    %v1201 = vunpack.c.l.b16 %v532
    %v1202 = vunpack.c.h.b16 %v532
    %v1203 = vunpack.c.l.b16 %v533
    %v1204 = vunpack.c.h.b16 %v533
    %v1205 = vunpack.c.l.b16 %v534
    %v1206 = vunpack.c.h.b16 %v534
    %v1207 = vunpack.c.l.b16 %v535
    %v1208 = vunpack.c.h.b16 %v535
    %v1209 = vunpack.c.l.b16 %v536
    %v1210 = vunpack.c.h.b16 %v536
    %v1211 = vunpack.c.l.b16 %v537
    %v1212 = vunpack.c.h.b16 %v537
    %v1213 = vunpack.c.l.b16 %v538
    %v1214 = vunpack.c.h.b16 %v538
    %v1215 = vunpack.c.l.b16 %v539
    %v1216 = vunpack.c.h.b16 %v539
    %v1217 = vunpack.c.l.b16 %v540
    %v1218 = vunpack.c.h.b16 %v540
    %v1219 = vunpack.c.l.b16 %v541
    %v1220 = vunpack.c.h.b16 %v541
    %v1221 = vunpack.c.l.b16 %v542
    %v1222 = vunpack.c.h.b16 %v542
    %v1223 = vunpack.c.l.b16 %v543
    %v1224 = vunpack.c.h.b16 %v543
    %v1225 = vunpack.c.l.b16 %v544
    %v1226 = vunpack.c.h.b16 %v544
    %v1227 = vunpack.c.l.b16 %v545
    %v1228 = vunpack.c.h.b16 %v545
    %v1229 = vunpack.c.l.b16 %v546
    %v1230 = vunpack.c.h.b16 %v546
    %v1231 = vunpack.c.l.b16 %v547
    %v1232 = vunpack.c.h.b16 %v547
    %v1233 = vunpack.c.l.b16 %v548
    %v1234 = vunpack.c.h.b16 %v548
    %v1235 = vunpack.c.l.b16 %v549
    %v1236 = vunpack.c.h.b16 %v549
    %v1237 = vunpack.c.l.b16 %v550
    %v1238 = vunpack.c.h.b16 %v550
    %v1239 = vunpack.c.l.b16 %v551
    %v1240 = vunpack.c.h.b16 %v551
    %v1241 = vunpack.c.l.b16 %v552
    %v1242 = vunpack.c.h.b16 %v552
    %v1243 = vunpack.c.l.b16 %v553
    %v1244 = vunpack.c.h.b16 %v553
    %v1245 = vunpack.c.l.b16 %v554
    %v1246 = vunpack.c.h.b16 %v554
    %v1247 = vunpack.c.l.b16 %v555
    %v1248 = vunpack.c.h.b16 %v555
    %v1249 = vunpack.c.l.b16 %v556
    %v1250 = vunpack.c.h.b16 %v556
    %v1251 = vunpack.c.l.b16 %v557
    %v1252 = vunpack.c.h.b16 %v557
    %v1253 = vunpack.c.l.b16 %v558
    %v1254 = vunpack.c.h.b16 %v558
    %v1255 = vunpack.c.l.b16 %v559
    %v1256 = vunpack.c.h.b16 %v559
    %v1257 = vunpack.c.l.b16 %v560
    %v1258 = vunpack.c.h.b16 %v560
    %v1259 = vunpack.c.l.b16 %v561
    %v1260 = vunpack.c.h.b16 %v561
    %v1261 = vunpack.c.l.b16 %v562
    %v1262 = vunpack.c.h.b16 %v562
    %v1263 = vunpack.c.l.b16 %v563
    %v1264 = vunpack.c.h.b16 %v563
    %v1265 = vunpack.c.l.b16 %v564
    %v1266 = vunpack.c.h.b16 %v564
    %v1267 = vunpack.c.l.b16 %v565
    %v1268 = vunpack.c.h.b16 %v565
    %v1269 = vunpack.c.l.b16 %v566
    %v1270 = vunpack.c.h.b16 %v566
    %v1271 = vunpack.c.l.b16 %v567
    %v1272 = vunpack.c.h.b16 %v567
    %v1273 = vunpack.c.l.b16 %v568
    %v1274 = vunpack.c.h.b16 %v568
    %v1275 = vunpack.c.l.b16 %v569
    %v1276 = vunpack.c.h.b16 %v569
    %v1277 = vunpack.c.l.b16 %v570
    %v1278 = vunpack.c.h.b16 %v570
    %v1279 = vunpack.c.l.b16 %v571
    %v1280 = vunpack.c.h.b16 %v571
    %v1281 = vunpack.c.l.b16 %v572
    %v1282 = vunpack.c.h.b16 %v572
    %v1283 = vunpack.c.l.b16 %v573
    %v1284 = vunpack.c.h.b16 %v573
    %v1285 = vunpack.c.l.b16 %v574
    %v1286 = vunpack.c.h.b16 %v574
    %v1287 = vunpack.c.l.b16 %v575
    %v1288 = vunpack.c.h.b16 %v575
    %v1289 = vunpack.c.l.b16 %v576
    %v1290 = vunpack.c.h.b16 %v576
    %v1291 = vunpack.c.l.b16 %v577
    %v1292 = vunpack.c.h.b16 %v577
    %v1293 = vunpack.c.l.b16 %v578
    %v1294 = vunpack.c.h.b16 %v578
    %v1295 = vunpack.c.l.b16 %v579
    %v1296 = vunpack.c.h.b16 %v579
    %v1297 = vunpack.c.l.b16 %v580
    %v1298 = vunpack.c.h.b16 %v580
    %v1299 = vunpack.c.l.b16 %v581
    %v1300 = vunpack.c.h.b16 %v581
    %v1301 = vunpack.c.l.b16 %v582
    %v1302 = vunpack.c.h.b16 %v582
    %v1303 = vunpack.c.l.b16 %v583
    %v1304 = vunpack.c.h.b16 %v583
    %v1305 = vunpack.c.l.b16 %v584
    %v1306 = vunpack.c.h.b16 %v584
    %v1307 = vunpack.c.l.b16 %v585
    %v1308 = vunpack.c.h.b16 %v585
    %v1309 = vunpack.c.l.b16 %v586
    %v1310 = vunpack.c.h.b16 %v586
    %v1311 = vunpack.c.l.b16 %v587
    %v1312 = vunpack.c.h.b16 %v587
    %v1313 = vunpack.c.l.b16 %v588
    %v1314 = vunpack.c.h.b16 %v588
    %v1315 = vunpack.c.l.b16 %v589
    %v1316 = vunpack.c.h.b16 %v589
    %v1317 = vunpack.c.l.b16 %v590
    %v1318 = vunpack.c.h.b16 %v590
    %v1319 = vunpack.c.l.b16 %v591
    %v1320 = vunpack.c.h.b16 %v591
    %v1321 = vunpack.c.l.b16 %v592
    %v1322 = vunpack.c.h.b16 %v592
    %v1323 = vunpack.c.l.b16 %v593
    %v1324 = vunpack.c.h.b16 %v593
    %v1325 = vunpack.c.l.b16 %v594
    %v1326 = vunpack.c.h.b16 %v594
    %v1327 = vunpack.c.l.b16 %v595
    %v1328 = vunpack.c.h.b16 %v595
    %v1329 = vunpack.c.l.b16 %v596
    %v1330 = vunpack.c.h.b16 %v596
    %v1331 = vunpack.c.l.b16 %v597
    %v1332 = vunpack.c.h.b16 %v597
    %v1333 = vunpack.c.l.b16 %v598
    %v1334 = vunpack.c.h.b16 %v598
    %v1335 = vunpack.c.l.b16 %v599
    %v1336 = vunpack.c.h.b16 %v599
    %v1337 = vunpack.c.l.b16 %v600
    %v1338 = vunpack.c.h.b16 %v600
    %v1339 = vunpack.c.l.b16 %v601
    %v1340 = vunpack.c.h.b16 %v601
    %v1341 = vunpack.c.l.b16 %v602
    %v1342 = vunpack.c.h.b16 %v602
    %v1343 = vunpack.c.l.b16 %v603
    %v1344 = vunpack.c.h.b16 %v603
    %v1345 = vunpack.c.l.b16 %v604
    %v1346 = vunpack.c.h.b16 %v604
    %v1347 = vunpack.c.l.b16 %v605
    %v1348 = vunpack.c.h.b16 %v605
    %v1349 = vunpack.c.l.b16 %v606
    %v1350 = vunpack.c.h.b16 %v606
    %v1351 = vunpack.c.l.b16 %v607
    %v1352 = vunpack.c.h.b16 %v607
    %v1353 = vunpack.c.l.b16 %v608
    %v1354 = vunpack.c.h.b16 %v608
    %v1355 = vunpack.c.l.b16 %v609
    %v1356 = vunpack.c.h.b16 %v609
    %v1357 = vunpack.c.l.b16 %v610
    %v1358 = vunpack.c.h.b16 %v610
    %v1359 = vunpack.c.l.b16 %v611
    %v1360 = vunpack.c.h.b16 %v611
    %v1361 = vunpack.c.l.b16 %v612
    %v1362 = vunpack.c.h.b16 %v612
    %v1363 = vunpack.c.l.b16 %v613
    %v1364 = vunpack.c.h.b16 %v613
    %v1365 = vunpack.c.l.b16 %v614
    %v1366 = vunpack.c.h.b16 %v614
    %v1367 = vunpack.c.l.b16 %v615
    %v1368 = vunpack.c.h.b16 %v615
    %v1369 = vunpack.c.l.b16 %v616
    %v1370 = vunpack.c.h.b16 %v616
    %v1371 = vunpack.c.l.b16 %v617
    %v1372 = vunpack.c.h.b16 %v617
    %v1373 = vunpack.c.l.b16 %v618
    %v1374 = vunpack.c.h.b16 %v618
    %v1375 = vunpack.c.l.b16 %v619
    %v1376 = vunpack.c.h.b16 %v619
    %v1377 = vunpack.c.l.b16 %v620
    %v1378 = vunpack.c.h.b16 %v620
    %v1379 = vunpack.c.l.b16 %v621
    %v1380 = vunpack.c.h.b16 %v621
    %v1381 = vunpack.c.l.b16 %v622
    %v1382 = vunpack.c.h.b16 %v622
    %v1383 = vunpack.c.l.b16 %v623
    %v1384 = vunpack.c.h.b16 %v623
    %v1385 = vunpack.c.l.b16 %v624
    %v1386 = vunpack.c.h.b16 %v624
    %v1387 = vunpack.c.l.b16 %v625
    %v1388 = vunpack.c.h.b16 %v625
    %v1389 = vunpack.c.l.b16 %v626
    %v1390 = vunpack.c.h.b16 %v626
    %v1391 = vunpack.c.l.b16 %v627
    %v1392 = vunpack.c.h.b16 %v627
    %v1393 = vunpack.c.l.b16 %v628
    %v1394 = vunpack.c.h.b16 %v628
    %v1395 = vunpack.c.l.b16 %v629
    %v1396 = vunpack.c.h.b16 %v629
    %v1397 = vunpack.c.l.b16 %v630
    %v1398 = vunpack.c.h.b16 %v630
    %v1399 = vunpack.c.l.b16 %v631
    %v1400 = vunpack.c.h.b16 %v631
    %v1401 = vunpack.c.l.b16 %v632
    %v1402 = vunpack.c.h.b16 %v632
    %v1403 = vunpack.c.l.b16 %v633
    %v1404 = vunpack.c.h.b16 %v633
    %v1405 = vunpack.c.l.b16 %v634
    %v1406 = vunpack.c.h.b16 %v634
    %v1407 = vunpack.c.l.b16 %v635
    %v1408 = vunpack.c.h.b16 %v635
    %v1409 = vunpack.c.l.b16 %v636
    %v1410 = vunpack.c.h.b16 %v636
    %v1411 = vunpack.c.l.b16 %v637
    %v1412 = vunpack.c.h.b16 %v637
    %v1413 = vunpack.c.l.b16 %v638
    %v1414 = vunpack.c.h.b16 %v638
    %v1415 = vunpack.c.l.b16 %v639
    %v1416 = vunpack.c.h.b16 %v639
    %v1417 = vunpack.c.l.b16 %v640
    %v1418 = vunpack.c.h.b16 %v640
    %v1419 = vunpack.c.l.b16 %v641
    %v1420 = vunpack.c.h.b16 %v641
    %v1421 = vunpack.c.l.b16 %v642
    %v1422 = vunpack.c.h.b16 %v642
    %v1423 = vunpack.c.l.b16 %v643
    %v1424 = vunpack.c.h.b16 %v643
    %v1425 = vunpack.c.l.b16 %v644
    %v1426 = vunpack.c.h.b16 %v644
    %v1427 = vunpack.c.l.b16 %v645
    %v1428 = vunpack.c.h.b16 %v645
    %v1429 = vunpack.c.l.b16 %v646
    %v1430 = vunpack.c.h.b16 %v646
    %v1431 = vunpack.c.l.b16 %v647
    %v1432 = vunpack.c.h.b16 %v647
    %v1433 = vunpack.c.l.b16 %v648
    %v1434 = vunpack.c.h.b16 %v648
    %v1435 = vunpack.c.l.b16 %v649
    %v1436 = vunpack.c.h.b16 %v649
    %v1437 = vunpack.c.l.b16 %v650
    %v1438 = vunpack.c.h.b16 %v650
    %v1439 = vunpack.c.l.b16 %v651
    %v1440 = vunpack.c.h.b16 %v651
    %v1441 = vunpack.c.l.b16 %v652
    %v1442 = vunpack.c.h.b16 %v652
    %v1443 = vunpack.c.l.b16 %v653
    %v1444 = vunpack.c.h.b16 %v653
    %v1445 = vunpack.c.l.b16 %v654
    %v1446 = vunpack.c.h.b16 %v654
    %v1447 = vunpack.c.l.b16 %v655
    %v1448 = vunpack.c.h.b16 %v655
    %v1449 = vunpack.c.l.b16 %v656
    %v1450 = vunpack.c.h.b16 %v656
    %v1451 = vunpack.c.l.b16 %v657
    %v1452 = vunpack.c.h.b16 %v657
    %v1453 = vunpack.c.l.b16 %v658
    %v1454 = vunpack.c.h.b16 %v658
    %v1455 = vunpack.c.l.b16 %v659
    %v1456 = vunpack.c.h.b16 %v659
    %v1457 = vunpack.c.l.b16 %v660
    %v1458 = vunpack.c.h.b16 %v660
    %v1459 = vunpack.c.l.b16 %v661
    %v1460 = vunpack.c.h.b16 %v661
    %v1461 = vunpack.c.l.b16 %v662
    %v1462 = vunpack.c.h.b16 %v662
    %v1463 = vunpack.c.l.b16 %v663
    %v1464 = vunpack.c.h.b16 %v663
    %v1465 = vunpack.c.l.b16 %v664
    %v1466 = vunpack.c.h.b16 %v664
    %v1467 = vunpack.c.l.b16 %v665
    %v1468 = vunpack.c.h.b16 %v665
    %v1469 = vunpack.c.l.b16 %v666
    %v1470 = vunpack.c.h.b16 %v666
    %v1471 = vunpack.c.l.b16 %v667
    %v1472 = vunpack.c.h.b16 %v667
    %v1473 = vunpack.c.l.b16 %v668
    %v1474 = vunpack.c.h.b16 %v668
    %v1475 = vunpack.c.l.b16 %v669
    %v1476 = vunpack.c.h.b16 %v669
    %v1477 = vunpack.c.l.b16 %v670
    %v1478 = vunpack.c.h.b16 %v670
    %v1479 = vunpack.c.l.b16 %v671
    %v1480 = vunpack.c.h.b16 %v671
    %v1481 = vunpack.c.l.b16 %v672
    %v1482 = vunpack.c.h.b16 %v672
    %v1483 = vunpack.c.l.b16 %v673
    %v1484 = vunpack.c.h.b16 %v673
    %v1485 = vunpack.c.l.b16 %v674
    %v1486 = vunpack.c.h.b16 %v674
    %v1487 = vunpack.c.l.b16 %v675
    %v1488 = vunpack.c.h.b16 %v675
    %v1489 = vunpack.c.l.b16 %v676
    %v1490 = vunpack.c.h.b16 %v676
    %v1491 = vunpack.c.l.b16 %v677
    %v1492 = vunpack.c.h.b16 %v677
    %v1493 = vunpack.c.l.b16 %v678
    %v1494 = vunpack.c.h.b16 %v678
    %v1495 = vunpack.c.l.b16 %v679
    %v1496 = vunpack.c.h.b16 %v679
    %v1497 = vunpack.c.l.b16 %v680
    %v1498 = vunpack.c.h.b16 %v680
    %v1499 = vunpack.c.l.b16 %v681
    %v1500 = vunpack.c.h.b16 %v681
    %v1501 = vunpack.c.l.b16 %v682
    %v1502 = vunpack.c.h.b16 %v682
    %v1503 = vunpack.c.l.b16 %v683
    %v1504 = vunpack.c.h.b16 %v683
    %v1505 = vunpack.c.l.b16 %v684
    %v1506 = vunpack.c.h.b16 %v684
    %v1507 = vunpack.c.l.b16 %v685
    %v1508 = vunpack.c.h.b16 %v685
    %v1509 = vunpack.c.l.b16 %v686
    %v1510 = vunpack.c.h.b16 %v686
    %v1511 = vunpack.c.l.b16 %v687
    %v1512 = vunpack.c.h.b16 %v687
    %v1513 = vunpack.c.l.b16 %v688
    %v1514 = vunpack.c.h.b16 %v688
    %v1515 = vunpack.c.l.b16 %v689
    %v1516 = vunpack.c.h.b16 %v689
    %v1517 = vunpack.c.l.b16 %v690
    %v1518 = vunpack.c.h.b16 %v690
    %v1519 = vunpack.c.l.b16 %v691
    %v1520 = vunpack.c.h.b16 %v691
    %v1521 = vunpack.c.l.b16 %v692
    %v1522 = vunpack.c.h.b16 %v692
    %v1523 = vunpack.c.l.b16 %v693
    %v1524 = vunpack.c.h.b16 %v693
    %v1525 = vunpack.c.l.b16 %v694
    %v1526 = vunpack.c.h.b16 %v694
    %v1527 = vunpack.c.l.b16 %v695
    %v1528 = vunpack.c.h.b16 %v695
    %v1529 = vunpack.c.l.b16 %v696
    %v1530 = vunpack.c.h.b16 %v696
    %v1531 = vunpack.c.l.b16 %v697
    %v1532 = vunpack.c.h.b16 %v697
    %v1533 = vunpack.c.l.b16 %v698
    %v1534 = vunpack.c.h.b16 %v698
    %v1535 = vunpack.c.l.b16 %v699
    %v1536 = vunpack.c.h.b16 %v699
    %v1537 = vunpack.c.l.b16 %v700
    %v1538 = vunpack.c.h.b16 %v700
    %v1539 = vunpack.c.l.b16 %v701
    %v1540 = vunpack.c.h.b16 %v701
    %v1541 = vunpack.c.l.b16 %v702
    %v1542 = vunpack.c.h.b16 %v702
    %v1543 = vunpack.c.l.b16 %v703
    %v1544 = vunpack.c.h.b16 %v703
    %v1545 = vunpack.c.l.b16 %v704
    %v1546 = vunpack.c.h.b16 %v704
    %v1547 = vunpack.c.l.b16 %v705
    %v1548 = vunpack.c.h.b16 %v705
    %v1549 = vunpack.c.l.b16 %v706
    %v1550 = vunpack.c.h.b16 %v706
    %v1551 = vunpack.c.l.b16 %v707
    %v1552 = vunpack.c.h.b16 %v707
    %v1553 = vunpack.c.l.b16 %v708
    %v1554 = vunpack.c.h.b16 %v708
    %v1555 = vunpack.c.l.b16 %v709
    %v1556 = vunpack.c.h.b16 %v709
    %v1557 = vunpack.c.l.b16 %v710
    %v1558 = vunpack.c.h.b16 %v710
    %v1559 = vunpack.c.l.b16 %v711
    %v1560 = vunpack.c.h.b16 %v711
    %v1561 = vunpack.c.l.b16 %v712
    %v1562 = vunpack.c.h.b16 %v712
    %v1563 = vunpack.c.l.b16 %v713
    %v1564 = vunpack.c.h.b16 %v713
    %v1565 = vunpack.c.l.b16 %v714
    %v1566 = vunpack.c.h.b16 %v714
    %v1567 = vunpack.c.l.b16 %v715
    %v1568 = vunpack.c.h.b16 %v715
    %v1569 = vunpack.c.l.b16 %v716
    %v1570 = vunpack.c.h.b16 %v716
    %v1571 = vunpack.c.l.b16 %v717
    %v1572 = vunpack.c.h.b16 %v717
    %v1573 = vunpack.c.l.b16 %v718
    %v1574 = vunpack.c.h.b16 %v718
    %v1575 = vunpack.c.l.b16 %v719
    %v1576 = vunpack.c.h.b16 %v719
    %v1577 = vunpack.c.l.b16 %v720
    %v1578 = vunpack.c.h.b16 %v720
    %v1579 = vunpack.c.l.b16 %v721
    %v1580 = vunpack.c.h.b16 %v721
    %v1581 = vunpack.c.l.b16 %v722
    %v1582 = vunpack.c.h.b16 %v722
    %v1583 = vunpack.c.l.b16 %v723
    %v1584 = vunpack.c.h.b16 %v723
    %v1585 = vunpack.c.l.b16 %v724
    %v1586 = vunpack.c.h.b16 %v724
    %v1587 = vunpack.c.l.b16 %v725
    %v1588 = vunpack.c.h.b16 %v725
    %v1589 = vunpack.c.l.b16 %v726
    %v1590 = vunpack.c.h.b16 %v726
    %v1591 = vunpack.c.l.b16 %v727
    %v1592 = vunpack.c.h.b16 %v727
    %v1593 = vunpack.c.l.b16 %v728
    %v1594 = vunpack.c.h.b16 %v728
    %v1595 = vunpack.c.l.b16 %v729
    %v1596 = vunpack.c.h.b16 %v729
    %v1597 = vunpack.c.l.b16 %v730
    %v1598 = vunpack.c.h.b16 %v730
    %v1599 = vunpack.c.l.b16 %v731
    %v1600 = vunpack.c.h.b16 %v731
    %v1601 = vunpack.c.l.b16 %v732
    %v1602 = vunpack.c.h.b16 %v732
    %v1603 = vunpack.c.l.b16 %v733
    %v1604 = vunpack.c.h.b16 %v733
    %v1605 = vunpack.c.l.b16 %v734
    %v1606 = vunpack.c.h.b16 %v734
    %v1607 = vunpack.c.l.b16 %v735
    %v1608 = vunpack.c.h.b16 %v735
    %v1609 = vunpack.c.l.b16 %v736
    %v1610 = vunpack.c.h.b16 %v736
    %v1611 = vunpack.c.l.b16 %v737
    %v1612 = vunpack.c.h.b16 %v737
    %v1613 = vunpack.c.l.b16 %v738
    %v1614 = vunpack.c.h.b16 %v738
    %v1615 = vunpack.c.l.b16 %v739
    %v1616 = vunpack.c.h.b16 %v739
    %v1617 = vunpack.c.l.b16 %v740
    %v1618 = vunpack.c.h.b16 %v740
    %v1619 = vunpack.c.l.b16 %v741
    %v1620 = vunpack.c.h.b16 %v741
    %v1621 = vunpack.c.l.b16 %v742
    %v1622 = vunpack.c.h.b16 %v742
    %v1623 = vunpack.c.l.b16 %v743
    %v1624 = vunpack.c.h.b16 %v743
    %v1625 = vunpack.c.l.b16 %v744
    %v1626 = vunpack.c.h.b16 %v744
    %v1627 = vunpack.c.l.b16 %v745
    %v1628 = vunpack.c.h.b16 %v745
    %v1629 = vunpack.c.l.b16 %v746
    %v1630 = vunpack.c.h.b16 %v746
    %v1631 = vunpack.c.l.b16 %v747
    %v1632 = vunpack.c.h.b16 %v747
    %v1633 = vunpack.c.l.b16 %v748
    %v1634 = vunpack.c.h.b16 %v748
    %v1635 = vunpack.c.l.b16 %v749
    %v1636 = vunpack.c.h.b16 %v749
    %v1637 = vunpack.c.l.b16 %v750
    %v1638 = vunpack.c.h.b16 %v750
    %v1639 = vunpack.c.l.b16 %v751
    %v1640 = vunpack.c.h.b16 %v751
    %v1641 = vunpack.c.l.b16 %v752
    %v1642 = vunpack.c.h.b16 %v752
    %v1643 = vunpack.c.l.b16 %v753
    %v1644 = vunpack.c.h.b16 %v753
    %v1645 = vunpack.c.l.b16 %v754
    %v1646 = vunpack.c.h.b16 %v754
    %v1647 = vunpack.c.l.b16 %v755
    %v1648 = vunpack.c.h.b16 %v755
    %v1649 = vunpack.c.l.b16 %v756
    %v1650 = vunpack.c.h.b16 %v756
    %v1651 = vunpack.c.l.b16 %v757
    %v1652 = vunpack.c.h.b16 %v757
    %v1653 = vunpack.c.l.b16 %v758
    %v1654 = vunpack.c.h.b16 %v758
    %v1655 = vpack.c.b16 %v1085, %v1079
    %v1656 = vpack.c.b16 %v1086, %v1080
    %v1657 = vpack.c.b16 %v1087, %v1081
    %v1658 = vpack.c.b16 %v1088, %v1082
    %v1659 = vpack.c.b16 %v1089, %v1083
    %v1660 = vpack.c.b16 %v1090, %v1084
    %v1661 = vpack.c.b16 %v1097, %v1091
    %v1662 = vpack.c.b16 %v1098, %v1092
    %v1663 = vpack.c.b16 %v1099, %v1093
    %v1664 = vpack.c.b16 %v1100, %v1094
    %v1665 = vpack.c.b16 %v1101, %v1095
    %v1666 = vpack.c.b16 %v1102, %v1096
    %v1667 = vpack.c.b16 %v1109, %v1103
    %v1668 = vpack.c.b16 %v1110, %v1104
    %v1669 = vpack.c.b16 %v1111, %v1105
    %v1670 = vpack.c.b16 %v1112, %v1106
    %v1671 = vpack.c.b16 %v1113, %v1107
    %v1672 = vpack.c.b16 %v1114, %v1108
    %v1673 = vpack.c.b16 %v1121, %v1115
    %v1674 = vpack.c.b16 %v1122, %v1116
    %v1675 = vpack.c.b16 %v1123, %v1117
    %v1676 = vpack.c.b16 %v1124, %v1118
    %v1677 = vpack.c.b16 %v1125, %v1119
    %v1678 = vpack.c.b16 %v1126, %v1120
    %v1679 = vpack.c.b16 %v1133, %v1127
    %v1680 = vpack.c.b16 %v1134, %v1128
    %v1681 = vpack.c.b16 %v1135, %v1129
    %v1682 = vpack.c.b16 %v1136, %v1130
    %v1683 = vpack.c.b16 %v1137, %v1131
    %v1684 = vpack.c.b16 %v1138, %v1132
    %v1685 = vpack.c.b16 %v1145, %v1139
    %v1686 = vpack.c.b16 %v1146, %v1140
    %v1687 = vpack.c.b16 %v1147, %v1141
    %v1688 = vpack.c.b16 %v1148, %v1142
    %v1689 = vpack.c.b16 %v1149, %v1143
    %v1690 = vpack.c.b16 %v1150, %v1144
    %v1691 = vpack.c.b16 %v1157, %v1151
    %v1692 = vpack.c.b16 %v1158, %v1152
    %v1693 = vpack.c.b16 %v1159, %v1153
    %v1694 = vpack.c.b16 %v1160, %v1154
    %v1695 = vpack.c.b16 %v1161, %v1155
    %v1696 = vpack.c.b16 %v1162, %v1156
    %v1697 = vpack.c.b16 %v1169, %v1163
    %v1698 = vpack.c.b16 %v1170, %v1164
    %v1699 = vpack.c.b16 %v1171, %v1165
    %v1700 = vpack.c.b16 %v1172, %v1166
    %v1701 = vpack.c.b16 %v1173, %v1167
    %v1702 = vpack.c.b16 %v1174, %v1168
    %v1703 = vpack.c.b16 %v1181, %v1175
    %v1704 = vpack.c.b16 %v1182, %v1176
    %v1705 = vpack.c.b16 %v1183, %v1177
    %v1706 = vpack.c.b16 %v1184, %v1178
    %v1707 = vpack.c.b16 %v1185, %v1179
    %v1708 = vpack.c.b16 %v1186, %v1180
    %v1709 = vpack.c.b16 %v1193, %v1187
    %v1710 = vpack.c.b16 %v1194, %v1188
    %v1711 = vpack.c.b16 %v1195, %v1189
    %v1712 = vpack.c.b16 %v1196, %v1190
    %v1713 = vpack.c.b16 %v1197, %v1191
    %v1714 = vpack.c.b16 %v1198, %v1192
    %v1715 = vpack.c.b16 %v1205, %v1199
    %v1716 = vpack.c.b16 %v1206, %v1200
    %v1717 = vpack.c.b16 %v1207, %v1201
    %v1718 = vpack.c.b16 %v1208, %v1202
    %v1719 = vpack.c.b16 %v1209, %v1203
    %v1720 = vpack.c.b16 %v1210, %v1204
    %v1721 = vpack.c.b16 %v1217, %v1211
    %v1722 = vpack.c.b16 %v1218, %v1212
    %v1723 = vpack.c.b16 %v1219, %v1213
    %v1724 = vpack.c.b16 %v1220, %v1214
    %v1725 = vpack.c.b16 %v1221, %v1215
    %v1726 = vpack.c.b16 %v1222, %v1216
    %v1727 = vpack.c.b16 %v1229, %v1223
    %v1728 = vpack.c.b16 %v1230, %v1224
    %v1729 = vpack.c.b16 %v1231, %v1225
    %v1730 = vpack.c.b16 %v1232, %v1226
    %v1731 = vpack.c.b16 %v1233, %v1227
    %v1732 = vpack.c.b16 %v1234, %v1228
    %v1733 = vpack.c.b16 %v1241, %v1235
    %v1734 = vpack.c.b16 %v1242, %v1236
    %v1735 = vpack.c.b16 %v1243, %v1237
    %v1736 = vpack.c.b16 %v1244, %v1238
    %v1737 = vpack.c.b16 %v1245, %v1239
    %v1738 = vpack.c.b16 %v1246, %v1240
    %v1739 = vpack.c.b16 %v1253, %v1247
    %v1740 = vpack.c.b16 %v1254, %v1248
    %v1741 = vpack.c.b16 %v1255, %v1249
    %v1742 = vpack.c.b16 %v1256, %v1250
    %v1743 = vpack.c.b16 %v1257, %v1251
    %v1744 = vpack.c.b16 %v1258, %v1252
    %v1745 = vpack.c.b16 %v1265, %v1259
    %v1746 = vpack.c.b16 %v1266, %v1260
    %v1747 = vpack.c.b16 %v1267, %v1261
    %v1748 = vpack.c.b16 %v1268, %v1262
    %v1749 = vpack.c.b16 %v1269, %v1263
    %v1750 = vpack.c.b16 %v1270, %v1264
    %v1751 = vpack.c.b16 %v1277, %v1271
    %v1752 = vpack.c.b16 %v1278, %v1272
    %v1753 = vpack.c.b16 %v1279, %v1273
    %v1754 = vpack.c.b16 %v1280, %v1274
    %v1755 = vpack.c.b16 %v1281, %v1275
    %v1756 = vpack.c.b16 %v1282, %v1276
    %v1757 = vpack.c.b16 %v1289, %v1283
    %v1758 = vpack.c.b16 %v1290, %v1284
    %v1759 = vpack.c.b16 %v1291, %v1285
    %v1760 = vpack.c.b16 %v1292, %v1286
    %v1761 = vpack.c.b16 %v1293, %v1287
    %v1762 = vpack.c.b16 %v1294, %v1288
    %v1763 = vpack.c.b16 %v1301, %v1295
    %v1764 = vpack.c.b16 %v1302, %v1296
    %v1765 = vpack.c.b16 %v1303, %v1297
    %v1766 = vpack.c.b16 %v1304, %v1298
    %v1767 = vpack.c.b16 %v1305, %v1299
    %v1768 = vpack.c.b16 %v1306, %v1300
    %v1769 = vpack.c.b16 %v1313, %v1307
    %v1770 = vpack.c.b16 %v1314, %v1308
    %v1771 = vpack.c.b16 %v1315, %v1309
    %v1772 = vpack.c.b16 %v1316, %v1310
    %v1773 = vpack.c.b16 %v1317, %v1311
    %v1774 = vpack.c.b16 %v1318, %v1312
    %v1775 = vpack.c.b16 %v1325, %v1319
    %v1776 = vpack.c.b16 %v1326, %v1320
    %v1777 = vpack.c.b16 %v1327, %v1321
    %v1778 = vpack.c.b16 %v1328, %v1322
    %v1779 = vpack.c.b16 %v1329, %v1323
    %v1780 = vpack.c.b16 %v1330, %v1324
    %v1781 = vpack.c.b16 %v1337, %v1331
    %v1782 = vpack.c.b16 %v1338, %v1332
    %v1783 = vpack.c.b16 %v1339, %v1333
    %v1784 = vpack.c.b16 %v1340, %v1334
    %v1785 = vpack.c.b16 %v1341, %v1335
    %v1786 = vpack.c.b16 %v1342, %v1336
    %v1787 = vpack.c.b16 %v1349, %v1343
    %v1788 = vpack.c.b16 %v1350, %v1344
    %v1789 = vpack.c.b16 %v1351, %v1345
    %v1790 = vpack.c.b16 %v1352, %v1346
    %v1791 = vpack.c.b16 %v1353, %v1347
    %v1792 = vpack.c.b16 %v1354, %v1348
    %v1793 = vpack.c.b16 %v1361, %v1355
    %v1794 = vpack.c.b16 %v1362, %v1356
    %v1795 = vpack.c.b16 %v1363, %v1357
    %v1796 = vpack.c.b16 %v1364, %v1358
    %v1797 = vpack.c.b16 %v1365, %v1359
    %v1798 = vpack.c.b16 %v1366, %v1360
    %v1799 = vpack.c.b16 %v1373, %v1367
    %v1800 = vpack.c.b16 %v1374, %v1368
    %v1801 = vpack.c.b16 %v1375, %v1369
    %v1802 = vpack.c.b16 %v1376, %v1370
    %v1803 = vpack.c.b16 %v1377, %v1371
    %v1804 = vpack.c.b16 %v1378, %v1372
    %v1805 = vpack.c.b16 %v1385, %v1379
    %v1806 = vpack.c.b16 %v1386, %v1380
    %v1807 = vpack.c.b16 %v1387, %v1381
    %v1808 = vpack.c.b16 %v1388, %v1382
    %v1809 = vpack.c.b16 %v1389, %v1383
    %v1810 = vpack.c.b16 %v1390, %v1384
    %v1811 = vpack.c.b16 %v1397, %v1391
    %v1812 = vpack.c.b16 %v1398, %v1392
    %v1813 = vpack.c.b16 %v1399, %v1393
    %v1814 = vpack.c.b16 %v1400, %v1394
    %v1815 = vpack.c.b16 %v1401, %v1395
    %v1816 = vpack.c.b16 %v1402, %v1396
    %v1817 = vpack.c.b16 %v1409, %v1403
    %v1818 = vpack.c.b16 %v1410, %v1404
    %v1819 = vpack.c.b16 %v1411, %v1405
    %v1820 = vpack.c.b16 %v1412, %v1406
    %v1821 = vpack.c.b16 %v1413, %v1407
    %v1822 = vpack.c.b16 %v1414, %v1408
    %v1823 = vpack.c.b16 %v1421, %v1415
    %v1824 = vpack.c.b16 %v1422, %v1416
    %v1825 = vpack.c.b16 %v1423, %v1417
    %v1826 = vpack.c.b16 %v1424, %v1418
    %v1827 = vpack.c.b16 %v1425, %v1419
    %v1828 = vpack.c.b16 %v1426, %v1420
    %v1829 = vpack.c.b16 %v1433, %v1427
    %v1830 = vpack.c.b16 %v1434, %v1428
    %v1831 = vpack.c.b16 %v1435, %v1429
    %v1832 = vpack.c.b16 %v1436, %v1430
    %v1833 = vpack.c.b16 %v1437, %v1431
    %v1834 = vpack.c.b16 %v1438, %v1432
    %v1835 = vpack.c.b16 %v1445, %v1439
    %v1836 = vpack.c.b16 %v1446, %v1440
    %v1837 = vpack.c.b16 %v1447, %v1441
    %v1838 = vpack.c.b16 %v1448, %v1442
    %v1839 = vpack.c.b16 %v1449, %v1443
    %v1840 = vpack.c.b16 %v1450, %v1444
    %v1841 = vpack.c.b16 %v1457, %v1451
    %v1842 = vpack.c.b16 %v1458, %v1452
    %v1843 = vpack.c.b16 %v1459, %v1453
    %v1844 = vpack.c.b16 %v1460, %v1454
    %v1845 = vpack.c.b16 %v1461, %v1455
    %v1846 = vpack.c.b16 %v1462, %v1456
    %v1847 = vpack.c.b16 %v1469, %v1463
    %v1848 = vpack.c.b16 %v1470, %v1464
    %v1849 = vpack.c.b16 %v1471, %v1465
    %v1850 = vpack.c.b16 %v1472, %v1466
    %v1851 = vpack.c.b16 %v1473, %v1467
    %v1852 = vpack.c.b16 %v1474, %v1468
    %v1853 = vpack.c.b16 %v1481, %v1475
    %v1854 = vpack.c.b16 %v1482, %v1476
    %v1855 = vpack.c.b16 %v1483, %v1477
    %v1856 = vpack.c.b16 %v1484, %v1478
    %v1857 = vpack.c.b16 %v1485, %v1479
    %v1858 = vpack.c.b16 %v1486, %v1480
    %v1859 = vpack.c.b16 %v1493, %v1487
    %v1860 = vpack.c.b16 %v1494, %v1488
    %v1861 = vpack.c.b16 %v1495, %v1489
    %v1862 = vpack.c.b16 %v1496, %v1490
    %v1863 = vpack.c.b16 %v1497, %v1491
    %v1864 = vpack.c.b16 %v1498, %v1492
    %v1865 = vpack.c.b16 %v1505, %v1499
    %v1866 = vpack.c.b16 %v1506, %v1500
    %v1867 = vpack.c.b16 %v1507, %v1501
    %v1868 = vpack.c.b16 %v1508, %v1502
    %v1869 = vpack.c.b16 %v1509, %v1503
    %v1870 = vpack.c.b16 %v1510, %v1504
    %v1871 = vpack.c.b16 %v1517, %v1511
    %v1872 = vpack.c.b16 %v1518, %v1512
    %v1873 = vpack.c.b16 %v1519, %v1513
    %v1874 = vpack.c.b16 %v1520, %v1514
    %v1875 = vpack.c.b16 %v1521, %v1515
    %v1876 = vpack.c.b16 %v1522, %v1516
    %v1877 = vpack.c.b16 %v1529, %v1523
    %v1878 = vpack.c.b16 %v1530, %v1524
    %v1879 = vpack.c.b16 %v1531, %v1525
    %v1880 = vpack.c.b16 %v1532, %v1526
    %v1881 = vpack.c.b16 %v1533, %v1527
    %v1882 = vpack.c.b16 %v1534, %v1528
    %v1883 = vpack.c.b16 %v1541, %v1535
    %v1884 = vpack.c.b16 %v1542, %v1536
    %v1885 = vpack.c.b16 %v1543, %v1537
    %v1886 = vpack.c.b16 %v1544, %v1538
    %v1887 = vpack.c.b16 %v1545, %v1539
    %v1888 = vpack.c.b16 %v1546, %v1540
    %v1889 = vpack.c.b16 %v1553, %v1547
    %v1890 = vpack.c.b16 %v1554, %v1548
    %v1891 = vpack.c.b16 %v1555, %v1549
    %v1892 = vpack.c.b16 %v1556, %v1550
    %v1893 = vpack.c.b16 %v1557, %v1551
    %v1894 = vpack.c.b16 %v1558, %v1552
    %v1895 = vpack.c.b16 %v1565, %v1559
    %v1896 = vpack.c.b16 %v1566, %v1560
    %v1897 = vpack.c.b16 %v1567, %v1561
    %v1898 = vpack.c.b16 %v1568, %v1562
    %v1899 = vpack.c.b16 %v1569, %v1563
    %v1900 = vpack.c.b16 %v1570, %v1564
    %v1901 = vpack.c.b16 %v1577, %v1571
    %v1902 = vpack.c.b16 %v1578, %v1572
    %v1903 = vpack.c.b16 %v1579, %v1573
    %v1904 = vpack.c.b16 %v1580, %v1574
    %v1905 = vpack.c.b16 %v1581, %v1575
    %v1906 = vpack.c.b16 %v1582, %v1576
    %v1907 = vpack.c.b16 %v1589, %v1583
    %v1908 = vpack.c.b16 %v1590, %v1584
    %v1909 = vpack.c.b16 %v1591, %v1585
    %v1910 = vpack.c.b16 %v1592, %v1586
    %v1911 = vpack.c.b16 %v1593, %v1587
    %v1912 = vpack.c.b16 %v1594, %v1588
    %v1913 = vpack.c.b16 %v1601, %v1595
    %v1914 = vpack.c.b16 %v1602, %v1596
    %v1915 = vpack.c.b16 %v1603, %v1597
    %v1916 = vpack.c.b16 %v1604, %v1598
    %v1917 = vpack.c.b16 %v1605, %v1599
    %v1918 = vpack.c.b16 %v1606, %v1600
    %v1919 = vpack.c.b16 %v1613, %v1607
    %v1920 = vpack.c.b16 %v1614, %v1608
    %v1921 = vpack.c.b16 %v1615, %v1609
    %v1922 = vpack.c.b16 %v1616, %v1610
    %v1923 = vpack.c.b16 %v1617, %v1611
    %v1924 = vpack.c.b16 %v1618, %v1612
    %v1925 = vpack.c.b16 %v1625, %v1619
    %v1926 = vpack.c.b16 %v1626, %v1620
    %v1927 = vpack.c.b16 %v1627, %v1621
    %v1928 = vpack.c.b16 %v1628, %v1622
    %v1929 = vpack.c.b16 %v1629, %v1623
    %v1930 = vpack.c.b16 %v1630, %v1624
    %v1931 = vpack.c.b16 %v1637, %v1631
    %v1932 = vpack.c.b16 %v1638, %v1632
    %v1933 = vpack.c.b16 %v1639, %v1633
    %v1934 = vpack.c.b16 %v1640, %v1634
    %v1935 = vpack.c.b16 %v1641, %v1635
    %v1936 = vpack.c.b16 %v1642, %v1636
    %v1937 = vpack.c.b16 %v1649, %v1643
    %v1938 = vpack.c.b16 %v1650, %v1644
    %v1939 = vpack.c.b16 %v1651, %v1645
    %v1940 = vpack.c.b16 %v1652, %v1646
    %v1941 = vpack.c.b16 %v1653, %v1647
    %v1942 = vpack.c.b16 %v1654, %v1648
    %2231 = vmatprep.subr.bf16.mxu0 %v1698
    %2232 = vmatpush1.bf16.msra.mxu0 %v1697
    %2233 = vmatprep.subr.bf16.mxu0 %v1692
    %2234 = vmatpush1.bf16.msra.mxu0 %v1691
    %2235 = vmatprep.subr.bf16.mxu0 %v1686
    %2236 = vmatpush1.bf16.msra.mxu0 %v1685
    %2237 = vmatprep.subr.bf16.mxu0 %v1680
    %2238 = vmatpush1.bf16.msra.mxu0 %v1679
    %2239 = vmatprep.subr.bf16.mxu0 %v1674
    %2240 = vmatpush1.bf16.msra.mxu0 %v1673
    %2241 = vmatprep.subr.bf16.mxu0 %v1668
    %2242 = vmatpush1.bf16.msra.mxu0 %v1667
    %2243 = vmatprep.subr.bf16.mxu0 %v1662
    %2244 = vmatpush1.bf16.msra.mxu0 %v1661
    %2245 = vmatprep.subr.bf16.mxu0 %v1656
    %2246 = vmatpush1.bf16.msra.mxu0 %v1655
    %2247 = vmatprep.subr.bf16.mxu0 %v1746
    %2248 = vmatpush2.bf16.msra.mxu0 %v1745
    %2249 = vmatprep.subr.bf16.mxu0 %v1740
    %2250 = vmatpush2.bf16.msra.mxu0 %v1739
    %2251 = vmatprep.subr.bf16.mxu0 %v1734
    %2252 = vmatpush2.bf16.msra.mxu0 %v1733
    %2253 = vmatprep.subr.bf16.mxu0 %v1728
    %2254 = vmatpush2.bf16.msra.mxu0 %v1727
    %2255 = vmatprep.subr.bf16.mxu0 %v1722
    %2256 = vmatpush2.bf16.msra.mxu0 %v1721
    %2257 = vmatprep.subr.bf16.mxu0 %v1716
    %2258 = vmatpush2.bf16.msra.mxu0 %v1715
    %2259 = vmatprep.subr.bf16.mxu0 %v1710
    %2260 = vmatpush2.bf16.msra.mxu0 %v1709
    %2261 = vmatprep.subr.bf16.mxu0 %v1704
    %2262 = vmatpush2.bf16.msra.mxu0 %v1703
    %2263 = vmatprep.mubr.bf16.mxu0 %v466
    %2264 = vmatmul.mubr.bf16.gmra.mxu0 %v465
    %v2265 = vpop.f32.mrf.mxu0
    %v2266 = vadd.f32 %v764, %v2265
    %v2267 = vpop.f32.mrf.mxu0
    %v2268 = vadd.f32 %v768, %v2267
    %v2269 = vpop.f32.mrf.mxu0
    %v2270 = vpop.f32.mrf.mxu0
    %2271 = vdwg.mxu0
    %2272 = vmatprep.subr.bf16.mxu0 %v1794
    %2273 = vmatpush1.bf16.msra.mxu0 %v1793
    %2274 = vmatprep.subr.bf16.mxu0 %v1788
    %2275 = vmatpush1.bf16.msra.mxu0 %v1787
    %2276 = vmatprep.subr.bf16.mxu0 %v1782
    %2277 = vmatpush1.bf16.msra.mxu0 %v1781
    %2278 = vmatprep.subr.bf16.mxu0 %v1776
    %2279 = vmatpush1.bf16.msra.mxu0 %v1775
    %2280 = vmatprep.subr.bf16.mxu0 %v1770
    %2281 = vmatpush1.bf16.msra.mxu0 %v1769
    %2282 = vmatprep.subr.bf16.mxu0 %v1764
    %2283 = vmatpush1.bf16.msra.mxu0 %v1763
    %2284 = vmatprep.subr.bf16.mxu0 %v1758
    %2285 = vmatpush1.bf16.msra.mxu0 %v1757
    %2286 = vmatprep.subr.bf16.mxu0 %v1752
    %2287 = vmatpush1.bf16.msra.mxu0 %v1751
    %2288 = vmatprep.subr.bf16.mxu0 %v1842
    %2289 = vmatpush2.bf16.msra.mxu0 %v1841
    %2290 = vmatprep.subr.bf16.mxu0 %v1836
    %2291 = vmatpush2.bf16.msra.mxu0 %v1835
    %2292 = vmatprep.subr.bf16.mxu0 %v1830
    %2293 = vmatpush2.bf16.msra.mxu0 %v1829
    %2294 = vmatprep.subr.bf16.mxu0 %v1824
    %2295 = vmatpush2.bf16.msra.mxu0 %v1823
    %2296 = vmatprep.subr.bf16.mxu0 %v1818
    %2297 = vmatpush2.bf16.msra.mxu0 %v1817
    %2298 = vmatprep.subr.bf16.mxu0 %v1812
    %2299 = vmatpush2.bf16.msra.mxu0 %v1811
    %2300 = vmatprep.subr.bf16.mxu0 %v1806
    %2301 = vmatpush2.bf16.msra.mxu0 %v1805
    %2302 = vmatprep.subr.bf16.mxu0 %v1800
    %2303 = vmatpush2.bf16.msra.mxu0 %v1799
    %2304 = vmatprep.mubr.bf16.mxu0 %v468
    %2305 = vmatmul.mubr.bf16.gmra.mxu0 %v467
    %v2306 = vpop.f32.mrf.mxu0
    %v2307 = vadd.f32 %v2266, %v2306
    %v2308 = vpop.f32.mrf.mxu0
    %v2309 = vadd.f32 %v2268, %v2308
    %v2310 = vpop.f32.mrf.mxu0
    %v2311 = vpop.f32.mrf.mxu0
    %2312 = vdwg.mxu0
    %2313 = vmatprep.subr.bf16.mxu0 %v1890
    %2314 = vmatpush1.bf16.msra.mxu0 %v1889
    %2315 = vmatprep.subr.bf16.mxu0 %v1884
    %2316 = vmatpush1.bf16.msra.mxu0 %v1883
    %2317 = vmatprep.subr.bf16.mxu0 %v1878
    %2318 = vmatpush1.bf16.msra.mxu0 %v1877
    %2319 = vmatprep.subr.bf16.mxu0 %v1872
    %2320 = vmatpush1.bf16.msra.mxu0 %v1871
    %2321 = vmatprep.subr.bf16.mxu0 %v1866
    %2322 = vmatpush1.bf16.msra.mxu0 %v1865
    %2323 = vmatprep.subr.bf16.mxu0 %v1860
    %2324 = vmatpush1.bf16.msra.mxu0 %v1859
    %2325 = vmatprep.subr.bf16.mxu0 %v1854
    %2326 = vmatpush1.bf16.msra.mxu0 %v1853
    %2327 = vmatprep.subr.bf16.mxu0 %v1848
    %2328 = vmatpush1.bf16.msra.mxu0 %v1847
    %2329 = vmatprep.subr.bf16.mxu0 %v1938
    %2330 = vmatpush2.bf16.msra.mxu0 %v1937
    %2331 = vmatprep.subr.bf16.mxu0 %v1932
    %2332 = vmatpush2.bf16.msra.mxu0 %v1931
    %2333 = vmatprep.subr.bf16.mxu0 %v1926
    %2334 = vmatpush2.bf16.msra.mxu0 %v1925
    %2335 = vmatprep.subr.bf16.mxu0 %v1920
    %2336 = vmatpush2.bf16.msra.mxu0 %v1919
    %2337 = vmatprep.subr.bf16.mxu0 %v1914
    %2338 = vmatpush2.bf16.msra.mxu0 %v1913
    %2339 = vmatprep.subr.bf16.mxu0 %v1908
    %2340 = vmatpush2.bf16.msra.mxu0 %v1907
    %2341 = vmatprep.subr.bf16.mxu0 %v1902
    %2342 = vmatpush2.bf16.msra.mxu0 %v1901
    %2343 = vmatprep.subr.bf16.mxu0 %v1896
    %2344 = vmatpush2.bf16.msra.mxu0 %v1895
    %2345 = vmatprep.mubr.bf16.mxu0 %v470
    %2346 = vmatmul.mubr.bf16.gmra.mxu0 %v469
    %v2347 = vpop.f32.mrf.mxu0
    %v2348 = vadd.f32 %v2307, %v2347
    %v2349 = vpop.f32.mrf.mxu0
    %v2350 = vadd.f32 %v2309, %v2349
    %v2351 = vpop.f32.mrf.mxu0
    %v2352 = vpop.f32.mrf.mxu0
    %2353 = vdwg.mxu0
    %2354 = vmatprep.subr.bf16.mxu0 %v1700
    %2355 = vmatpush1.bf16.msra.mxu0 %v1699
    %2356 = vmatprep.subr.bf16.mxu0 %v1694
    %2357 = vmatpush1.bf16.msra.mxu0 %v1693
    %2358 = vmatprep.subr.bf16.mxu0 %v1688
    %2359 = vmatpush1.bf16.msra.mxu0 %v1687
    %2360 = vmatprep.subr.bf16.mxu0 %v1682
    %2361 = vmatpush1.bf16.msra.mxu0 %v1681
    %2362 = vmatprep.subr.bf16.mxu0 %v1676
    %2363 = vmatpush1.bf16.msra.mxu0 %v1675
    %2364 = vmatprep.subr.bf16.mxu0 %v1670
    %2365 = vmatpush1.bf16.msra.mxu0 %v1669
    %2366 = vmatprep.subr.bf16.mxu0 %v1664
    %2367 = vmatpush1.bf16.msra.mxu0 %v1663
    %2368 = vmatprep.subr.bf16.mxu0 %v1658
    %2369 = vmatpush1.bf16.msra.mxu0 %v1657
    %2370 = vmatprep.subr.bf16.mxu0 %v1748
    %2371 = vmatpush2.bf16.msra.mxu0 %v1747
    %2372 = vmatprep.subr.bf16.mxu0 %v1742
    %2373 = vmatpush2.bf16.msra.mxu0 %v1741
    %2374 = vmatprep.subr.bf16.mxu0 %v1736
    %2375 = vmatpush2.bf16.msra.mxu0 %v1735
    %2376 = vmatprep.subr.bf16.mxu0 %v1730
    %2377 = vmatpush2.bf16.msra.mxu0 %v1729
    %2378 = vmatprep.subr.bf16.mxu0 %v1724
    %2379 = vmatpush2.bf16.msra.mxu0 %v1723
    %2380 = vmatprep.subr.bf16.mxu0 %v1718
    %2381 = vmatpush2.bf16.msra.mxu0 %v1717
    %2382 = vmatprep.subr.bf16.mxu0 %v1712
    %2383 = vmatpush2.bf16.msra.mxu0 %v1711
    %2384 = vmatprep.subr.bf16.mxu0 %v1706
    %2385 = vmatpush2.bf16.msra.mxu0 %v1705
    %2386 = vmatprep.mubr.bf16.mxu0 %v466
    %2387 = vmatmul.mubr.bf16.gmra.mxu0 %v465
    %v2388 = vpop.f32.mrf.mxu0
    %v2389 = vadd.f32 %v772, %v2388
    %v2390 = vpop.f32.mrf.mxu0
    %v2391 = vadd.f32 %v776, %v2390
    %v2392 = vpop.f32.mrf.mxu0
    %v2393 = vpop.f32.mrf.mxu0
    %2394 = vdwg.mxu0
    %2395 = vmatprep.subr.bf16.mxu0 %v1796
    %2396 = vmatpush1.bf16.msra.mxu0 %v1795
    %2397 = vmatprep.subr.bf16.mxu0 %v1790
    %2398 = vmatpush1.bf16.msra.mxu0 %v1789
    %2399 = vmatprep.subr.bf16.mxu0 %v1784
    %2400 = vmatpush1.bf16.msra.mxu0 %v1783
    %2401 = vmatprep.subr.bf16.mxu0 %v1778
    %2402 = vmatpush1.bf16.msra.mxu0 %v1777
    %2403 = vmatprep.subr.bf16.mxu0 %v1772
    %2404 = vmatpush1.bf16.msra.mxu0 %v1771
    %2405 = vmatprep.subr.bf16.mxu0 %v1766
    %2406 = vmatpush1.bf16.msra.mxu0 %v1765
    %2407 = vmatprep.subr.bf16.mxu0 %v1760
    %2408 = vmatpush1.bf16.msra.mxu0 %v1759
    %2409 = vmatprep.subr.bf16.mxu0 %v1754
    %2410 = vmatpush1.bf16.msra.mxu0 %v1753
    %2411 = vmatprep.subr.bf16.mxu0 %v1844
    %2412 = vmatpush2.bf16.msra.mxu0 %v1843
    %2413 = vmatprep.subr.bf16.mxu0 %v1838
    %2414 = vmatpush2.bf16.msra.mxu0 %v1837
    %2415 = vmatprep.subr.bf16.mxu0 %v1832
    %2416 = vmatpush2.bf16.msra.mxu0 %v1831
    %2417 = vmatprep.subr.bf16.mxu0 %v1826
    %2418 = vmatpush2.bf16.msra.mxu0 %v1825
    %2419 = vmatprep.subr.bf16.mxu0 %v1820
    %2420 = vmatpush2.bf16.msra.mxu0 %v1819
    %2421 = vmatprep.subr.bf16.mxu0 %v1814
    %2422 = vmatpush2.bf16.msra.mxu0 %v1813
    %2423 = vmatprep.subr.bf16.mxu0 %v1808
    %2424 = vmatpush2.bf16.msra.mxu0 %v1807
    %2425 = vmatprep.subr.bf16.mxu0 %v1802
    %2426 = vmatpush2.bf16.msra.mxu0 %v1801
    %2427 = vmatprep.mubr.bf16.mxu0 %v468
    %2428 = vmatmul.mubr.bf16.gmra.mxu0 %v467
    %v2429 = vpop.f32.mrf.mxu0
    %v2430 = vadd.f32 %v2389, %v2429
    %v2431 = vpop.f32.mrf.mxu0
    %v2432 = vadd.f32 %v2391, %v2431
    %v2433 = vpop.f32.mrf.mxu0
    %v2434 = vpop.f32.mrf.mxu0
    %2435 = vdwg.mxu0
    %2436 = vmatprep.subr.bf16.mxu0 %v1892
    %2437 = vmatpush1.bf16.msra.mxu0 %v1891
    %2438 = vmatprep.subr.bf16.mxu0 %v1886
    %2439 = vmatpush1.bf16.msra.mxu0 %v1885
    %2440 = vmatprep.subr.bf16.mxu0 %v1880
    %2441 = vmatpush1.bf16.msra.mxu0 %v1879
    %2442 = vmatprep.subr.bf16.mxu0 %v1874
    %2443 = vmatpush1.bf16.msra.mxu0 %v1873
    %2444 = vmatprep.subr.bf16.mxu0 %v1868
    %2445 = vmatpush1.bf16.msra.mxu0 %v1867
    %2446 = vmatprep.subr.bf16.mxu0 %v1862
    %2447 = vmatpush1.bf16.msra.mxu0 %v1861
    %2448 = vmatprep.subr.bf16.mxu0 %v1856
    %2449 = vmatpush1.bf16.msra.mxu0 %v1855
    %2450 = vmatprep.subr.bf16.mxu0 %v1850
    %2451 = vmatpush1.bf16.msra.mxu0 %v1849
    %2452 = vmatprep.subr.bf16.mxu0 %v1940
    %2453 = vmatpush2.bf16.msra.mxu0 %v1939
    %2454 = vmatprep.subr.bf16.mxu0 %v1934
    %2455 = vmatpush2.bf16.msra.mxu0 %v1933
    %2456 = vmatprep.subr.bf16.mxu0 %v1928
    %2457 = vmatpush2.bf16.msra.mxu0 %v1927
    %2458 = vmatprep.subr.bf16.mxu0 %v1922
    %2459 = vmatpush2.bf16.msra.mxu0 %v1921
    %2460 = vmatprep.subr.bf16.mxu0 %v1916
    %2461 = vmatpush2.bf16.msra.mxu0 %v1915
    %2462 = vmatprep.subr.bf16.mxu0 %v1910
    %2463 = vmatpush2.bf16.msra.mxu0 %v1909
    %2464 = vmatprep.subr.bf16.mxu0 %v1904
    %2465 = vmatpush2.bf16.msra.mxu0 %v1903
    %2466 = vmatprep.subr.bf16.mxu0 %v1898
    %2467 = vmatpush2.bf16.msra.mxu0 %v1897
    %2468 = vmatprep.mubr.bf16.mxu0 %v470
    %2469 = vmatmul.mubr.bf16.gmra.mxu0 %v469
    %v2470 = vpop.f32.mrf.mxu0
    %v2471 = vadd.f32 %v2430, %v2470
    %v2472 = vpop.f32.mrf.mxu0
    %v2473 = vadd.f32 %v2432, %v2472
    %v2474 = vpop.f32.mrf.mxu0
    %v2475 = vpop.f32.mrf.mxu0
    %2476 = vdwg.mxu0
    %2477 = vmatprep.subr.bf16.mxu0 %v1702
    %2478 = vmatpush1.bf16.msra.mxu0 %v1701
    %2479 = vmatprep.subr.bf16.mxu0 %v1696
    %2480 = vmatpush1.bf16.msra.mxu0 %v1695
    %2481 = vmatprep.subr.bf16.mxu0 %v1690
    %2482 = vmatpush1.bf16.msra.mxu0 %v1689
    %2483 = vmatprep.subr.bf16.mxu0 %v1684
    %2484 = vmatpush1.bf16.msra.mxu0 %v1683
    %2485 = vmatprep.subr.bf16.mxu0 %v1678
    %2486 = vmatpush1.bf16.msra.mxu0 %v1677
    %2487 = vmatprep.subr.bf16.mxu0 %v1672
    %2488 = vmatpush1.bf16.msra.mxu0 %v1671
    %2489 = vmatprep.subr.bf16.mxu0 %v1666
    %2490 = vmatpush1.bf16.msra.mxu0 %v1665
    %2491 = vmatprep.subr.bf16.mxu0 %v1660
    %2492 = vmatpush1.bf16.msra.mxu0 %v1659
    %2493 = vmatprep.subr.bf16.mxu0 %v1750
    %2494 = vmatpush2.bf16.msra.mxu0 %v1749
    %2495 = vmatprep.subr.bf16.mxu0 %v1744
    %2496 = vmatpush2.bf16.msra.mxu0 %v1743
    %2497 = vmatprep.subr.bf16.mxu0 %v1738
    %2498 = vmatpush2.bf16.msra.mxu0 %v1737
    %2499 = vmatprep.subr.bf16.mxu0 %v1732
    %2500 = vmatpush2.bf16.msra.mxu0 %v1731
    %2501 = vmatprep.subr.bf16.mxu0 %v1726
    %2502 = vmatpush2.bf16.msra.mxu0 %v1725
    %2503 = vmatprep.subr.bf16.mxu0 %v1720
    %2504 = vmatpush2.bf16.msra.mxu0 %v1719
    %2505 = vmatprep.subr.bf16.mxu0 %v1714
    %2506 = vmatpush2.bf16.msra.mxu0 %v1713
    %2507 = vmatprep.subr.bf16.mxu0 %v1708
    %2508 = vmatpush2.bf16.msra.mxu0 %v1707
    %2509 = vmatprep.mubr.bf16.mxu0 %v466
    %2510 = vmatmul.mubr.bf16.gmra.mxu0 %v465
    %v2511 = vpop.f32.mrf.mxu0
    %v2512 = vadd.f32 %v780, %v2511
    %v2513 = vpop.f32.mrf.mxu0
    %v2514 = vadd.f32 %v784, %v2513
    %v2515 = vpop.f32.mrf.mxu0
    %v2516 = vpop.f32.mrf.mxu0
    %2517 = vdwg.mxu0
    %2518 = vmatprep.subr.bf16.mxu0 %v1798
    %2519 = vmatpush1.bf16.msra.mxu0 %v1797
    %2520 = vmatprep.subr.bf16.mxu0 %v1792
    %2521 = vmatpush1.bf16.msra.mxu0 %v1791
    %2522 = vmatprep.subr.bf16.mxu0 %v1786
    %2523 = vmatpush1.bf16.msra.mxu0 %v1785
    %2524 = vmatprep.subr.bf16.mxu0 %v1780
    %2525 = vmatpush1.bf16.msra.mxu0 %v1779
    %2526 = vmatprep.subr.bf16.mxu0 %v1774
    %2527 = vmatpush1.bf16.msra.mxu0 %v1773
    %2528 = vmatprep.subr.bf16.mxu0 %v1768
    %2529 = vmatpush1.bf16.msra.mxu0 %v1767
    %2530 = vmatprep.subr.bf16.mxu0 %v1762
    %2531 = vmatpush1.bf16.msra.mxu0 %v1761
    %2532 = vmatprep.subr.bf16.mxu0 %v1756
    %2533 = vmatpush1.bf16.msra.mxu0 %v1755
    %2534 = vmatprep.subr.bf16.mxu0 %v1846
    %2535 = vmatpush2.bf16.msra.mxu0 %v1845
    %2536 = vmatprep.subr.bf16.mxu0 %v1840
    %2537 = vmatpush2.bf16.msra.mxu0 %v1839
    %2538 = vmatprep.subr.bf16.mxu0 %v1834
    %2539 = vmatpush2.bf16.msra.mxu0 %v1833
    %2540 = vmatprep.subr.bf16.mxu0 %v1828
    %2541 = vmatpush2.bf16.msra.mxu0 %v1827
    %2542 = vmatprep.subr.bf16.mxu0 %v1822
    %2543 = vmatpush2.bf16.msra.mxu0 %v1821
    %2544 = vmatprep.subr.bf16.mxu0 %v1816
    %2545 = vmatpush2.bf16.msra.mxu0 %v1815
    %2546 = vmatprep.subr.bf16.mxu0 %v1810
    %2547 = vmatpush2.bf16.msra.mxu0 %v1809
    %2548 = vmatprep.subr.bf16.mxu0 %v1804
    %2549 = vmatpush2.bf16.msra.mxu0 %v1803
    %2550 = vmatprep.mubr.bf16.mxu0 %v468
    %2551 = vmatmul.mubr.bf16.gmra.mxu0 %v467
    %v2552 = vpop.f32.mrf.mxu0
    %v2553 = vadd.f32 %v2512, %v2552
    %v2554 = vpop.f32.mrf.mxu0
    %v2555 = vadd.f32 %v2514, %v2554
    %v2556 = vpop.f32.mrf.mxu0
    %v2557 = vpop.f32.mrf.mxu0
    %2558 = vdwg.mxu0
    %2559 = vmatprep.subr.bf16.mxu0 %v1894
    %2560 = vmatpush1.bf16.msra.mxu0 %v1893
    %2561 = vmatprep.subr.bf16.mxu0 %v1888
    %2562 = vmatpush1.bf16.msra.mxu0 %v1887
    %2563 = vmatprep.subr.bf16.mxu0 %v1882
    %2564 = vmatpush1.bf16.msra.mxu0 %v1881
    %2565 = vmatprep.subr.bf16.mxu0 %v1876
    %2566 = vmatpush1.bf16.msra.mxu0 %v1875
    %2567 = vmatprep.subr.bf16.mxu0 %v1870
    %2568 = vmatpush1.bf16.msra.mxu0 %v1869
    %2569 = vmatprep.subr.bf16.mxu0 %v1864
    %2570 = vmatpush1.bf16.msra.mxu0 %v1863
    %2571 = vmatprep.subr.bf16.mxu0 %v1858
    %2572 = vmatpush1.bf16.msra.mxu0 %v1857
    %2573 = vmatprep.subr.bf16.mxu0 %v1852
    %2574 = vmatpush1.bf16.msra.mxu0 %v1851
    %2575 = vmatprep.subr.bf16.mxu0 %v1942
    %2576 = vmatpush2.bf16.msra.mxu0 %v1941
    %2577 = vmatprep.subr.bf16.mxu0 %v1936
    %2578 = vmatpush2.bf16.msra.mxu0 %v1935
    %2579 = vmatprep.subr.bf16.mxu0 %v1930
    %2580 = vmatpush2.bf16.msra.mxu0 %v1929
    %2581 = vmatprep.subr.bf16.mxu0 %v1924
    %2582 = vmatpush2.bf16.msra.mxu0 %v1923
    %2583 = vmatprep.subr.bf16.mxu0 %v1918
    %2584 = vmatpush2.bf16.msra.mxu0 %v1917
    %2585 = vmatprep.subr.bf16.mxu0 %v1912
    %2586 = vmatpush2.bf16.msra.mxu0 %v1911
    %2587 = vmatprep.subr.bf16.mxu0 %v1906
    %2588 = vmatpush2.bf16.msra.mxu0 %v1905
    %2589 = vmatprep.subr.bf16.mxu0 %v1900
    %2590 = vmatpush2.bf16.msra.mxu0 %v1899
    %2591 = vmatprep.mubr.bf16.mxu0 %v470
    %2592 = vmatmul.mubr.bf16.gmra.mxu0 %v469
    %v2593 = vpop.f32.mrf.mxu0
    %v2594 = vadd.f32 %v2553, %v2593
    %v2595 = vpop.f32.mrf.mxu0
    %v2596 = vadd.f32 %v2555, %v2595
    %v2597 = vpop.f32.mrf.mxu0
    %v2598 = vpop.f32.mrf.mxu0
    %2599 = vdwg.mxu0
    %v2600 = vmax.f32 %v2348, 0.0
    %v2601 = vmax.f32 %v2350, 0.0
    %v2602 = vmax.f32 %v2471, 0.0
    %v2603 = vmax.f32 %v2473, 0.0
    %v2604 = vmax.f32 %v2594, 0.0
    %v2605 = vmax.f32 %v2596, 0.0
    %v2606 = vpack.c.bf16 %v2600, %v2600
    %v2607 = vpack.c.bf16 %v2601, %v2601
    %v2608 = vpack.c.bf16 %v2602, %v2602
    %v2609 = vpack.c.bf16 %v2603, %v2603
    %v2610 = vpack.c.bf16 %v2604, %v2604
    %v2611 = vpack.c.bf16 %v2605, %v2605
    %v2612 = vld [vmem:[%s7] sm:$0xf]
    %v2613 = vld [vmem:[%s7 + $0x4] sm:$0xf]
    %v2614 = vld [vmem:[%s7 + $0x8] sm:$0xf]
    %v2615 = vld [vmem:[%s7 + $0xc] sm:$0xf]
    %v2616 = vld [vmem:[%s7 + $0x10] sm:$0xf]
    %v2617 = vld [vmem:[%s7 + $0x14] sm:$0xf]
    %v2618 = vld [vmem:[%s7 + $0x18] sm:$0xf]
    %v2619 = vld [vmem:[%s7 + $0x1c] sm:$0xf]
    %v2620 = vld [vmem:[%s7 + $0x20] sm:$0xf]
    %v2621 = vld [vmem:[%s7 + $0x24] sm:$0xf]
    %v2622 = vld [vmem:[%s7 + $0x28] sm:$0xf]
    %v2623 = vld [vmem:[%s7 + $0x2c] sm:$0xf]
    %v2624 = vld [vmem:[%s7 + $0x30] sm:$0xf]
    %v2625 = vld [vmem:[%s7 + $0x34] sm:$0xf]
    %v2626 = vld [vmem:[%s7 + $0x38] sm:$0xf]
    %v2627 = vld [vmem:[%s7 + $0x3c] sm:$0xf]
    %v2628 = vld [vmem:[%s7 + $0x40] sm:$0xf]
    %v2629 = vld [vmem:[%s7 + $0x44] sm:$0xf]
    %v2630 = vld [vmem:[%s7 + $0x48] sm:$0xf]
    %v2631 = vld [vmem:[%s7 + $0x4c] sm:$0xf]
    %v2632 = vld [vmem:[%s7 + $0x50] sm:$0xf]
    %v2633 = vld [vmem:[%s7 + $0x54] sm:$0xf]
    %v2634 = vld [vmem:[%s7 + $0x58] sm:$0xf]
    %v2635 = vld [vmem:[%s7 + $0x5c] sm:$0xf]
    %v2636 = vld [vmem:[%s7 + $0x60] sm:$0xf]
    %v2637 = vld [vmem:[%s7 + $0x64] sm:$0xf]
    %v2638 = vld [vmem:[%s7 + $0x68] sm:$0xf]
    %v2639 = vld [vmem:[%s7 + $0x6c] sm:$0xf]
    %v2640 = vld [vmem:[%s7 + $0x70] sm:$0xf]
    %v2641 = vld [vmem:[%s7 + $0x74] sm:$0xf]
    %v2642 = vld [vmem:[%s7 + $0x78] sm:$0xf]
    %v2643 = vld [vmem:[%s7 + $0x7c] sm:$0xf]
    %v2644 = vld [vmem:[%s7 + $0x80] sm:$0xf]
    %v2645 = vld [vmem:[%s7 + $0x84] sm:$0xf]
    %v2646 = vld [vmem:[%s7 + $0x88] sm:$0xf]
    %v2647 = vld [vmem:[%s7 + $0x8c] sm:$0xf]
    %v2648 = vld [vmem:[%s7 + $0x90] sm:$0xf]
    %v2649 = vld [vmem:[%s7 + $0x94] sm:$0xf]
    %v2650 = vld [vmem:[%s7 + $0x98] sm:$0xf]
    %v2651 = vld [vmem:[%s7 + $0x9c] sm:$0xf]
    %v2652 = vld [vmem:[%s7 + $0xa0] sm:$0xf]
    %v2653 = vld [vmem:[%s7 + $0xa4] sm:$0xf]
    %v2654 = vld [vmem:[%s7 + $0xa8] sm:$0xf]
    %v2655 = vld [vmem:[%s7 + $0xac] sm:$0xf]
    %v2656 = vld [vmem:[%s7 + $0xb0] sm:$0xf]
    %v2657 = vld [vmem:[%s7 + $0xb4] sm:$0xf]
    %v2658 = vld [vmem:[%s7 + $0xb8] sm:$0xf]
    %v2659 = vld [vmem:[%s7 + $0xbc] sm:$0xf]
    %v2660 = vld [vmem:[%s7 + $0xc0] sm:$0xf]
    %v2661 = vld [vmem:[%s7 + $0xc4] sm:$0xf]
    %v2662 = vld [vmem:[%s7 + $0xc8] sm:$0xf]
    %v2663 = vld [vmem:[%s7 + $0xcc] sm:$0xf]
    %v2664 = vld [vmem:[%s7 + $0xd0] sm:$0xf]
    %v2665 = vld [vmem:[%s7 + $0xd4] sm:$0xf]
    %v2666 = vld [vmem:[%s7 + $0xd8] sm:$0xf]
    %v2667 = vld [vmem:[%s7 + $0xdc] sm:$0xf]
    %v2668 = vld [vmem:[%s7 + $0xe0] sm:$0xf]
    %v2669 = vld [vmem:[%s7 + $0xe4] sm:$0xf]
    %v2670 = vld [vmem:[%s7 + $0xe8] sm:$0xf]
    %v2671 = vld [vmem:[%s7 + $0xec] sm:$0xf]
    %v2672 = vld [vmem:[%s7 + $0xf0] sm:$0xf]
    %v2673 = vld [vmem:[%s7 + $0xf4] sm:$0xf]
    %v2674 = vld [vmem:[%s7 + $0xf8] sm:$0xf]
    %v2675 = vld [vmem:[%s7 + $0xfc] sm:$0xf]
    %v2676 = vld [vmem:[%s7 + $0x100] sm:$0xf]
    %v2677 = vld [vmem:[%s7 + $0x104] sm:$0xf]
    %v2678 = vld [vmem:[%s7 + $0x108] sm:$0xf]
    %v2679 = vld [vmem:[%s7 + $0x10c] sm:$0xf]
    %v2680 = vld [vmem:[%s7 + $0x110] sm:$0xf]
    %v2681 = vld [vmem:[%s7 + $0x114] sm:$0xf]
    %v2682 = vld [vmem:[%s7 + $0x118] sm:$0xf]
    %v2683 = vld [vmem:[%s7 + $0x11c] sm:$0xf]
    %v2684 = vld [vmem:[%s7 + $0x120] sm:$0xf]
    %v2685 = vld [vmem:[%s7 + $0x124] sm:$0xf]
    %v2686 = vld [vmem:[%s7 + $0x128] sm:$0xf]
    %v2687 = vld [vmem:[%s7 + $0x12c] sm:$0xf]
    %v2688 = vld [vmem:[%s7 + $0x130] sm:$0xf]
    %v2689 = vld [vmem:[%s7 + $0x134] sm:$0xf]
    %v2690 = vld [vmem:[%s7 + $0x138] sm:$0xf]
    %v2691 = vld [vmem:[%s7 + $0x13c] sm:$0xf]
    %v2692 = vld [vmem:[%s7 + $0x140] sm:$0xf]
    %v2693 = vld [vmem:[%s7 + $0x144] sm:$0xf]
    %v2694 = vld [vmem:[%s7 + $0x148] sm:$0xf]
    %v2695 = vld [vmem:[%s7 + $0x14c] sm:$0xf]
    %v2696 = vld [vmem:[%s7 + $0x150] sm:$0xf]
    %v2697 = vld [vmem:[%s7 + $0x154] sm:$0xf]
    %v2698 = vld [vmem:[%s7 + $0x158] sm:$0xf]
    %v2699 = vld [vmem:[%s7 + $0x15c] sm:$0xf]
    %v2700 = vld [vmem:[%s7 + $0x160] sm:$0xf]
    %v2701 = vld [vmem:[%s7 + $0x164] sm:$0xf]
    %v2702 = vld [vmem:[%s7 + $0x168] sm:$0xf]
    %v2703 = vld [vmem:[%s7 + $0x16c] sm:$0xf]
    %v2704 = vld [vmem:[%s7 + $0x170] sm:$0xf]
    %v2705 = vld [vmem:[%s7 + $0x174] sm:$0xf]
    %v2706 = vld [vmem:[%s7 + $0x178] sm:$0xf]
    %v2707 = vld [vmem:[%s7 + $0x17c] sm:$0xf]
    %v2708 = vld [vmem:[#allocation14] sm:$0x1]
    %v2710 = vlaneseq
    %v2711 = vshrl.u32 %v2710, 7
    %v2712 = vsub.s32 0, %v2711
    %v2713 = vrot.slane %v2708, %v2712
    %v2811 = vunpack.c.l.b16 %v2612
    %v2812 = vunpack.c.l.b16 %v2613
    %v2813 = vunpack.c.l.b16 %v2614
    %v2814 = vunpack.c.l.b16 %v2615
    %v2815 = vunpack.c.l.b16 %v2616
    %v2816 = vunpack.c.l.b16 %v2617
    %v2817 = vunpack.c.l.b16 %v2618
    %v2818 = vunpack.c.l.b16 %v2619
    %v2819 = vunpack.c.l.b16 %v2620
    %v2820 = vunpack.c.l.b16 %v2621
    %v2821 = vunpack.c.l.b16 %v2622
    %v2822 = vunpack.c.l.b16 %v2623
    %v2823 = vunpack.c.l.b16 %v2624
    %v2824 = vunpack.c.l.b16 %v2625
    %v2825 = vunpack.c.l.b16 %v2626
    %v2826 = vunpack.c.l.b16 %v2627
    %v2827 = vunpack.c.l.b16 %v2628
    %v2828 = vunpack.c.l.b16 %v2629
    %v2829 = vunpack.c.l.b16 %v2630
    %v2830 = vunpack.c.l.b16 %v2631
    %v2831 = vunpack.c.l.b16 %v2632
    %v2832 = vunpack.c.l.b16 %v2633
    %v2833 = vunpack.c.l.b16 %v2634
    %v2834 = vunpack.c.l.b16 %v2635
    %v2835 = vunpack.c.l.b16 %v2636
    %v2836 = vunpack.c.l.b16 %v2637
    %v2837 = vunpack.c.l.b16 %v2638
    %v2838 = vunpack.c.l.b16 %v2639
    %v2839 = vunpack.c.l.b16 %v2640
    %v2840 = vunpack.c.l.b16 %v2641
    %v2841 = vunpack.c.l.b16 %v2642
    %v2842 = vunpack.c.l.b16 %v2643
    %v2843 = vunpack.c.l.b16 %v2644
    %v2844 = vunpack.c.l.b16 %v2645
    %v2845 = vunpack.c.l.b16 %v2646
    %v2846 = vunpack.c.l.b16 %v2647
    %v2847 = vunpack.c.l.b16 %v2648
    %v2848 = vunpack.c.l.b16 %v2649
    %v2849 = vunpack.c.l.b16 %v2650
    %v2850 = vunpack.c.l.b16 %v2651
    %v2851 = vunpack.c.l.b16 %v2652
    %v2852 = vunpack.c.l.b16 %v2653
    %v2853 = vunpack.c.l.b16 %v2654
    %v2854 = vunpack.c.l.b16 %v2655
    %v2855 = vunpack.c.l.b16 %v2656
    %v2856 = vunpack.c.l.b16 %v2657
    %v2857 = vunpack.c.l.b16 %v2658
    %v2858 = vunpack.c.l.b16 %v2659
    %v2859 = vunpack.c.l.b16 %v2660
    %v2860 = vunpack.c.l.b16 %v2661
    %v2861 = vunpack.c.l.b16 %v2662
    %v2862 = vunpack.c.l.b16 %v2663
    %v2863 = vunpack.c.l.b16 %v2664
    %v2864 = vunpack.c.l.b16 %v2665
    %v2865 = vunpack.c.l.b16 %v2666
    %v2866 = vunpack.c.l.b16 %v2667
    %v2867 = vunpack.c.l.b16 %v2668
    %v2868 = vunpack.c.l.b16 %v2669
    %v2869 = vunpack.c.l.b16 %v2670
    %v2870 = vunpack.c.l.b16 %v2671
    %v2871 = vunpack.c.l.b16 %v2672
    %v2872 = vunpack.c.l.b16 %v2673
    %v2873 = vunpack.c.l.b16 %v2674
    %v2874 = vunpack.c.l.b16 %v2675
    %v2875 = vunpack.c.l.b16 %v2676
    %v2876 = vunpack.c.l.b16 %v2677
    %v2877 = vunpack.c.l.b16 %v2678
    %v2878 = vunpack.c.l.b16 %v2679
    %v2879 = vunpack.c.l.b16 %v2680
    %v2880 = vunpack.c.l.b16 %v2681
    %v2881 = vunpack.c.l.b16 %v2682
    %v2882 = vunpack.c.l.b16 %v2683
    %v2883 = vunpack.c.l.b16 %v2684
    %v2884 = vunpack.c.l.b16 %v2685
    %v2885 = vunpack.c.l.b16 %v2686
    %v2886 = vunpack.c.l.b16 %v2687
    %v2887 = vunpack.c.l.b16 %v2688
    %v2888 = vunpack.c.l.b16 %v2689
    %v2889 = vunpack.c.l.b16 %v2690
    %v2890 = vunpack.c.l.b16 %v2691
    %v2891 = vunpack.c.l.b16 %v2692
    %v2892 = vunpack.c.l.b16 %v2693
    %v2893 = vunpack.c.l.b16 %v2694
    %v2894 = vunpack.c.l.b16 %v2695
    %v2895 = vunpack.c.l.b16 %v2696
    %v2896 = vunpack.c.l.b16 %v2697
    %v2897 = vunpack.c.l.b16 %v2698
    %v2898 = vunpack.c.l.b16 %v2699
    %v2899 = vunpack.c.l.b16 %v2700
    %v2900 = vunpack.c.l.b16 %v2701
    %v2901 = vunpack.c.l.b16 %v2702
    %v2902 = vunpack.c.l.b16 %v2703
    %v2903 = vunpack.c.l.b16 %v2704
    %v2904 = vunpack.c.l.b16 %v2705
    %v2905 = vunpack.c.l.b16 %v2706
    %v2906 = vunpack.c.l.b16 %v2707
    %v2907 = vpack.c.b16 %v2812, %v2811
    %v2908 = vpack.c.b16 %v2814, %v2813
    %v2909 = vpack.c.b16 %v2816, %v2815
    %v2910 = vpack.c.b16 %v2818, %v2817
    %v2911 = vpack.c.b16 %v2820, %v2819
    %v2912 = vpack.c.b16 %v2822, %v2821
    %v2913 = vpack.c.b16 %v2824, %v2823
    %v2914 = vpack.c.b16 %v2826, %v2825
    %v2915 = vpack.c.b16 %v2828, %v2827
    %v2916 = vpack.c.b16 %v2830, %v2829
    %v2917 = vpack.c.b16 %v2832, %v2831
    %v2918 = vpack.c.b16 %v2834, %v2833
    %v2919 = vpack.c.b16 %v2836, %v2835
    %v2920 = vpack.c.b16 %v2838, %v2837
    %v2921 = vpack.c.b16 %v2840, %v2839
    %v2922 = vpack.c.b16 %v2842, %v2841
    %v2923 = vpack.c.b16 %v2844, %v2843
    %v2924 = vpack.c.b16 %v2846, %v2845
    %v2925 = vpack.c.b16 %v2848, %v2847
    %v2926 = vpack.c.b16 %v2850, %v2849
    %v2927 = vpack.c.b16 %v2852, %v2851
    %v2928 = vpack.c.b16 %v2854, %v2853
    %v2929 = vpack.c.b16 %v2856, %v2855
    %v2930 = vpack.c.b16 %v2858, %v2857
    %v2931 = vpack.c.b16 %v2860, %v2859
    %v2932 = vpack.c.b16 %v2862, %v2861
    %v2933 = vpack.c.b16 %v2864, %v2863
    %v2934 = vpack.c.b16 %v2866, %v2865
    %v2935 = vpack.c.b16 %v2868, %v2867
    %v2936 = vpack.c.b16 %v2870, %v2869
    %v2937 = vpack.c.b16 %v2872, %v2871
    %v2938 = vpack.c.b16 %v2874, %v2873
    %v2939 = vpack.c.b16 %v2876, %v2875
    %v2940 = vpack.c.b16 %v2878, %v2877
    %v2941 = vpack.c.b16 %v2880, %v2879
    %v2942 = vpack.c.b16 %v2882, %v2881
    %v2943 = vpack.c.b16 %v2884, %v2883
    %v2944 = vpack.c.b16 %v2886, %v2885
    %v2945 = vpack.c.b16 %v2888, %v2887
    %v2946 = vpack.c.b16 %v2890, %v2889
    %v2947 = vpack.c.b16 %v2892, %v2891
    %v2948 = vpack.c.b16 %v2894, %v2893
    %v2949 = vpack.c.b16 %v2896, %v2895
    %v2950 = vpack.c.b16 %v2898, %v2897
    %v2951 = vpack.c.b16 %v2900, %v2899
    %v2952 = vpack.c.b16 %v2902, %v2901
    %v2953 = vpack.c.b16 %v2904, %v2903
    %v2954 = vpack.c.b16 %v2906, %v2905
    %3003 = vmatprep.subr.bf16.mxu0 0
    %3004 = vmatpush1.bf16.msra.mxu0 %v2914
    %3005 = vmatprep.subr.bf16.mxu0 0
    %3006 = vmatpush1.bf16.msra.mxu0 %v2913
    %3007 = vmatprep.subr.bf16.mxu0 0
    %3008 = vmatpush1.bf16.msra.mxu0 %v2912
    %3009 = vmatprep.subr.bf16.mxu0 0
    %3010 = vmatpush1.bf16.msra.mxu0 %v2911
    %3011 = vmatprep.subr.bf16.mxu0 0
    %3012 = vmatpush1.bf16.msra.mxu0 %v2910
    %3013 = vmatprep.subr.bf16.mxu0 0
    %3014 = vmatpush1.bf16.msra.mxu0 %v2909
    %3015 = vmatprep.subr.bf16.mxu0 0
    %3016 = vmatpush1.bf16.msra.mxu0 %v2908
    %3017 = vmatprep.subr.bf16.mxu0 0
    %3018 = vmatpush1.bf16.msra.mxu0 %v2907
    %3019 = vmatprep.subr.bf16.mxu0 0
    %3020 = vmatpush2.bf16.msra.mxu0 %v2922
    %3021 = vmatprep.subr.bf16.mxu0 0
    %3022 = vmatpush2.bf16.msra.mxu0 %v2921
    %3023 = vmatprep.subr.bf16.mxu0 0
    %3024 = vmatpush2.bf16.msra.mxu0 %v2920
    %3025 = vmatprep.subr.bf16.mxu0 0
    %3026 = vmatpush2.bf16.msra.mxu0 %v2919
    %3027 = vmatprep.subr.bf16.mxu0 0
    %3028 = vmatpush2.bf16.msra.mxu0 %v2918
    %3029 = vmatprep.subr.bf16.mxu0 0
    %3030 = vmatpush2.bf16.msra.mxu0 %v2917
    %3031 = vmatprep.subr.bf16.mxu0 0
    %3032 = vmatpush2.bf16.msra.mxu0 %v2916
    %3033 = vmatprep.subr.bf16.mxu0 0
    %3034 = vmatpush2.bf16.msra.mxu0 %v2915
    %3035 = vmatprep.mubr.bf16.mxu0 %v2607
    %3036 = vmatmul.mubr.bf16.gmra.mxu0 %v2606
    %v3037 = vpop.f32.mrf.mxu0
    %v3038 = vadd.f32 %v2713, %v3037
    %v3039 = vpop.f32.mrf.mxu0
    %v3040 = vpop.f32.mrf.mxu0
    %v3041 = vpop.f32.mrf.mxu0
    %3042 = vdwg.mxu0
    %3043 = vmatprep.subr.bf16.mxu0 0
    %3044 = vmatpush1.bf16.msra.mxu0 %v2930
    %3045 = vmatprep.subr.bf16.mxu0 0
    %3046 = vmatpush1.bf16.msra.mxu0 %v2929
    %3047 = vmatprep.subr.bf16.mxu0 0
    %3048 = vmatpush1.bf16.msra.mxu0 %v2928
    %3049 = vmatprep.subr.bf16.mxu0 0
    %3050 = vmatpush1.bf16.msra.mxu0 %v2927
    %3051 = vmatprep.subr.bf16.mxu0 0
    %3052 = vmatpush1.bf16.msra.mxu0 %v2926
    %3053 = vmatprep.subr.bf16.mxu0 0
    %3054 = vmatpush1.bf16.msra.mxu0 %v2925
    %3055 = vmatprep.subr.bf16.mxu0 0
    %3056 = vmatpush1.bf16.msra.mxu0 %v2924
    %3057 = vmatprep.subr.bf16.mxu0 0
    %3058 = vmatpush1.bf16.msra.mxu0 %v2923
    %3059 = vmatprep.subr.bf16.mxu0 0
    %3060 = vmatpush2.bf16.msra.mxu0 %v2938
    %3061 = vmatprep.subr.bf16.mxu0 0
    %3062 = vmatpush2.bf16.msra.mxu0 %v2937
    %3063 = vmatprep.subr.bf16.mxu0 0
    %3064 = vmatpush2.bf16.msra.mxu0 %v2936
    %3065 = vmatprep.subr.bf16.mxu0 0
    %3066 = vmatpush2.bf16.msra.mxu0 %v2935
    %3067 = vmatprep.subr.bf16.mxu0 0
    %3068 = vmatpush2.bf16.msra.mxu0 %v2934
    %3069 = vmatprep.subr.bf16.mxu0 0
    %3070 = vmatpush2.bf16.msra.mxu0 %v2933
    %3071 = vmatprep.subr.bf16.mxu0 0
    %3072 = vmatpush2.bf16.msra.mxu0 %v2932
    %3073 = vmatprep.subr.bf16.mxu0 0
    %3074 = vmatpush2.bf16.msra.mxu0 %v2931
    %3075 = vmatprep.mubr.bf16.mxu0 %v2609
    %3076 = vmatmul.mubr.bf16.gmra.mxu0 %v2608
    %v3077 = vpop.f32.mrf.mxu0
    %v3078 = vadd.f32 %v3038, %v3077
    %v3079 = vpop.f32.mrf.mxu0
    %v3080 = vpop.f32.mrf.mxu0
    %v3081 = vpop.f32.mrf.mxu0
    %3082 = vdwg.mxu0
    %3083 = vmatprep.subr.bf16.mxu0 0
    %3084 = vmatpush1.bf16.msra.mxu0 %v2946
    %3085 = vmatprep.subr.bf16.mxu0 0
    %3086 = vmatpush1.bf16.msra.mxu0 %v2945
    %3087 = vmatprep.subr.bf16.mxu0 0
    %3088 = vmatpush1.bf16.msra.mxu0 %v2944
    %3089 = vmatprep.subr.bf16.mxu0 0
    %3090 = vmatpush1.bf16.msra.mxu0 %v2943
    %3091 = vmatprep.subr.bf16.mxu0 0
    %3092 = vmatpush1.bf16.msra.mxu0 %v2942
    %3093 = vmatprep.subr.bf16.mxu0 0
    %3094 = vmatpush1.bf16.msra.mxu0 %v2941
    %3095 = vmatprep.subr.bf16.mxu0 0
    %3096 = vmatpush1.bf16.msra.mxu0 %v2940
    %3097 = vmatprep.subr.bf16.mxu0 0
    %3098 = vmatpush1.bf16.msra.mxu0 %v2939
    %3099 = vmatprep.subr.bf16.mxu0 0
    %3100 = vmatpush2.bf16.msra.mxu0 %v2954
    %3101 = vmatprep.subr.bf16.mxu0 0
    %3102 = vmatpush2.bf16.msra.mxu0 %v2953
    %3103 = vmatprep.subr.bf16.mxu0 0
    %3104 = vmatpush2.bf16.msra.mxu0 %v2952
    %3105 = vmatprep.subr.bf16.mxu0 0
    %3106 = vmatpush2.bf16.msra.mxu0 %v2951
    %3107 = vmatprep.subr.bf16.mxu0 0
    %3108 = vmatpush2.bf16.msra.mxu0 %v2950
    %3109 = vmatprep.subr.bf16.mxu0 0
    %3110 = vmatpush2.bf16.msra.mxu0 %v2949
    %3111 = vmatprep.subr.bf16.mxu0 0
    %3112 = vmatpush2.bf16.msra.mxu0 %v2948
    %3113 = vmatprep.subr.bf16.mxu0 0
    %3114 = vmatpush2.bf16.msra.mxu0 %v2947
    %3115 = vmatprep.mubr.bf16.mxu0 %v2611
    %3116 = vmatmul.mubr.bf16.gmra.mxu0 %v2610
    %v3117 = vpop.f32.mrf.mxu0
    %v3118 = vadd.f32 %v3078, %v3117
    %v3119 = vpop.f32.mrf.mxu0
    %v3120 = vpop.f32.mrf.mxu0
    %v3121 = vpop.f32.mrf.mxu0
    %3122 = vdwg.mxu0
    %v3123 = vmax.f32 %v3118, -4.0
    %v3124 = vmin.f32 %v3123, 15.0
    %v3125 = vmul.f32 %v3124, 1.442695
    %v3126 = vpow.pop %v3125
    %v3127 = vld [vmem:[#allocation7] sm:$0xff]
    %3129 = vrot.lane.b32.xlu0 %v3127, 8
    %v3130 = vpop.permute.xlu0 %3129
    %v3132 = vmul.f32 %v3126, %v3130
    %3134 = vrot.lane.b32.xlu0 %v3132, 120
    %v3135 = vpop.permute.xlu0 %3134
    %v3137 = vadd.f32 %v3118, %v3135
    %v3138 = vld [vmem:[#allocation5] sm:$0xff]
    %v3139 = vpack.c.bf16 %v3138, %v3138
    %v3140 = vld [vmem:[#allocation16] sm:$0xff]
    %v3141 = vld [vmem:[#allocation16 + $0x8] sm:$0xff]
    %v3142 = vld [vmem:[#allocation16 + $0x10] sm:$0xff]
    %v3143 = vld [vmem:[#allocation16 + $0x18] sm:$0xff]
    %v3144 = vld [vmem:[#allocation16 + $0x20] sm:$0xff]
    %v3145 = vld [vmem:[#allocation16 + $0x28] sm:$0xff]
    %v3146 = vpack.c.bf16 %v3137, %v3137
    %v3147 = vld [vmem:[#allocation17] sm:$0xff]
    %v3148 = vld [vmem:[#allocation17 + $0x8] sm:$0xff]
    %v3149 = vld [vmem:[#allocation17 + $0x10] sm:$0xff]
    %v3153 = vunpack.c.l.b16 %v3147
    %v3154 = vunpack.c.h.b16 %v3147
    %v3155 = vunpack.c.l.b16 %v3148
    %v3156 = vunpack.c.h.b16 %v3148
    %v3157 = vunpack.c.l.b16 %v3149
    %v3158 = vunpack.c.h.b16 %v3149
    %v3159 = vpack.c.b16 %v3153, %v3153
    %v3160 = vpack.c.b16 %v3154, %v3154
    %v3161 = vpack.c.b16 %v3155, %v3155
    %v3162 = vpack.c.b16 %v3156, %v3156
    %v3163 = vpack.c.b16 %v3157, %v3157
    %v3164 = vpack.c.b16 %v3158, %v3158
    %vm3165 = vcmask 64512
    %v3167 = vsel %vm3165, %v3146, 0
    %vm3169 = vcmask 1043456
    %v3171 = vsel %vm3169, %v3159, 0
    %v3174 = vsel %vm3169, %v3160, 0
    %v3177 = vsel %vm3169, %v3161, 0
    %v3180 = vsel %vm3169, %v3162, 0
    %v3183 = vsel %vm3169, %v3163, 0
    %v3186 = vsel %vm3169, %v3164, 0
    %3188 = vmatprep.subr.bf16.mxu0 0
    %3189 = vmatpush1.bf16.msra.mxu0 0
    %3190 = vmatprep.subr.bf16.mxu0 0
    %3191 = vmatpush1.bf16.msra.mxu0 0
    %3192 = vmatprep.subr.bf16.mxu0 0
    %3193 = vmatpush1.bf16.msra.mxu0 0
    %3194 = vmatprep.subr.bf16.mxu0 0
    %3195 = vmatpush1.bf16.msra.mxu0 0
    %3196 = vmatprep.subr.bf16.mxu0 0
    %3197 = vmatpush1.bf16.msra.mxu0 0
    %3198 = vmatprep.subr.bf16.mxu0 0
    %3199 = vmatpush1.bf16.msra.mxu0 0
    %3200 = vmatprep.subr.bf16.mxu0 0
    %3201 = vmatpush1.bf16.msra.mxu0 0
    %3202 = vmatprep.subr.bf16.mxu0 %v3174
    %3203 = vmatpush1.bf16.msra.mxu0 %v3171
    %3204 = vmatprep.subr.bf16.mxu0 0
    %3205 = vmatpush2.bf16.msra.mxu0 0
    %3206 = vmatprep.subr.bf16.mxu0 0
    %3207 = vmatpush2.bf16.msra.mxu0 0
    %3208 = vmatprep.subr.bf16.mxu0 0
    %3209 = vmatpush2.bf16.msra.mxu0 0
    %3210 = vmatprep.subr.bf16.mxu0 0
    %3211 = vmatpush2.bf16.msra.mxu0 0
    %3212 = vmatprep.subr.bf16.mxu0 0
    %3213 = vmatpush2.bf16.msra.mxu0 0
    %3214 = vmatprep.subr.bf16.mxu0 0
    %3215 = vmatpush2.bf16.msra.mxu0 0
    %3216 = vmatprep.subr.bf16.mxu0 0
    %3217 = vmatpush2.bf16.msra.mxu0 0
    %3218 = vmatprep.subr.bf16.mxu0 0
    %3219 = vmatpush2.bf16.msra.mxu0 0
    %3220 = vmatprep.mubr.bf16.mxu0 0
    %3221 = vmatmul.mubr.bf16.gmra.mxu0 %v3167
    %v3222 = vpop.f32.mrf.mxu0
    %v3223 = vadd.f32 0.0, %v3222
    %v3224 = vpop.f32.mrf.mxu0
    %v3225 = vadd.f32 0.0, %v3224
    %v3226 = vpop.f32.mrf.mxu0
    %v3227 = vpop.f32.mrf.mxu0
    %3228 = vdwg.mxu0
    %3229 = vmatprep.subr.bf16.mxu0 0
    %3230 = vmatpush1.bf16.msra.mxu0 0
    %3231 = vmatprep.subr.bf16.mxu0 0
    %3232 = vmatpush1.bf16.msra.mxu0 0
    %3233 = vmatprep.subr.bf16.mxu0 0
    %3234 = vmatpush1.bf16.msra.mxu0 0
    %3235 = vmatprep.subr.bf16.mxu0 0
    %3236 = vmatpush1.bf16.msra.mxu0 0
    %3237 = vmatprep.subr.bf16.mxu0 0
    %3238 = vmatpush1.bf16.msra.mxu0 0
    %3239 = vmatprep.subr.bf16.mxu0 0
    %3240 = vmatpush1.bf16.msra.mxu0 0
    %3241 = vmatprep.subr.bf16.mxu0 0
    %3242 = vmatpush1.bf16.msra.mxu0 0
    %3243 = vmatprep.subr.bf16.mxu0 %v3180
    %3244 = vmatpush1.bf16.msra.mxu0 %v3177
    %3245 = vmatprep.subr.bf16.mxu0 0
    %3246 = vmatpush2.bf16.msra.mxu0 0
    %3247 = vmatprep.subr.bf16.mxu0 0
    %3248 = vmatpush2.bf16.msra.mxu0 0
    %3249 = vmatprep.subr.bf16.mxu0 0
    %3250 = vmatpush2.bf16.msra.mxu0 0
    %3251 = vmatprep.subr.bf16.mxu0 0
    %3252 = vmatpush2.bf16.msra.mxu0 0
    %3253 = vmatprep.subr.bf16.mxu0 0
    %3254 = vmatpush2.bf16.msra.mxu0 0
    %3255 = vmatprep.subr.bf16.mxu0 0
    %3256 = vmatpush2.bf16.msra.mxu0 0
    %3257 = vmatprep.subr.bf16.mxu0 0
    %3258 = vmatpush2.bf16.msra.mxu0 0
    %3259 = vmatprep.subr.bf16.mxu0 0
    %3260 = vmatpush2.bf16.msra.mxu0 0
    %3261 = vmatprep.mubr.bf16.mxu0 0
    %3262 = vmatmul.mubr.bf16.gmra.mxu0 %v3167
    %v3263 = vpop.f32.mrf.mxu0
    %v3264 = vadd.f32 0.0, %v3263
    %v3265 = vpop.f32.mrf.mxu0
    %v3266 = vadd.f32 0.0, %v3265
    %v3267 = vpop.f32.mrf.mxu0
    %v3268 = vpop.f32.mrf.mxu0
    %3269 = vdwg.mxu0
    %3270 = vmatprep.subr.bf16.mxu0 0
    %3271 = vmatpush1.bf16.msra.mxu0 0
    %3272 = vmatprep.subr.bf16.mxu0 0
    %3273 = vmatpush1.bf16.msra.mxu0 0
    %3274 = vmatprep.subr.bf16.mxu0 0
    %3275 = vmatpush1.bf16.msra.mxu0 0
    %3276 = vmatprep.subr.bf16.mxu0 0
    %3277 = vmatpush1.bf16.msra.mxu0 0
    %3278 = vmatprep.subr.bf16.mxu0 0
    %3279 = vmatpush1.bf16.msra.mxu0 0
    %3280 = vmatprep.subr.bf16.mxu0 0
    %3281 = vmatpush1.bf16.msra.mxu0 0
    %3282 = vmatprep.subr.bf16.mxu0 0
    %3283 = vmatpush1.bf16.msra.mxu0 0
    %3284 = vmatprep.subr.bf16.mxu0 %v3186
    %3285 = vmatpush1.bf16.msra.mxu0 %v3183
    %3286 = vmatprep.subr.bf16.mxu0 0
    %3287 = vmatpush2.bf16.msra.mxu0 0
    %3288 = vmatprep.subr.bf16.mxu0 0
    %3289 = vmatpush2.bf16.msra.mxu0 0
    %3290 = vmatprep.subr.bf16.mxu0 0
    %3291 = vmatpush2.bf16.msra.mxu0 0
    %3292 = vmatprep.subr.bf16.mxu0 0
    %3293 = vmatpush2.bf16.msra.mxu0 0
    %3294 = vmatprep.subr.bf16.mxu0 0
    %3295 = vmatpush2.bf16.msra.mxu0 0
    %3296 = vmatprep.subr.bf16.mxu0 0
    %3297 = vmatpush2.bf16.msra.mxu0 0
    %3298 = vmatprep.subr.bf16.mxu0 0
    %3299 = vmatpush2.bf16.msra.mxu0 0
    %3300 = vmatprep.subr.bf16.mxu0 0
    %3301 = vmatpush2.bf16.msra.mxu0 0
    %3302 = vmatprep.mubr.bf16.mxu0 0
    %3303 = vmatmul.mubr.bf16.gmra.mxu0 %v3167
    %v3304 = vpop.f32.mrf.mxu0
    %v3305 = vadd.f32 0.0, %v3304
    %v3306 = vpop.f32.mrf.mxu0
    %v3307 = vadd.f32 0.0, %v3306
    %v3308 = vpop.f32.mrf.mxu0
    %v3309 = vpop.f32.mrf.mxu0
    %3310 = vdwg.mxu0
    %v3317 = vunpack.c.l.b16 %v3140
    %v3318 = vunpack.c.h.b16 %v3140
    %v3319 = vunpack.c.l.b16 %v3141
    %v3320 = vunpack.c.h.b16 %v3141
    %v3321 = vunpack.c.l.b16 %v3142
    %v3322 = vunpack.c.h.b16 %v3142
    %v3323 = vunpack.c.l.b16 %v3143
    %v3324 = vunpack.c.h.b16 %v3143
    %v3325 = vunpack.c.l.b16 %v3144
    %v3326 = vunpack.c.h.b16 %v3144
    %v3327 = vunpack.c.l.b16 %v3145
    %v3328 = vunpack.c.h.b16 %v3145
    %v3329 = vpack.c.b16 %v3323, %v3317
    %v3330 = vpack.c.b16 %v3324, %v3318
    %v3331 = vpack.c.b16 %v3325, %v3319
    %v3332 = vpack.c.b16 %v3326, %v3320
    %v3333 = vpack.c.b16 %v3327, %v3321
    %v3334 = vpack.c.b16 %v3328, %v3322
    %vm3341 = vcmask 130048
    %v3343 = vsel %vm3341, %v3139, 0
    %3345 = vmatprep.subr.bf16.mxu0 0
    %3346 = vmatpush1.bf16.msra.mxu0 0
    %3347 = vmatprep.subr.bf16.mxu0 0
    %3348 = vmatpush1.bf16.msra.mxu0 0
    %3349 = vmatprep.subr.bf16.mxu0 0
    %3350 = vmatpush1.bf16.msra.mxu0 0
    %3351 = vmatprep.subr.bf16.mxu0 0
    %3352 = vmatpush1.bf16.msra.mxu0 0
    %3353 = vmatprep.subr.bf16.mxu0 0
    %3354 = vmatpush1.bf16.msra.mxu0 0
    %3355 = vmatprep.subr.bf16.mxu0 0
    %3356 = vmatpush1.bf16.msra.mxu0 0
    %3357 = vmatprep.subr.bf16.mxu0 0
    %3358 = vmatpush1.bf16.msra.mxu0 0
    %3359 = vmatprep.subr.bf16.mxu0 %v3330
    %3360 = vmatpush1.bf16.msra.mxu0 %v3329
    %3361 = vmatprep.subr.bf16.mxu0 0
    %3362 = vmatpush2.bf16.msra.mxu0 0
    %3363 = vmatprep.subr.bf16.mxu0 0
    %3364 = vmatpush2.bf16.msra.mxu0 0
    %3365 = vmatprep.subr.bf16.mxu0 0
    %3366 = vmatpush2.bf16.msra.mxu0 0
    %3367 = vmatprep.subr.bf16.mxu0 0
    %3368 = vmatpush2.bf16.msra.mxu0 0
    %3369 = vmatprep.subr.bf16.mxu0 0
    %3370 = vmatpush2.bf16.msra.mxu0 0
    %3371 = vmatprep.subr.bf16.mxu0 0
    %3372 = vmatpush2.bf16.msra.mxu0 0
    %3373 = vmatprep.subr.bf16.mxu0 0
    %3374 = vmatpush2.bf16.msra.mxu0 0
    %3375 = vmatprep.subr.bf16.mxu0 0
    %3376 = vmatpush2.bf16.msra.mxu0 0
    %3377 = vmatprep.mubr.bf16.mxu0 0
    %3378 = vmatmul.mubr.bf16.gmra.mxu0 %v3343
    %v3379 = vpop.f32.mrf.mxu0
    %v3380 = vadd.f32 %v3223, %v3379
    %v3381 = vpop.f32.mrf.mxu0
    %v3382 = vadd.f32 %v3225, %v3381
    %v3383 = vpop.f32.mrf.mxu0
    %v3384 = vpop.f32.mrf.mxu0
    %3385 = vdwg.mxu0
    %3386 = vmatprep.subr.bf16.mxu0 0
    %3387 = vmatpush1.bf16.msra.mxu0 0
    %3388 = vmatprep.subr.bf16.mxu0 0
    %3389 = vmatpush1.bf16.msra.mxu0 0
    %3390 = vmatprep.subr.bf16.mxu0 0
    %3391 = vmatpush1.bf16.msra.mxu0 0
    %3392 = vmatprep.subr.bf16.mxu0 0
    %3393 = vmatpush1.bf16.msra.mxu0 0
    %3394 = vmatprep.subr.bf16.mxu0 0
    %3395 = vmatpush1.bf16.msra.mxu0 0
    %3396 = vmatprep.subr.bf16.mxu0 0
    %3397 = vmatpush1.bf16.msra.mxu0 0
    %3398 = vmatprep.subr.bf16.mxu0 0
    %3399 = vmatpush1.bf16.msra.mxu0 0
    %3400 = vmatprep.subr.bf16.mxu0 %v3332
    %3401 = vmatpush1.bf16.msra.mxu0 %v3331
    %3402 = vmatprep.subr.bf16.mxu0 0
    %3403 = vmatpush2.bf16.msra.mxu0 0
    %3404 = vmatprep.subr.bf16.mxu0 0
    %3405 = vmatpush2.bf16.msra.mxu0 0
    %3406 = vmatprep.subr.bf16.mxu0 0
    %3407 = vmatpush2.bf16.msra.mxu0 0
    %3408 = vmatprep.subr.bf16.mxu0 0
    %3409 = vmatpush2.bf16.msra.mxu0 0
    %3410 = vmatprep.subr.bf16.mxu0 0
    %3411 = vmatpush2.bf16.msra.mxu0 0
    %3412 = vmatprep.subr.bf16.mxu0 0
    %3413 = vmatpush2.bf16.msra.mxu0 0
    %3414 = vmatprep.subr.bf16.mxu0 0
    %3415 = vmatpush2.bf16.msra.mxu0 0
    %3416 = vmatprep.subr.bf16.mxu0 0
    %3417 = vmatpush2.bf16.msra.mxu0 0
    %3418 = vmatprep.mubr.bf16.mxu0 0
    %3419 = vmatmul.mubr.bf16.gmra.mxu0 %v3343
    %v3420 = vpop.f32.mrf.mxu0
    %v3421 = vadd.f32 %v3264, %v3420
    %v3422 = vpop.f32.mrf.mxu0
    %v3423 = vadd.f32 %v3266, %v3422
    %v3424 = vpop.f32.mrf.mxu0
    %v3425 = vpop.f32.mrf.mxu0
    %3426 = vdwg.mxu0
    %3427 = vmatprep.subr.bf16.mxu0 0
    %3428 = vmatpush1.bf16.msra.mxu0 0
    %3429 = vmatprep.subr.bf16.mxu0 0
    %3430 = vmatpush1.bf16.msra.mxu0 0
    %3431 = vmatprep.subr.bf16.mxu0 0
    %3432 = vmatpush1.bf16.msra.mxu0 0
    %3433 = vmatprep.subr.bf16.mxu0 0
    %3434 = vmatpush1.bf16.msra.mxu0 0
    %3435 = vmatprep.subr.bf16.mxu0 0
    %3436 = vmatpush1.bf16.msra.mxu0 0
    %3437 = vmatprep.subr.bf16.mxu0 0
    %3438 = vmatpush1.bf16.msra.mxu0 0
    %3439 = vmatprep.subr.bf16.mxu0 0
    %3440 = vmatpush1.bf16.msra.mxu0 0
    %3441 = vmatprep.subr.bf16.mxu0 %v3334
    %3442 = vmatpush1.bf16.msra.mxu0 %v3333
    %3443 = vmatprep.subr.bf16.mxu0 0
    %3444 = vmatpush2.bf16.msra.mxu0 0
    %3445 = vmatprep.subr.bf16.mxu0 0
    %3446 = vmatpush2.bf16.msra.mxu0 0
    %3447 = vmatprep.subr.bf16.mxu0 0
    %3448 = vmatpush2.bf16.msra.mxu0 0
    %3449 = vmatprep.subr.bf16.mxu0 0
    %3450 = vmatpush2.bf16.msra.mxu0 0
    %3451 = vmatprep.subr.bf16.mxu0 0
    %3452 = vmatpush2.bf16.msra.mxu0 0
    %3453 = vmatprep.subr.bf16.mxu0 0
    %3454 = vmatpush2.bf16.msra.mxu0 0
    %3455 = vmatprep.subr.bf16.mxu0 0
    %3456 = vmatpush2.bf16.msra.mxu0 0
    %3457 = vmatprep.subr.bf16.mxu0 0
    %3458 = vmatpush2.bf16.msra.mxu0 0
    %3459 = vmatprep.mubr.bf16.mxu0 0
    %3460 = vmatmul.mubr.bf16.gmra.mxu0 %v3343
    %v3461 = vpop.f32.mrf.mxu0
    %v3462 = vadd.f32 %v3305, %v3461
    %v3463 = vpop.f32.mrf.mxu0
    %v3464 = vadd.f32 %v3307, %v3463
    %v3465 = vpop.f32.mrf.mxu0
    %v3466 = vpop.f32.mrf.mxu0
    %3467 = vdwg.mxu0
    %v3468 = vld [vmem:[#allocation19] sm:$0x3f]
    %v3470 = vlaneseq
    %v3471 = vshrl.u32 %v3470, 7
    %v3472 = vsub.s32 0, %v3471
    %v3473 = vrot.slane %v3468, %v3472
    %v3474 = vlaneseq
    %v3475 = vshrl.u32 %v3474, 7
    %v3476 = vsub.s32 1, %v3475
    %v3477 = vrot.slane %v3468, %v3476
    %v3478 = vlaneseq
    %v3479 = vshrl.u32 %v3478, 7
    %v3480 = vsub.s32 2, %v3479
    %v3481 = vrot.slane %v3468, %v3480
    %v3482 = vlaneseq
    %v3483 = vshrl.u32 %v3482, 7
    %v3484 = vsub.s32 3, %v3483
    %v3485 = vrot.slane %v3468, %v3484
    %v3486 = vlaneseq
    %v3487 = vshrl.u32 %v3486, 7
    %v3488 = vsub.s32 4, %v3487
    %v3489 = vrot.slane %v3468, %v3488
    %v3490 = vlaneseq
    %v3491 = vshrl.u32 %v3490, 7
    %v3492 = vsub.s32 5, %v3491
    %v3493 = vrot.slane %v3468, %v3492
    %v3500 = vadd.f32 %v3380, %v3473
    %v3501 = vadd.f32 %v3382, %v3477
    %v3502 = vadd.f32 %v3421, %v3481
    %v3503 = vadd.f32 %v3423, %v3485
    %v3504 = vadd.f32 %v3462, %v3489
    %v3505 = vadd.f32 %v3464, %v3493
    %v3506 = vmax.f32 %v3500, 0.0
    %v3507 = vmax.f32 %v3501, 0.0
    %v3508 = vmax.f32 %v3502, 0.0
    %v3509 = vmax.f32 %v3503, 0.0
    %v3510 = vmax.f32 %v3504, 0.0
    %v3511 = vmax.f32 %v3505, 0.0
    %v3512 = vpack.c.bf16 %v3506, %v3506
    %v3513 = vpack.c.bf16 %v3507, %v3507
    %v3514 = vpack.c.bf16 %v3508, %v3508
    %v3515 = vpack.c.bf16 %v3509, %v3509
    %v3516 = vpack.c.bf16 %v3510, %v3510
    %v3517 = vpack.c.bf16 %v3511, %v3511
    %v3518 = vld [vmem:[#allocation20] sm:$0xff]
    %v3519 = vld [vmem:[#allocation20 + $0x8] sm:$0xff]
    %v3520 = vld [vmem:[#allocation20 + $0x10] sm:$0xff]
    %v3521 = vld [vmem:[#allocation20 + $0x18] sm:$0xff]
    %v3522 = vld [vmem:[#allocation20 + $0x20] sm:$0xff]
    %v3523 = vld [vmem:[#allocation20 + $0x28] sm:$0xff]
    %v3524 = vld [vmem:[#allocation20 + $0x30] sm:$0xff]
    %v3525 = vld [vmem:[#allocation20 + $0x38] sm:$0xff]
    %v3526 = vld [vmem:[#allocation20 + $0x40] sm:$0xff]
    %v3527 = vld [vmem:[#allocation20 + $0x48] sm:$0xff]
    %v3528 = vld [vmem:[#allocation20 + $0x50] sm:$0xff]
    %v3529 = vld [vmem:[#allocation20 + $0x58] sm:$0xff]
    %v3530 = vld [vmem:[#allocation20 + $0x60] sm:$0xff]
    %v3531 = vld [vmem:[#allocation20 + $0x68] sm:$0xff]
    %v3532 = vld [vmem:[#allocation20 + $0x70] sm:$0xff]
    %v3533 = vld [vmem:[#allocation20 + $0x78] sm:$0xff]
    %v3534 = vld [vmem:[#allocation20 + $0x80] sm:$0xff]
    %v3535 = vld [vmem:[#allocation20 + $0x88] sm:$0xff]
    %v3536 = vld [vmem:[#allocation20 + $0x90] sm:$0xff]
    %v3537 = vld [vmem:[#allocation20 + $0x98] sm:$0xff]
    %v3538 = vld [vmem:[#allocation20 + $0xa0] sm:$0xff]
    %v3539 = vld [vmem:[#allocation20 + $0xa8] sm:$0xff]
    %v3540 = vld [vmem:[#allocation20 + $0xb0] sm:$0xff]
    %v3541 = vld [vmem:[#allocation20 + $0xb8] sm:$0xff]
    %v3542 = vld [vmem:[#allocation20 + $0xc0] sm:$0xff]
    %v3543 = vld [vmem:[#allocation20 + $0xc8] sm:$0xff]
    %v3544 = vld [vmem:[#allocation20 + $0xd0] sm:$0xff]
    %v3545 = vld [vmem:[#allocation20 + $0xd8] sm:$0xff]
    %v3546 = vld [vmem:[#allocation20 + $0xe0] sm:$0xff]
    %v3547 = vld [vmem:[#allocation20 + $0xe8] sm:$0xff]
    %v3548 = vld [vmem:[#allocation20 + $0xf0] sm:$0xff]
    %v3549 = vld [vmem:[#allocation20 + $0xf8] sm:$0xff]
    %v3550 = vld [vmem:[#allocation20 + $0x100] sm:$0xff]
    %v3551 = vld [vmem:[#allocation20 + $0x108] sm:$0xff]
    %v3552 = vld [vmem:[#allocation20 + $0x110] sm:$0xff]
    %v3553 = vld [vmem:[#allocation20 + $0x118] sm:$0xff]
    %v3554 = vld [vmem:[#allocation20 + $0x120] sm:$0xff]
    %v3555 = vld [vmem:[#allocation20 + $0x128] sm:$0xff]
    %v3556 = vld [vmem:[#allocation20 + $0x130] sm:$0xff]
    %v3557 = vld [vmem:[#allocation20 + $0x138] sm:$0xff]
    %v3558 = vld [vmem:[#allocation20 + $0x140] sm:$0xff]
    %v3559 = vld [vmem:[#allocation20 + $0x148] sm:$0xff]
    %v3560 = vld [vmem:[#allocation20 + $0x150] sm:$0xff]
    %v3561 = vld [vmem:[#allocation20 + $0x158] sm:$0xff]
    %v3562 = vld [vmem:[#allocation20 + $0x160] sm:$0xff]
    %v3563 = vld [vmem:[#allocation20 + $0x168] sm:$0xff]
    %v3564 = vld [vmem:[#allocation20 + $0x170] sm:$0xff]
    %v3565 = vld [vmem:[#allocation20 + $0x178] sm:$0xff]
    %v3566 = vld [vmem:[#allocation20 + $0x180] sm:$0xff]
    %v3567 = vld [vmem:[#allocation20 + $0x188] sm:$0xff]
    %v3568 = vld [vmem:[#allocation20 + $0x190] sm:$0xff]
    %v3569 = vld [vmem:[#allocation20 + $0x198] sm:$0xff]
    %v3570 = vld [vmem:[#allocation20 + $0x1a0] sm:$0xff]
    %v3571 = vld [vmem:[#allocation20 + $0x1a8] sm:$0xff]
    %v3572 = vld [vmem:[#allocation20 + $0x1b0] sm:$0xff]
    %v3573 = vld [vmem:[#allocation20 + $0x1b8] sm:$0xff]
    %v3574 = vld [vmem:[#allocation20 + $0x1c0] sm:$0xff]
    %v3575 = vld [vmem:[#allocation20 + $0x1c8] sm:$0xff]
    %v3576 = vld [vmem:[#allocation20 + $0x1d0] sm:$0xff]
    %v3577 = vld [vmem:[#allocation20 + $0x1d8] sm:$0xff]
    %v3578 = vld [vmem:[#allocation20 + $0x1e0] sm:$0xff]
    %v3579 = vld [vmem:[#allocation20 + $0x1e8] sm:$0xff]
    %v3580 = vld [vmem:[#allocation20 + $0x1f0] sm:$0xff]
    %v3581 = vld [vmem:[#allocation20 + $0x1f8] sm:$0xff]
    %v3582 = vld [vmem:[#allocation20 + $0x200] sm:$0xff]
    %v3583 = vld [vmem:[#allocation20 + $0x208] sm:$0xff]
    %v3584 = vld [vmem:[#allocation20 + $0x210] sm:$0xff]
    %v3585 = vld [vmem:[#allocation20 + $0x218] sm:$0xff]
    %v3586 = vld [vmem:[#allocation20 + $0x220] sm:$0xff]
    %v3587 = vld [vmem:[#allocation20 + $0x228] sm:$0xff]
    %v3588 = vld [vmem:[#allocation20 + $0x230] sm:$0xff]
    %v3589 = vld [vmem:[#allocation20 + $0x238] sm:$0xff]
    %v3590 = vld [vmem:[#allocation20 + $0x240] sm:$0xff]
    %v3591 = vld [vmem:[#allocation20 + $0x248] sm:$0xff]
    %v3592 = vld [vmem:[#allocation20 + $0x250] sm:$0xff]
    %v3593 = vld [vmem:[#allocation20 + $0x258] sm:$0xff]
    %v3594 = vld [vmem:[#allocation20 + $0x260] sm:$0xff]
    %v3595 = vld [vmem:[#allocation20 + $0x268] sm:$0xff]
    %v3596 = vld [vmem:[#allocation20 + $0x270] sm:$0xff]
    %v3597 = vld [vmem:[#allocation20 + $0x278] sm:$0xff]
    %v3598 = vld [vmem:[#allocation20 + $0x280] sm:$0xff]
    %v3599 = vld [vmem:[#allocation20 + $0x288] sm:$0xff]
    %v3600 = vld [vmem:[#allocation20 + $0x290] sm:$0xff]
    %v3601 = vld [vmem:[#allocation20 + $0x298] sm:$0xff]
    %v3602 = vld [vmem:[#allocation20 + $0x2a0] sm:$0xff]
    %v3603 = vld [vmem:[#allocation20 + $0x2a8] sm:$0xff]
    %v3604 = vld [vmem:[#allocation20 + $0x2b0] sm:$0xff]
    %v3605 = vld [vmem:[#allocation20 + $0x2b8] sm:$0xff]
    %v3606 = vld [vmem:[#allocation20 + $0x2c0] sm:$0xff]
    %v3607 = vld [vmem:[#allocation20 + $0x2c8] sm:$0xff]
    %v3608 = vld [vmem:[#allocation20 + $0x2d0] sm:$0xff]
    %v3609 = vld [vmem:[#allocation20 + $0x2d8] sm:$0xff]
    %v3610 = vld [vmem:[#allocation20 + $0x2e0] sm:$0xff]
    %v3611 = vld [vmem:[#allocation20 + $0x2e8] sm:$0xff]
    %v3612 = vld [vmem:[#allocation20 + $0x2f0] sm:$0xff]
    %v3613 = vld [vmem:[#allocation20 + $0x2f8] sm:$0xff]
    %v3614 = vld [vmem:[#allocation20 + $0x300] sm:$0xff]
    %v3615 = vld [vmem:[#allocation20 + $0x308] sm:$0xff]
    %v3616 = vld [vmem:[#allocation20 + $0x310] sm:$0xff]
    %v3617 = vld [vmem:[#allocation20 + $0x318] sm:$0xff]
    %v3618 = vld [vmem:[#allocation20 + $0x320] sm:$0xff]
    %v3619 = vld [vmem:[#allocation20 + $0x328] sm:$0xff]
    %v3620 = vld [vmem:[#allocation20 + $0x330] sm:$0xff]
    %v3621 = vld [vmem:[#allocation20 + $0x338] sm:$0xff]
    %v3622 = vld [vmem:[#allocation20 + $0x340] sm:$0xff]
    %v3623 = vld [vmem:[#allocation20 + $0x348] sm:$0xff]
    %v3624 = vld [vmem:[#allocation20 + $0x350] sm:$0xff]
    %v3625 = vld [vmem:[#allocation20 + $0x358] sm:$0xff]
    %v3626 = vld [vmem:[#allocation20 + $0x360] sm:$0xff]
    %v3627 = vld [vmem:[#allocation20 + $0x368] sm:$0xff]
    %v3628 = vld [vmem:[#allocation20 + $0x370] sm:$0xff]
    %v3629 = vld [vmem:[#allocation20 + $0x378] sm:$0xff]
    %v3630 = vld [vmem:[#allocation20 + $0x380] sm:$0xff]
    %v3631 = vld [vmem:[#allocation20 + $0x388] sm:$0xff]
    %v3632 = vld [vmem:[#allocation20 + $0x390] sm:$0xff]
    %v3633 = vld [vmem:[#allocation20 + $0x398] sm:$0xff]
    %v3634 = vld [vmem:[#allocation20 + $0x3a0] sm:$0xff]
    %v3635 = vld [vmem:[#allocation20 + $0x3a8] sm:$0xff]
    %v3636 = vld [vmem:[#allocation20 + $0x3b0] sm:$0xff]
    %v3637 = vld [vmem:[#allocation20 + $0x3b8] sm:$0xff]
    %v3638 = vld [vmem:[#allocation20 + $0x3c0] sm:$0xff]
    %v3639 = vld [vmem:[#allocation20 + $0x3c8] sm:$0xff]
    %v3640 = vld [vmem:[#allocation20 + $0x3d0] sm:$0xff]
    %v3641 = vld [vmem:[#allocation20 + $0x3d8] sm:$0xff]
    %v3642 = vld [vmem:[#allocation20 + $0x3e0] sm:$0xff]
    %v3643 = vld [vmem:[#allocation20 + $0x3e8] sm:$0xff]
    %v3644 = vld [vmem:[#allocation20 + $0x3f0] sm:$0xff]
    %v3645 = vld [vmem:[#allocation20 + $0x3f8] sm:$0xff]
    %v3646 = vld [vmem:[#allocation20 + $0x400] sm:$0xff]
    %v3647 = vld [vmem:[#allocation20 + $0x408] sm:$0xff]
    %v3648 = vld [vmem:[#allocation20 + $0x410] sm:$0xff]
    %v3649 = vld [vmem:[#allocation20 + $0x418] sm:$0xff]
    %v3650 = vld [vmem:[#allocation20 + $0x420] sm:$0xff]
    %v3651 = vld [vmem:[#allocation20 + $0x428] sm:$0xff]
    %v3652 = vld [vmem:[#allocation20 + $0x430] sm:$0xff]
    %v3653 = vld [vmem:[#allocation20 + $0x438] sm:$0xff]
    %v3654 = vld [vmem:[#allocation20 + $0x440] sm:$0xff]
    %v3655 = vld [vmem:[#allocation20 + $0x448] sm:$0xff]
    %v3656 = vld [vmem:[#allocation20 + $0x450] sm:$0xff]
    %v3657 = vld [vmem:[#allocation20 + $0x458] sm:$0xff]
    %v3658 = vld [vmem:[#allocation20 + $0x460] sm:$0xff]
    %v3659 = vld [vmem:[#allocation20 + $0x468] sm:$0xff]
    %v3660 = vld [vmem:[#allocation20 + $0x470] sm:$0xff]
    %v3661 = vld [vmem:[#allocation20 + $0x478] sm:$0xff]
    %v3662 = vld [vmem:[#allocation20 + $0x480] sm:$0xff]
    %v3663 = vld [vmem:[#allocation20 + $0x488] sm:$0xff]
    %v3664 = vld [vmem:[#allocation20 + $0x490] sm:$0xff]
    %v3665 = vld [vmem:[#allocation20 + $0x498] sm:$0xff]
    %v3666 = vld [vmem:[#allocation20 + $0x4a0] sm:$0xff]
    %v3667 = vld [vmem:[#allocation20 + $0x4a8] sm:$0xff]
    %v3668 = vld [vmem:[#allocation20 + $0x4b0] sm:$0xff]
    %v3669 = vld [vmem:[#allocation20 + $0x4b8] sm:$0xff]
    %v3670 = vld [vmem:[#allocation20 + $0x4c0] sm:$0xff]
    %v3671 = vld [vmem:[#allocation20 + $0x4c8] sm:$0xff]
    %v3672 = vld [vmem:[#allocation20 + $0x4d0] sm:$0xff]
    %v3673 = vld [vmem:[#allocation20 + $0x4d8] sm:$0xff]
    %v3674 = vld [vmem:[#allocation20 + $0x4e0] sm:$0xff]
    %v3675 = vld [vmem:[#allocation20 + $0x4e8] sm:$0xff]
    %v3676 = vld [vmem:[#allocation20 + $0x4f0] sm:$0xff]
    %v3677 = vld [vmem:[#allocation20 + $0x4f8] sm:$0xff]
    %v3678 = vld [vmem:[#allocation20 + $0x500] sm:$0xff]
    %v3679 = vld [vmem:[#allocation20 + $0x508] sm:$0xff]
    %v3680 = vld [vmem:[#allocation20 + $0x510] sm:$0xff]
    %v3681 = vld [vmem:[#allocation20 + $0x518] sm:$0xff]
    %v3682 = vld [vmem:[#allocation20 + $0x520] sm:$0xff]
    %v3683 = vld [vmem:[#allocation20 + $0x528] sm:$0xff]
    %v3684 = vld [vmem:[#allocation20 + $0x530] sm:$0xff]
    %v3685 = vld [vmem:[#allocation20 + $0x538] sm:$0xff]
    %v3686 = vld [vmem:[#allocation20 + $0x540] sm:$0xff]
    %v3687 = vld [vmem:[#allocation20 + $0x548] sm:$0xff]
    %v3688 = vld [vmem:[#allocation20 + $0x550] sm:$0xff]
    %v3689 = vld [vmem:[#allocation20 + $0x558] sm:$0xff]
    %v3690 = vld [vmem:[#allocation20 + $0x560] sm:$0xff]
    %v3691 = vld [vmem:[#allocation20 + $0x568] sm:$0xff]
    %v3692 = vld [vmem:[#allocation20 + $0x570] sm:$0xff]
    %v3693 = vld [vmem:[#allocation20 + $0x578] sm:$0xff]
    %v3694 = vld [vmem:[#allocation20 + $0x580] sm:$0xff]
    %v3695 = vld [vmem:[#allocation20 + $0x588] sm:$0xff]
    %v3696 = vld [vmem:[#allocation20 + $0x590] sm:$0xff]
    %v3697 = vld [vmem:[#allocation20 + $0x598] sm:$0xff]
    %v3698 = vld [vmem:[#allocation20 + $0x5a0] sm:$0xff]
    %v3699 = vld [vmem:[#allocation20 + $0x5a8] sm:$0xff]
    %v3700 = vld [vmem:[#allocation20 + $0x5b0] sm:$0xff]
    %v3701 = vld [vmem:[#allocation20 + $0x5b8] sm:$0xff]
    %v3702 = vld [vmem:[#allocation20 + $0x5c0] sm:$0xff]
    %v3703 = vld [vmem:[#allocation20 + $0x5c8] sm:$0xff]
    %v3704 = vld [vmem:[#allocation20 + $0x5d0] sm:$0xff]
    %v3705 = vld [vmem:[#allocation20 + $0x5d8] sm:$0xff]
    %v3706 = vld [vmem:[#allocation20 + $0x5e0] sm:$0xff]
    %v3707 = vld [vmem:[#allocation20 + $0x5e8] sm:$0xff]
    %v3708 = vld [vmem:[#allocation20 + $0x5f0] sm:$0xff]
    %v3709 = vld [vmem:[#allocation20 + $0x5f8] sm:$0xff]
    %v3710 = vld [vmem:[#allocation20 + $0x600] sm:$0xff]
    %v3711 = vld [vmem:[#allocation20 + $0x608] sm:$0xff]
    %v3712 = vld [vmem:[#allocation20 + $0x610] sm:$0xff]
    %v3713 = vld [vmem:[#allocation20 + $0x618] sm:$0xff]
    %v3714 = vld [vmem:[#allocation20 + $0x620] sm:$0xff]
    %v3715 = vld [vmem:[#allocation20 + $0x628] sm:$0xff]
    %v3716 = vld [vmem:[#allocation20 + $0x630] sm:$0xff]
    %v3717 = vld [vmem:[#allocation20 + $0x638] sm:$0xff]
    %v3718 = vld [vmem:[#allocation20 + $0x640] sm:$0xff]
    %v3719 = vld [vmem:[#allocation20 + $0x648] sm:$0xff]
    %v3720 = vld [vmem:[#allocation20 + $0x650] sm:$0xff]
    %v3721 = vld [vmem:[#allocation20 + $0x658] sm:$0xff]
    %v3722 = vld [vmem:[#allocation20 + $0x660] sm:$0xff]
    %v3723 = vld [vmem:[#allocation20 + $0x668] sm:$0xff]
    %v3724 = vld [vmem:[#allocation20 + $0x670] sm:$0xff]
    %v3725 = vld [vmem:[#allocation20 + $0x678] sm:$0xff]
    %v3726 = vld [vmem:[#allocation20 + $0x680] sm:$0xff]
    %v3727 = vld [vmem:[#allocation20 + $0x688] sm:$0xff]
    %v3728 = vld [vmem:[#allocation20 + $0x690] sm:$0xff]
    %v3729 = vld [vmem:[#allocation20 + $0x698] sm:$0xff]
    %v3730 = vld [vmem:[#allocation20 + $0x6a0] sm:$0xff]
    %v3731 = vld [vmem:[#allocation20 + $0x6a8] sm:$0xff]
    %v3732 = vld [vmem:[#allocation20 + $0x6b0] sm:$0xff]
    %v3733 = vld [vmem:[#allocation20 + $0x6b8] sm:$0xff]
    %v3734 = vld [vmem:[#allocation20 + $0x6c0] sm:$0xff]
    %v3735 = vld [vmem:[#allocation20 + $0x6c8] sm:$0xff]
    %v3736 = vld [vmem:[#allocation20 + $0x6d0] sm:$0xff]
    %v3737 = vld [vmem:[#allocation20 + $0x6d8] sm:$0xff]
    %v3738 = vld [vmem:[#allocation20 + $0x6e0] sm:$0xff]
    %v3739 = vld [vmem:[#allocation20 + $0x6e8] sm:$0xff]
    %v3740 = vld [vmem:[#allocation20 + $0x6f0] sm:$0xff]
    %v3741 = vld [vmem:[#allocation20 + $0x6f8] sm:$0xff]
    %v3742 = vld [vmem:[#allocation20 + $0x700] sm:$0xff]
    %v3743 = vld [vmem:[#allocation20 + $0x708] sm:$0xff]
    %v3744 = vld [vmem:[#allocation20 + $0x710] sm:$0xff]
    %v3745 = vld [vmem:[#allocation20 + $0x718] sm:$0xff]
    %v3746 = vld [vmem:[#allocation20 + $0x720] sm:$0xff]
    %v3747 = vld [vmem:[#allocation20 + $0x728] sm:$0xff]
    %v3748 = vld [vmem:[#allocation20 + $0x730] sm:$0xff]
    %v3749 = vld [vmem:[#allocation20 + $0x738] sm:$0xff]
    %v3750 = vld [vmem:[#allocation20 + $0x740] sm:$0xff]
    %v3751 = vld [vmem:[#allocation20 + $0x748] sm:$0xff]
    %v3752 = vld [vmem:[#allocation20 + $0x750] sm:$0xff]
    %v3753 = vld [vmem:[#allocation20 + $0x758] sm:$0xff]
    %v3754 = vld [vmem:[#allocation20 + $0x760] sm:$0xff]
    %v3755 = vld [vmem:[#allocation20 + $0x768] sm:$0xff]
    %v3756 = vld [vmem:[#allocation20 + $0x770] sm:$0xff]
    %v3757 = vld [vmem:[#allocation20 + $0x778] sm:$0xff]
    %v3758 = vld [vmem:[#allocation20 + $0x780] sm:$0xff]
    %v3759 = vld [vmem:[#allocation20 + $0x788] sm:$0xff]
    %v3760 = vld [vmem:[#allocation20 + $0x790] sm:$0xff]
    %v3761 = vld [vmem:[#allocation20 + $0x798] sm:$0xff]
    %v3762 = vld [vmem:[#allocation20 + $0x7a0] sm:$0xff]
    %v3763 = vld [vmem:[#allocation20 + $0x7a8] sm:$0xff]
    %v3764 = vld [vmem:[#allocation20 + $0x7b0] sm:$0xff]
    %v3765 = vld [vmem:[#allocation20 + $0x7b8] sm:$0xff]
    %v3766 = vld [vmem:[#allocation20 + $0x7c0] sm:$0xff]
    %v3767 = vld [vmem:[#allocation20 + $0x7c8] sm:$0xff]
    %v3768 = vld [vmem:[#allocation20 + $0x7d0] sm:$0xff]
    %v3769 = vld [vmem:[#allocation20 + $0x7d8] sm:$0xff]
    %v3770 = vld [vmem:[#allocation20 + $0x7e0] sm:$0xff]
    %v3771 = vld [vmem:[#allocation20 + $0x7e8] sm:$0xff]
    %v3772 = vld [vmem:[#allocation20 + $0x7f0] sm:$0xff]
    %v3773 = vld [vmem:[#allocation20 + $0x7f8] sm:$0xff]
    %v3774 = vld [vmem:[#allocation20 + $0x800] sm:$0xff]
    %v3775 = vld [vmem:[#allocation20 + $0x808] sm:$0xff]
    %v3776 = vld [vmem:[#allocation20 + $0x810] sm:$0xff]
    %v3777 = vld [vmem:[#allocation20 + $0x818] sm:$0xff]
    %v3778 = vld [vmem:[#allocation20 + $0x820] sm:$0xff]
    %v3779 = vld [vmem:[#allocation20 + $0x828] sm:$0xff]
    %v3780 = vld [vmem:[#allocation20 + $0x830] sm:$0xff]
    %v3781 = vld [vmem:[#allocation20 + $0x838] sm:$0xff]
    %v3782 = vld [vmem:[#allocation20 + $0x840] sm:$0xff]
    %v3783 = vld [vmem:[#allocation20 + $0x848] sm:$0xff]
    %v3784 = vld [vmem:[#allocation20 + $0x850] sm:$0xff]
    %v3785 = vld [vmem:[#allocation20 + $0x858] sm:$0xff]
    %v3786 = vld [vmem:[#allocation20 + $0x860] sm:$0xff]
    %v3787 = vld [vmem:[#allocation20 + $0x868] sm:$0xff]
    %v3788 = vld [vmem:[#allocation20 + $0x870] sm:$0xff]
    %v3789 = vld [vmem:[#allocation20 + $0x878] sm:$0xff]
    %v3790 = vld [vmem:[#allocation20 + $0x880] sm:$0xff]
    %v3791 = vld [vmem:[#allocation20 + $0x888] sm:$0xff]
    %v3792 = vld [vmem:[#allocation20 + $0x890] sm:$0xff]
    %v3793 = vld [vmem:[#allocation20 + $0x898] sm:$0xff]
    %v3794 = vld [vmem:[#allocation20 + $0x8a0] sm:$0xff]
    %v3795 = vld [vmem:[#allocation20 + $0x8a8] sm:$0xff]
    %v3796 = vld [vmem:[#allocation20 + $0x8b0] sm:$0xff]
    %v3797 = vld [vmem:[#allocation20 + $0x8b8] sm:$0xff]
    %v3798 = vld [vmem:[#allocation20 + $0x8c0] sm:$0xff]
    %v3799 = vld [vmem:[#allocation20 + $0x8c8] sm:$0xff]
    %v3800 = vld [vmem:[#allocation20 + $0x8d0] sm:$0xff]
    %v3801 = vld [vmem:[#allocation20 + $0x8d8] sm:$0xff]
    %v3802 = vld [vmem:[#allocation20 + $0x8e0] sm:$0xff]
    %v3803 = vld [vmem:[#allocation20 + $0x8e8] sm:$0xff]
    %v3804 = vld [vmem:[#allocation20 + $0x8f0] sm:$0xff]
    %v3805 = vld [vmem:[#allocation20 + $0x8f8] sm:$0xff]
    %v3806 = vld [vmem:[#allocation22] sm:$0x3f]
    %v3808 = vlaneseq
    %v3809 = vshrl.u32 %v3808, 7
    %v3810 = vsub.s32 0, %v3809
    %v3811 = vrot.slane %v3806, %v3810
    %v3812 = vlaneseq
    %v3813 = vshrl.u32 %v3812, 7
    %v3814 = vsub.s32 1, %v3813
    %v3815 = vrot.slane %v3806, %v3814
    %v3816 = vlaneseq
    %v3817 = vshrl.u32 %v3816, 7
    %v3818 = vsub.s32 2, %v3817
    %v3819 = vrot.slane %v3806, %v3818
    %v3820 = vlaneseq
    %v3821 = vshrl.u32 %v3820, 7
    %v3822 = vsub.s32 3, %v3821
    %v3823 = vrot.slane %v3806, %v3822
    %v3824 = vlaneseq
    %v3825 = vshrl.u32 %v3824, 7
    %v3826 = vsub.s32 4, %v3825
    %v3827 = vrot.slane %v3806, %v3826
    %v3828 = vlaneseq
    %v3829 = vshrl.u32 %v3828, 7
    %v3830 = vsub.s32 5, %v3829
    %v3831 = vrot.slane %v3806, %v3830
    %v4126 = vunpack.c.l.b16 %v3518
    %v4127 = vunpack.c.h.b16 %v3518
    %v4128 = vunpack.c.l.b16 %v3519
    %v4129 = vunpack.c.h.b16 %v3519
    %v4130 = vunpack.c.l.b16 %v3520
    %v4131 = vunpack.c.h.b16 %v3520
    %v4132 = vunpack.c.l.b16 %v3521
    %v4133 = vunpack.c.h.b16 %v3521
    %v4134 = vunpack.c.l.b16 %v3522
    %v4135 = vunpack.c.h.b16 %v3522
    %v4136 = vunpack.c.l.b16 %v3523
    %v4137 = vunpack.c.h.b16 %v3523
    %v4138 = vunpack.c.l.b16 %v3524
    %v4139 = vunpack.c.h.b16 %v3524
    %v4140 = vunpack.c.l.b16 %v3525
    %v4141 = vunpack.c.h.b16 %v3525
    %v4142 = vunpack.c.l.b16 %v3526
    %v4143 = vunpack.c.h.b16 %v3526
    %v4144 = vunpack.c.l.b16 %v3527
    %v4145 = vunpack.c.h.b16 %v3527
    %v4146 = vunpack.c.l.b16 %v3528
    %v4147 = vunpack.c.h.b16 %v3528
    %v4148 = vunpack.c.l.b16 %v3529
    %v4149 = vunpack.c.h.b16 %v3529
    %v4150 = vunpack.c.l.b16 %v3530
    %v4151 = vunpack.c.h.b16 %v3530
    %v4152 = vunpack.c.l.b16 %v3531
    %v4153 = vunpack.c.h.b16 %v3531
    %v4154 = vunpack.c.l.b16 %v3532
    %v4155 = vunpack.c.h.b16 %v3532
    %v4156 = vunpack.c.l.b16 %v3533
    %v4157 = vunpack.c.h.b16 %v3533
    %v4158 = vunpack.c.l.b16 %v3534
    %v4159 = vunpack.c.h.b16 %v3534
    %v4160 = vunpack.c.l.b16 %v3535
    %v4161 = vunpack.c.h.b16 %v3535
    %v4162 = vunpack.c.l.b16 %v3536
    %v4163 = vunpack.c.h.b16 %v3536
    %v4164 = vunpack.c.l.b16 %v3537
    %v4165 = vunpack.c.h.b16 %v3537
    %v4166 = vunpack.c.l.b16 %v3538
    %v4167 = vunpack.c.h.b16 %v3538
    %v4168 = vunpack.c.l.b16 %v3539
    %v4169 = vunpack.c.h.b16 %v3539
    %v4170 = vunpack.c.l.b16 %v3540
    %v4171 = vunpack.c.h.b16 %v3540
    %v4172 = vunpack.c.l.b16 %v3541
    %v4173 = vunpack.c.h.b16 %v3541
    %v4174 = vunpack.c.l.b16 %v3542
    %v4175 = vunpack.c.h.b16 %v3542
    %v4176 = vunpack.c.l.b16 %v3543
    %v4177 = vunpack.c.h.b16 %v3543
    %v4178 = vunpack.c.l.b16 %v3544
    %v4179 = vunpack.c.h.b16 %v3544
    %v4180 = vunpack.c.l.b16 %v3545
    %v4181 = vunpack.c.h.b16 %v3545
    %v4182 = vunpack.c.l.b16 %v3546
    %v4183 = vunpack.c.h.b16 %v3546
    %v4184 = vunpack.c.l.b16 %v3547
    %v4185 = vunpack.c.h.b16 %v3547
    %v4186 = vunpack.c.l.b16 %v3548
    %v4187 = vunpack.c.h.b16 %v3548
    %v4188 = vunpack.c.l.b16 %v3549
    %v4189 = vunpack.c.h.b16 %v3549
    %v4190 = vunpack.c.l.b16 %v3550
    %v4191 = vunpack.c.h.b16 %v3550
    %v4192 = vunpack.c.l.b16 %v3551
    %v4193 = vunpack.c.h.b16 %v3551
    %v4194 = vunpack.c.l.b16 %v3552
    %v4195 = vunpack.c.h.b16 %v3552
    %v4196 = vunpack.c.l.b16 %v3553
    %v4197 = vunpack.c.h.b16 %v3553
    %v4198 = vunpack.c.l.b16 %v3554
    %v4199 = vunpack.c.h.b16 %v3554
    %v4200 = vunpack.c.l.b16 %v3555
    %v4201 = vunpack.c.h.b16 %v3555
    %v4202 = vunpack.c.l.b16 %v3556
    %v4203 = vunpack.c.h.b16 %v3556
    %v4204 = vunpack.c.l.b16 %v3557
    %v4205 = vunpack.c.h.b16 %v3557
    %v4206 = vunpack.c.l.b16 %v3558
    %v4207 = vunpack.c.h.b16 %v3558
    %v4208 = vunpack.c.l.b16 %v3559
    %v4209 = vunpack.c.h.b16 %v3559
    %v4210 = vunpack.c.l.b16 %v3560
    %v4211 = vunpack.c.h.b16 %v3560
    %v4212 = vunpack.c.l.b16 %v3561
    %v4213 = vunpack.c.h.b16 %v3561
    %v4214 = vunpack.c.l.b16 %v3562
    %v4215 = vunpack.c.h.b16 %v3562
    %v4216 = vunpack.c.l.b16 %v3563
    %v4217 = vunpack.c.h.b16 %v3563
    %v4218 = vunpack.c.l.b16 %v3564
    %v4219 = vunpack.c.h.b16 %v3564
    %v4220 = vunpack.c.l.b16 %v3565
    %v4221 = vunpack.c.h.b16 %v3565
    %v4222 = vunpack.c.l.b16 %v3566
    %v4223 = vunpack.c.h.b16 %v3566
    %v4224 = vunpack.c.l.b16 %v3567
    %v4225 = vunpack.c.h.b16 %v3567
    %v4226 = vunpack.c.l.b16 %v3568
    %v4227 = vunpack.c.h.b16 %v3568
    %v4228 = vunpack.c.l.b16 %v3569
    %v4229 = vunpack.c.h.b16 %v3569
    %v4230 = vunpack.c.l.b16 %v3570
    %v4231 = vunpack.c.h.b16 %v3570
    %v4232 = vunpack.c.l.b16 %v3571
    %v4233 = vunpack.c.h.b16 %v3571
    %v4234 = vunpack.c.l.b16 %v3572
    %v4235 = vunpack.c.h.b16 %v3572
    %v4236 = vunpack.c.l.b16 %v3573
    %v4237 = vunpack.c.h.b16 %v3573
    %v4238 = vunpack.c.l.b16 %v3574
    %v4239 = vunpack.c.h.b16 %v3574
    %v4240 = vunpack.c.l.b16 %v3575
    %v4241 = vunpack.c.h.b16 %v3575
    %v4242 = vunpack.c.l.b16 %v3576
    %v4243 = vunpack.c.h.b16 %v3576
    %v4244 = vunpack.c.l.b16 %v3577
    %v4245 = vunpack.c.h.b16 %v3577
    %v4246 = vunpack.c.l.b16 %v3578
    %v4247 = vunpack.c.h.b16 %v3578
    %v4248 = vunpack.c.l.b16 %v3579
    %v4249 = vunpack.c.h.b16 %v3579
    %v4250 = vunpack.c.l.b16 %v3580
    %v4251 = vunpack.c.h.b16 %v3580
    %v4252 = vunpack.c.l.b16 %v3581
    %v4253 = vunpack.c.h.b16 %v3581
    %v4254 = vunpack.c.l.b16 %v3582
    %v4255 = vunpack.c.h.b16 %v3582
    %v4256 = vunpack.c.l.b16 %v3583
    %v4257 = vunpack.c.h.b16 %v3583
    %v4258 = vunpack.c.l.b16 %v3584
    %v4259 = vunpack.c.h.b16 %v3584
    %v4260 = vunpack.c.l.b16 %v3585
    %v4261 = vunpack.c.h.b16 %v3585
    %v4262 = vunpack.c.l.b16 %v3586
    %v4263 = vunpack.c.h.b16 %v3586
    %v4264 = vunpack.c.l.b16 %v3587
    %v4265 = vunpack.c.h.b16 %v3587
    %v4266 = vunpack.c.l.b16 %v3588
    %v4267 = vunpack.c.h.b16 %v3588
    %v4268 = vunpack.c.l.b16 %v3589
    %v4269 = vunpack.c.h.b16 %v3589
    %v4270 = vunpack.c.l.b16 %v3590
    %v4271 = vunpack.c.h.b16 %v3590
    %v4272 = vunpack.c.l.b16 %v3591
    %v4273 = vunpack.c.h.b16 %v3591
    %v4274 = vunpack.c.l.b16 %v3592
    %v4275 = vunpack.c.h.b16 %v3592
    %v4276 = vunpack.c.l.b16 %v3593
    %v4277 = vunpack.c.h.b16 %v3593
    %v4278 = vunpack.c.l.b16 %v3594
    %v4279 = vunpack.c.h.b16 %v3594
    %v4280 = vunpack.c.l.b16 %v3595
    %v4281 = vunpack.c.h.b16 %v3595
    %v4282 = vunpack.c.l.b16 %v3596
    %v4283 = vunpack.c.h.b16 %v3596
    %v4284 = vunpack.c.l.b16 %v3597
    %v4285 = vunpack.c.h.b16 %v3597
    %v4286 = vunpack.c.l.b16 %v3598
    %v4287 = vunpack.c.h.b16 %v3598
    %v4288 = vunpack.c.l.b16 %v3599
    %v4289 = vunpack.c.h.b16 %v3599
    %v4290 = vunpack.c.l.b16 %v3600
    %v4291 = vunpack.c.h.b16 %v3600
    %v4292 = vunpack.c.l.b16 %v3601
    %v4293 = vunpack.c.h.b16 %v3601
    %v4294 = vunpack.c.l.b16 %v3602
    %v4295 = vunpack.c.h.b16 %v3602
    %v4296 = vunpack.c.l.b16 %v3603
    %v4297 = vunpack.c.h.b16 %v3603
    %v4298 = vunpack.c.l.b16 %v3604
    %v4299 = vunpack.c.h.b16 %v3604
    %v4300 = vunpack.c.l.b16 %v3605
    %v4301 = vunpack.c.h.b16 %v3605
    %v4302 = vunpack.c.l.b16 %v3606
    %v4303 = vunpack.c.h.b16 %v3606
    %v4304 = vunpack.c.l.b16 %v3607
    %v4305 = vunpack.c.h.b16 %v3607
    %v4306 = vunpack.c.l.b16 %v3608
    %v4307 = vunpack.c.h.b16 %v3608
    %v4308 = vunpack.c.l.b16 %v3609
    %v4309 = vunpack.c.h.b16 %v3609
    %v4310 = vunpack.c.l.b16 %v3610
    %v4311 = vunpack.c.h.b16 %v3610
    %v4312 = vunpack.c.l.b16 %v3611
    %v4313 = vunpack.c.h.b16 %v3611
    %v4314 = vunpack.c.l.b16 %v3612
    %v4315 = vunpack.c.h.b16 %v3612
    %v4316 = vunpack.c.l.b16 %v3613
    %v4317 = vunpack.c.h.b16 %v3613
    %v4318 = vunpack.c.l.b16 %v3614
    %v4319 = vunpack.c.h.b16 %v3614
    %v4320 = vunpack.c.l.b16 %v3615
    %v4321 = vunpack.c.h.b16 %v3615
    %v4322 = vunpack.c.l.b16 %v3616
    %v4323 = vunpack.c.h.b16 %v3616
    %v4324 = vunpack.c.l.b16 %v3617
    %v4325 = vunpack.c.h.b16 %v3617
    %v4326 = vunpack.c.l.b16 %v3618
    %v4327 = vunpack.c.h.b16 %v3618
    %v4328 = vunpack.c.l.b16 %v3619
    %v4329 = vunpack.c.h.b16 %v3619
    %v4330 = vunpack.c.l.b16 %v3620
    %v4331 = vunpack.c.h.b16 %v3620
    %v4332 = vunpack.c.l.b16 %v3621
    %v4333 = vunpack.c.h.b16 %v3621
    %v4334 = vunpack.c.l.b16 %v3622
    %v4335 = vunpack.c.h.b16 %v3622
    %v4336 = vunpack.c.l.b16 %v3623
    %v4337 = vunpack.c.h.b16 %v3623
    %v4338 = vunpack.c.l.b16 %v3624
    %v4339 = vunpack.c.h.b16 %v3624
    %v4340 = vunpack.c.l.b16 %v3625
    %v4341 = vunpack.c.h.b16 %v3625
    %v4342 = vunpack.c.l.b16 %v3626
    %v4343 = vunpack.c.h.b16 %v3626
    %v4344 = vunpack.c.l.b16 %v3627
    %v4345 = vunpack.c.h.b16 %v3627
    %v4346 = vunpack.c.l.b16 %v3628
    %v4347 = vunpack.c.h.b16 %v3628
    %v4348 = vunpack.c.l.b16 %v3629
    %v4349 = vunpack.c.h.b16 %v3629
    %v4350 = vunpack.c.l.b16 %v3630
    %v4351 = vunpack.c.h.b16 %v3630
    %v4352 = vunpack.c.l.b16 %v3631
    %v4353 = vunpack.c.h.b16 %v3631
    %v4354 = vunpack.c.l.b16 %v3632
    %v4355 = vunpack.c.h.b16 %v3632
    %v4356 = vunpack.c.l.b16 %v3633
    %v4357 = vunpack.c.h.b16 %v3633
    %v4358 = vunpack.c.l.b16 %v3634
    %v4359 = vunpack.c.h.b16 %v3634
    %v4360 = vunpack.c.l.b16 %v3635
    %v4361 = vunpack.c.h.b16 %v3635
    %v4362 = vunpack.c.l.b16 %v3636
    %v4363 = vunpack.c.h.b16 %v3636
    %v4364 = vunpack.c.l.b16 %v3637
    %v4365 = vunpack.c.h.b16 %v3637
    %v4366 = vunpack.c.l.b16 %v3638
    %v4367 = vunpack.c.h.b16 %v3638
    %v4368 = vunpack.c.l.b16 %v3639
    %v4369 = vunpack.c.h.b16 %v3639
    %v4370 = vunpack.c.l.b16 %v3640
    %v4371 = vunpack.c.h.b16 %v3640
    %v4372 = vunpack.c.l.b16 %v3641
    %v4373 = vunpack.c.h.b16 %v3641
    %v4374 = vunpack.c.l.b16 %v3642
    %v4375 = vunpack.c.h.b16 %v3642
    %v4376 = vunpack.c.l.b16 %v3643
    %v4377 = vunpack.c.h.b16 %v3643
    %v4378 = vunpack.c.l.b16 %v3644
    %v4379 = vunpack.c.h.b16 %v3644
    %v4380 = vunpack.c.l.b16 %v3645
    %v4381 = vunpack.c.h.b16 %v3645
    %v4382 = vunpack.c.l.b16 %v3646
    %v4383 = vunpack.c.h.b16 %v3646
    %v4384 = vunpack.c.l.b16 %v3647
    %v4385 = vunpack.c.h.b16 %v3647
    %v4386 = vunpack.c.l.b16 %v3648
    %v4387 = vunpack.c.h.b16 %v3648
    %v4388 = vunpack.c.l.b16 %v3649
    %v4389 = vunpack.c.h.b16 %v3649
    %v4390 = vunpack.c.l.b16 %v3650
    %v4391 = vunpack.c.h.b16 %v3650
    %v4392 = vunpack.c.l.b16 %v3651
    %v4393 = vunpack.c.h.b16 %v3651
    %v4394 = vunpack.c.l.b16 %v3652
    %v4395 = vunpack.c.h.b16 %v3652
    %v4396 = vunpack.c.l.b16 %v3653
    %v4397 = vunpack.c.h.b16 %v3653
    %v4398 = vunpack.c.l.b16 %v3654
    %v4399 = vunpack.c.h.b16 %v3654
    %v4400 = vunpack.c.l.b16 %v3655
    %v4401 = vunpack.c.h.b16 %v3655
    %v4402 = vunpack.c.l.b16 %v3656
    %v4403 = vunpack.c.h.b16 %v3656
    %v4404 = vunpack.c.l.b16 %v3657
    %v4405 = vunpack.c.h.b16 %v3657
    %v4406 = vunpack.c.l.b16 %v3658
    %v4407 = vunpack.c.h.b16 %v3658
    %v4408 = vunpack.c.l.b16 %v3659
    %v4409 = vunpack.c.h.b16 %v3659
    %v4410 = vunpack.c.l.b16 %v3660
    %v4411 = vunpack.c.h.b16 %v3660
    %v4412 = vunpack.c.l.b16 %v3661
    %v4413 = vunpack.c.h.b16 %v3661
    %v4414 = vunpack.c.l.b16 %v3662
    %v4415 = vunpack.c.h.b16 %v3662
    %v4416 = vunpack.c.l.b16 %v3663
    %v4417 = vunpack.c.h.b16 %v3663
    %v4418 = vunpack.c.l.b16 %v3664
    %v4419 = vunpack.c.h.b16 %v3664
    %v4420 = vunpack.c.l.b16 %v3665
    %v4421 = vunpack.c.h.b16 %v3665
    %v4422 = vunpack.c.l.b16 %v3666
    %v4423 = vunpack.c.h.b16 %v3666
    %v4424 = vunpack.c.l.b16 %v3667
    %v4425 = vunpack.c.h.b16 %v3667
    %v4426 = vunpack.c.l.b16 %v3668
    %v4427 = vunpack.c.h.b16 %v3668
    %v4428 = vunpack.c.l.b16 %v3669
    %v4429 = vunpack.c.h.b16 %v3669
    %v4430 = vunpack.c.l.b16 %v3670
    %v4431 = vunpack.c.h.b16 %v3670
    %v4432 = vunpack.c.l.b16 %v3671
    %v4433 = vunpack.c.h.b16 %v3671
    %v4434 = vunpack.c.l.b16 %v3672
    %v4435 = vunpack.c.h.b16 %v3672
    %v4436 = vunpack.c.l.b16 %v3673
    %v4437 = vunpack.c.h.b16 %v3673
    %v4438 = vunpack.c.l.b16 %v3674
    %v4439 = vunpack.c.h.b16 %v3674
    %v4440 = vunpack.c.l.b16 %v3675
    %v4441 = vunpack.c.h.b16 %v3675
    %v4442 = vunpack.c.l.b16 %v3676
    %v4443 = vunpack.c.h.b16 %v3676
    %v4444 = vunpack.c.l.b16 %v3677
    %v4445 = vunpack.c.h.b16 %v3677
    %v4446 = vunpack.c.l.b16 %v3678
    %v4447 = vunpack.c.h.b16 %v3678
    %v4448 = vunpack.c.l.b16 %v3679
    %v4449 = vunpack.c.h.b16 %v3679
    %v4450 = vunpack.c.l.b16 %v3680
    %v4451 = vunpack.c.h.b16 %v3680
    %v4452 = vunpack.c.l.b16 %v3681
    %v4453 = vunpack.c.h.b16 %v3681
    %v4454 = vunpack.c.l.b16 %v3682
    %v4455 = vunpack.c.h.b16 %v3682
    %v4456 = vunpack.c.l.b16 %v3683
    %v4457 = vunpack.c.h.b16 %v3683
    %v4458 = vunpack.c.l.b16 %v3684
    %v4459 = vunpack.c.h.b16 %v3684
    %v4460 = vunpack.c.l.b16 %v3685
    %v4461 = vunpack.c.h.b16 %v3685
    %v4462 = vunpack.c.l.b16 %v3686
    %v4463 = vunpack.c.h.b16 %v3686
    %v4464 = vunpack.c.l.b16 %v3687
    %v4465 = vunpack.c.h.b16 %v3687
    %v4466 = vunpack.c.l.b16 %v3688
    %v4467 = vunpack.c.h.b16 %v3688
    %v4468 = vunpack.c.l.b16 %v3689
    %v4469 = vunpack.c.h.b16 %v3689
    %v4470 = vunpack.c.l.b16 %v3690
    %v4471 = vunpack.c.h.b16 %v3690
    %v4472 = vunpack.c.l.b16 %v3691
    %v4473 = vunpack.c.h.b16 %v3691
    %v4474 = vunpack.c.l.b16 %v3692
    %v4475 = vunpack.c.h.b16 %v3692
    %v4476 = vunpack.c.l.b16 %v3693
    %v4477 = vunpack.c.h.b16 %v3693
    %v4478 = vunpack.c.l.b16 %v3694
    %v4479 = vunpack.c.h.b16 %v3694
    %v4480 = vunpack.c.l.b16 %v3695
    %v4481 = vunpack.c.h.b16 %v3695
    %v4482 = vunpack.c.l.b16 %v3696
    %v4483 = vunpack.c.h.b16 %v3696
    %v4484 = vunpack.c.l.b16 %v3697
    %v4485 = vunpack.c.h.b16 %v3697
    %v4486 = vunpack.c.l.b16 %v3698
    %v4487 = vunpack.c.h.b16 %v3698
    %v4488 = vunpack.c.l.b16 %v3699
    %v4489 = vunpack.c.h.b16 %v3699
    %v4490 = vunpack.c.l.b16 %v3700
    %v4491 = vunpack.c.h.b16 %v3700
    %v4492 = vunpack.c.l.b16 %v3701
    %v4493 = vunpack.c.h.b16 %v3701
    %v4494 = vunpack.c.l.b16 %v3702
    %v4495 = vunpack.c.h.b16 %v3702
    %v4496 = vunpack.c.l.b16 %v3703
    %v4497 = vunpack.c.h.b16 %v3703
    %v4498 = vunpack.c.l.b16 %v3704
    %v4499 = vunpack.c.h.b16 %v3704
    %v4500 = vunpack.c.l.b16 %v3705
    %v4501 = vunpack.c.h.b16 %v3705
    %v4502 = vunpack.c.l.b16 %v3706
    %v4503 = vunpack.c.h.b16 %v3706
    %v4504 = vunpack.c.l.b16 %v3707
    %v4505 = vunpack.c.h.b16 %v3707
    %v4506 = vunpack.c.l.b16 %v3708
    %v4507 = vunpack.c.h.b16 %v3708
    %v4508 = vunpack.c.l.b16 %v3709
    %v4509 = vunpack.c.h.b16 %v3709
    %v4510 = vunpack.c.l.b16 %v3710
    %v4511 = vunpack.c.h.b16 %v3710
    %v4512 = vunpack.c.l.b16 %v3711
    %v4513 = vunpack.c.h.b16 %v3711
    %v4514 = vunpack.c.l.b16 %v3712
    %v4515 = vunpack.c.h.b16 %v3712
    %v4516 = vunpack.c.l.b16 %v3713
    %v4517 = vunpack.c.h.b16 %v3713
    %v4518 = vunpack.c.l.b16 %v3714
    %v4519 = vunpack.c.h.b16 %v3714
    %v4520 = vunpack.c.l.b16 %v3715
    %v4521 = vunpack.c.h.b16 %v3715
    %v4522 = vunpack.c.l.b16 %v3716
    %v4523 = vunpack.c.h.b16 %v3716
    %v4524 = vunpack.c.l.b16 %v3717
    %v4525 = vunpack.c.h.b16 %v3717
    %v4526 = vunpack.c.l.b16 %v3718
    %v4527 = vunpack.c.h.b16 %v3718
    %v4528 = vunpack.c.l.b16 %v3719
    %v4529 = vunpack.c.h.b16 %v3719
    %v4530 = vunpack.c.l.b16 %v3720
    %v4531 = vunpack.c.h.b16 %v3720
    %v4532 = vunpack.c.l.b16 %v3721
    %v4533 = vunpack.c.h.b16 %v3721
    %v4534 = vunpack.c.l.b16 %v3722
    %v4535 = vunpack.c.h.b16 %v3722
    %v4536 = vunpack.c.l.b16 %v3723
    %v4537 = vunpack.c.h.b16 %v3723
    %v4538 = vunpack.c.l.b16 %v3724
    %v4539 = vunpack.c.h.b16 %v3724
    %v4540 = vunpack.c.l.b16 %v3725
    %v4541 = vunpack.c.h.b16 %v3725
    %v4542 = vunpack.c.l.b16 %v3726
    %v4543 = vunpack.c.h.b16 %v3726
    %v4544 = vunpack.c.l.b16 %v3727
    %v4545 = vunpack.c.h.b16 %v3727
    %v4546 = vunpack.c.l.b16 %v3728
    %v4547 = vunpack.c.h.b16 %v3728
    %v4548 = vunpack.c.l.b16 %v3729
    %v4549 = vunpack.c.h.b16 %v3729
    %v4550 = vunpack.c.l.b16 %v3730
    %v4551 = vunpack.c.h.b16 %v3730
    %v4552 = vunpack.c.l.b16 %v3731
    %v4553 = vunpack.c.h.b16 %v3731
    %v4554 = vunpack.c.l.b16 %v3732
    %v4555 = vunpack.c.h.b16 %v3732
    %v4556 = vunpack.c.l.b16 %v3733
    %v4557 = vunpack.c.h.b16 %v3733
    %v4558 = vunpack.c.l.b16 %v3734
    %v4559 = vunpack.c.h.b16 %v3734
    %v4560 = vunpack.c.l.b16 %v3735
    %v4561 = vunpack.c.h.b16 %v3735
    %v4562 = vunpack.c.l.b16 %v3736
    %v4563 = vunpack.c.h.b16 %v3736
    %v4564 = vunpack.c.l.b16 %v3737
    %v4565 = vunpack.c.h.b16 %v3737
    %v4566 = vunpack.c.l.b16 %v3738
    %v4567 = vunpack.c.h.b16 %v3738
    %v4568 = vunpack.c.l.b16 %v3739
    %v4569 = vunpack.c.h.b16 %v3739
    %v4570 = vunpack.c.l.b16 %v3740
    %v4571 = vunpack.c.h.b16 %v3740
    %v4572 = vunpack.c.l.b16 %v3741
    %v4573 = vunpack.c.h.b16 %v3741
    %v4574 = vunpack.c.l.b16 %v3742
    %v4575 = vunpack.c.h.b16 %v3742
    %v4576 = vunpack.c.l.b16 %v3743
    %v4577 = vunpack.c.h.b16 %v3743
    %v4578 = vunpack.c.l.b16 %v3744
    %v4579 = vunpack.c.h.b16 %v3744
    %v4580 = vunpack.c.l.b16 %v3745
    %v4581 = vunpack.c.h.b16 %v3745
    %v4582 = vunpack.c.l.b16 %v3746
    %v4583 = vunpack.c.h.b16 %v3746
    %v4584 = vunpack.c.l.b16 %v3747
    %v4585 = vunpack.c.h.b16 %v3747
    %v4586 = vunpack.c.l.b16 %v3748
    %v4587 = vunpack.c.h.b16 %v3748
    %v4588 = vunpack.c.l.b16 %v3749
    %v4589 = vunpack.c.h.b16 %v3749
    %v4590 = vunpack.c.l.b16 %v3750
    %v4591 = vunpack.c.h.b16 %v3750
    %v4592 = vunpack.c.l.b16 %v3751
    %v4593 = vunpack.c.h.b16 %v3751
    %v4594 = vunpack.c.l.b16 %v3752
    %v4595 = vunpack.c.h.b16 %v3752
    %v4596 = vunpack.c.l.b16 %v3753
    %v4597 = vunpack.c.h.b16 %v3753
    %v4598 = vunpack.c.l.b16 %v3754
    %v4599 = vunpack.c.h.b16 %v3754
    %v4600 = vunpack.c.l.b16 %v3755
    %v4601 = vunpack.c.h.b16 %v3755
    %v4602 = vunpack.c.l.b16 %v3756
    %v4603 = vunpack.c.h.b16 %v3756
    %v4604 = vunpack.c.l.b16 %v3757
    %v4605 = vunpack.c.h.b16 %v3757
    %v4606 = vunpack.c.l.b16 %v3758
    %v4607 = vunpack.c.h.b16 %v3758
    %v4608 = vunpack.c.l.b16 %v3759
    %v4609 = vunpack.c.h.b16 %v3759
    %v4610 = vunpack.c.l.b16 %v3760
    %v4611 = vunpack.c.h.b16 %v3760
    %v4612 = vunpack.c.l.b16 %v3761
    %v4613 = vunpack.c.h.b16 %v3761
    %v4614 = vunpack.c.l.b16 %v3762
    %v4615 = vunpack.c.h.b16 %v3762
    %v4616 = vunpack.c.l.b16 %v3763
    %v4617 = vunpack.c.h.b16 %v3763
    %v4618 = vunpack.c.l.b16 %v3764
    %v4619 = vunpack.c.h.b16 %v3764
    %v4620 = vunpack.c.l.b16 %v3765
    %v4621 = vunpack.c.h.b16 %v3765
    %v4622 = vunpack.c.l.b16 %v3766
    %v4623 = vunpack.c.h.b16 %v3766
    %v4624 = vunpack.c.l.b16 %v3767
    %v4625 = vunpack.c.h.b16 %v3767
    %v4626 = vunpack.c.l.b16 %v3768
    %v4627 = vunpack.c.h.b16 %v3768
    %v4628 = vunpack.c.l.b16 %v3769
    %v4629 = vunpack.c.h.b16 %v3769
    %v4630 = vunpack.c.l.b16 %v3770
    %v4631 = vunpack.c.h.b16 %v3770
    %v4632 = vunpack.c.l.b16 %v3771
    %v4633 = vunpack.c.h.b16 %v3771
    %v4634 = vunpack.c.l.b16 %v3772
    %v4635 = vunpack.c.h.b16 %v3772
    %v4636 = vunpack.c.l.b16 %v3773
    %v4637 = vunpack.c.h.b16 %v3773
    %v4638 = vunpack.c.l.b16 %v3774
    %v4639 = vunpack.c.h.b16 %v3774
    %v4640 = vunpack.c.l.b16 %v3775
    %v4641 = vunpack.c.h.b16 %v3775
    %v4642 = vunpack.c.l.b16 %v3776
    %v4643 = vunpack.c.h.b16 %v3776
    %v4644 = vunpack.c.l.b16 %v3777
    %v4645 = vunpack.c.h.b16 %v3777
    %v4646 = vunpack.c.l.b16 %v3778
    %v4647 = vunpack.c.h.b16 %v3778
    %v4648 = vunpack.c.l.b16 %v3779
    %v4649 = vunpack.c.h.b16 %v3779
    %v4650 = vunpack.c.l.b16 %v3780
    %v4651 = vunpack.c.h.b16 %v3780
    %v4652 = vunpack.c.l.b16 %v3781
    %v4653 = vunpack.c.h.b16 %v3781
    %v4654 = vunpack.c.l.b16 %v3782
    %v4655 = vunpack.c.h.b16 %v3782
    %v4656 = vunpack.c.l.b16 %v3783
    %v4657 = vunpack.c.h.b16 %v3783
    %v4658 = vunpack.c.l.b16 %v3784
    %v4659 = vunpack.c.h.b16 %v3784
    %v4660 = vunpack.c.l.b16 %v3785
    %v4661 = vunpack.c.h.b16 %v3785
    %v4662 = vunpack.c.l.b16 %v3786
    %v4663 = vunpack.c.h.b16 %v3786
    %v4664 = vunpack.c.l.b16 %v3787
    %v4665 = vunpack.c.h.b16 %v3787
    %v4666 = vunpack.c.l.b16 %v3788
    %v4667 = vunpack.c.h.b16 %v3788
    %v4668 = vunpack.c.l.b16 %v3789
    %v4669 = vunpack.c.h.b16 %v3789
    %v4670 = vunpack.c.l.b16 %v3790
    %v4671 = vunpack.c.h.b16 %v3790
    %v4672 = vunpack.c.l.b16 %v3791
    %v4673 = vunpack.c.h.b16 %v3791
    %v4674 = vunpack.c.l.b16 %v3792
    %v4675 = vunpack.c.h.b16 %v3792
    %v4676 = vunpack.c.l.b16 %v3793
    %v4677 = vunpack.c.h.b16 %v3793
    %v4678 = vunpack.c.l.b16 %v3794
    %v4679 = vunpack.c.h.b16 %v3794
    %v4680 = vunpack.c.l.b16 %v3795
    %v4681 = vunpack.c.h.b16 %v3795
    %v4682 = vunpack.c.l.b16 %v3796
    %v4683 = vunpack.c.h.b16 %v3796
    %v4684 = vunpack.c.l.b16 %v3797
    %v4685 = vunpack.c.h.b16 %v3797
    %v4686 = vunpack.c.l.b16 %v3798
    %v4687 = vunpack.c.h.b16 %v3798
    %v4688 = vunpack.c.l.b16 %v3799
    %v4689 = vunpack.c.h.b16 %v3799
    %v4690 = vunpack.c.l.b16 %v3800
    %v4691 = vunpack.c.h.b16 %v3800
    %v4692 = vunpack.c.l.b16 %v3801
    %v4693 = vunpack.c.h.b16 %v3801
    %v4694 = vunpack.c.l.b16 %v3802
    %v4695 = vunpack.c.h.b16 %v3802
    %v4696 = vunpack.c.l.b16 %v3803
    %v4697 = vunpack.c.h.b16 %v3803
    %v4698 = vunpack.c.l.b16 %v3804
    %v4699 = vunpack.c.h.b16 %v3804
    %v4700 = vunpack.c.l.b16 %v3805
    %v4701 = vunpack.c.h.b16 %v3805
    %v4702 = vpack.c.b16 %v4132, %v4126
    %v4703 = vpack.c.b16 %v4133, %v4127
    %v4704 = vpack.c.b16 %v4134, %v4128
    %v4705 = vpack.c.b16 %v4135, %v4129
    %v4706 = vpack.c.b16 %v4136, %v4130
    %v4707 = vpack.c.b16 %v4137, %v4131
    %v4708 = vpack.c.b16 %v4144, %v4138
    %v4709 = vpack.c.b16 %v4145, %v4139
    %v4710 = vpack.c.b16 %v4146, %v4140
    %v4711 = vpack.c.b16 %v4147, %v4141
    %v4712 = vpack.c.b16 %v4148, %v4142
    %v4713 = vpack.c.b16 %v4149, %v4143
    %v4714 = vpack.c.b16 %v4156, %v4150
    %v4715 = vpack.c.b16 %v4157, %v4151
    %v4716 = vpack.c.b16 %v4158, %v4152
    %v4717 = vpack.c.b16 %v4159, %v4153
    %v4718 = vpack.c.b16 %v4160, %v4154
    %v4719 = vpack.c.b16 %v4161, %v4155
    %v4720 = vpack.c.b16 %v4168, %v4162
    %v4721 = vpack.c.b16 %v4169, %v4163
    %v4722 = vpack.c.b16 %v4170, %v4164
    %v4723 = vpack.c.b16 %v4171, %v4165
    %v4724 = vpack.c.b16 %v4172, %v4166
    %v4725 = vpack.c.b16 %v4173, %v4167
    %v4726 = vpack.c.b16 %v4180, %v4174
    %v4727 = vpack.c.b16 %v4181, %v4175
    %v4728 = vpack.c.b16 %v4182, %v4176
    %v4729 = vpack.c.b16 %v4183, %v4177
    %v4730 = vpack.c.b16 %v4184, %v4178
    %v4731 = vpack.c.b16 %v4185, %v4179
    %v4732 = vpack.c.b16 %v4192, %v4186
    %v4733 = vpack.c.b16 %v4193, %v4187
    %v4734 = vpack.c.b16 %v4194, %v4188
    %v4735 = vpack.c.b16 %v4195, %v4189
    %v4736 = vpack.c.b16 %v4196, %v4190
    %v4737 = vpack.c.b16 %v4197, %v4191
    %v4738 = vpack.c.b16 %v4204, %v4198
    %v4739 = vpack.c.b16 %v4205, %v4199
    %v4740 = vpack.c.b16 %v4206, %v4200
    %v4741 = vpack.c.b16 %v4207, %v4201
    %v4742 = vpack.c.b16 %v4208, %v4202
    %v4743 = vpack.c.b16 %v4209, %v4203
    %v4744 = vpack.c.b16 %v4216, %v4210
    %v4745 = vpack.c.b16 %v4217, %v4211
    %v4746 = vpack.c.b16 %v4218, %v4212
    %v4747 = vpack.c.b16 %v4219, %v4213
    %v4748 = vpack.c.b16 %v4220, %v4214
    %v4749 = vpack.c.b16 %v4221, %v4215
    %v4750 = vpack.c.b16 %v4228, %v4222
    %v4751 = vpack.c.b16 %v4229, %v4223
    %v4752 = vpack.c.b16 %v4230, %v4224
    %v4753 = vpack.c.b16 %v4231, %v4225
    %v4754 = vpack.c.b16 %v4232, %v4226
    %v4755 = vpack.c.b16 %v4233, %v4227
    %v4756 = vpack.c.b16 %v4240, %v4234
    %v4757 = vpack.c.b16 %v4241, %v4235
    %v4758 = vpack.c.b16 %v4242, %v4236
    %v4759 = vpack.c.b16 %v4243, %v4237
    %v4760 = vpack.c.b16 %v4244, %v4238
    %v4761 = vpack.c.b16 %v4245, %v4239
    %v4762 = vpack.c.b16 %v4252, %v4246
    %v4763 = vpack.c.b16 %v4253, %v4247
    %v4764 = vpack.c.b16 %v4254, %v4248
    %v4765 = vpack.c.b16 %v4255, %v4249
    %v4766 = vpack.c.b16 %v4256, %v4250
    %v4767 = vpack.c.b16 %v4257, %v4251
    %v4768 = vpack.c.b16 %v4264, %v4258
    %v4769 = vpack.c.b16 %v4265, %v4259
    %v4770 = vpack.c.b16 %v4266, %v4260
    %v4771 = vpack.c.b16 %v4267, %v4261
    %v4772 = vpack.c.b16 %v4268, %v4262
    %v4773 = vpack.c.b16 %v4269, %v4263
    %v4774 = vpack.c.b16 %v4276, %v4270
    %v4775 = vpack.c.b16 %v4277, %v4271
    %v4776 = vpack.c.b16 %v4278, %v4272
    %v4777 = vpack.c.b16 %v4279, %v4273
    %v4778 = vpack.c.b16 %v4280, %v4274
    %v4779 = vpack.c.b16 %v4281, %v4275
    %v4780 = vpack.c.b16 %v4288, %v4282
    %v4781 = vpack.c.b16 %v4289, %v4283
    %v4782 = vpack.c.b16 %v4290, %v4284
    %v4783 = vpack.c.b16 %v4291, %v4285
    %v4784 = vpack.c.b16 %v4292, %v4286
    %v4785 = vpack.c.b16 %v4293, %v4287
    %v4786 = vpack.c.b16 %v4300, %v4294
    %v4787 = vpack.c.b16 %v4301, %v4295
    %v4788 = vpack.c.b16 %v4302, %v4296
    %v4789 = vpack.c.b16 %v4303, %v4297
    %v4790 = vpack.c.b16 %v4304, %v4298
    %v4791 = vpack.c.b16 %v4305, %v4299
    %v4792 = vpack.c.b16 %v4312, %v4306
    %v4793 = vpack.c.b16 %v4313, %v4307
    %v4794 = vpack.c.b16 %v4314, %v4308
    %v4795 = vpack.c.b16 %v4315, %v4309
    %v4796 = vpack.c.b16 %v4316, %v4310
    %v4797 = vpack.c.b16 %v4317, %v4311
    %v4798 = vpack.c.b16 %v4324, %v4318
    %v4799 = vpack.c.b16 %v4325, %v4319
    %v4800 = vpack.c.b16 %v4326, %v4320
    %v4801 = vpack.c.b16 %v4327, %v4321
    %v4802 = vpack.c.b16 %v4328, %v4322
    %v4803 = vpack.c.b16 %v4329, %v4323
    %v4804 = vpack.c.b16 %v4336, %v4330
    %v4805 = vpack.c.b16 %v4337, %v4331
    %v4806 = vpack.c.b16 %v4338, %v4332
    %v4807 = vpack.c.b16 %v4339, %v4333
    %v4808 = vpack.c.b16 %v4340, %v4334
    %v4809 = vpack.c.b16 %v4341, %v4335
    %v4810 = vpack.c.b16 %v4348, %v4342
    %v4811 = vpack.c.b16 %v4349, %v4343
    %v4812 = vpack.c.b16 %v4350, %v4344
    %v4813 = vpack.c.b16 %v4351, %v4345
    %v4814 = vpack.c.b16 %v4352, %v4346
    %v4815 = vpack.c.b16 %v4353, %v4347
    %v4816 = vpack.c.b16 %v4360, %v4354
    %v4817 = vpack.c.b16 %v4361, %v4355
    %v4818 = vpack.c.b16 %v4362, %v4356
    %v4819 = vpack.c.b16 %v4363, %v4357
    %v4820 = vpack.c.b16 %v4364, %v4358
    %v4821 = vpack.c.b16 %v4365, %v4359
    %v4822 = vpack.c.b16 %v4372, %v4366
    %v4823 = vpack.c.b16 %v4373, %v4367
    %v4824 = vpack.c.b16 %v4374, %v4368
    %v4825 = vpack.c.b16 %v4375, %v4369
    %v4826 = vpack.c.b16 %v4376, %v4370
    %v4827 = vpack.c.b16 %v4377, %v4371
    %v4828 = vpack.c.b16 %v4384, %v4378
    %v4829 = vpack.c.b16 %v4385, %v4379
    %v4830 = vpack.c.b16 %v4386, %v4380
    %v4831 = vpack.c.b16 %v4387, %v4381
    %v4832 = vpack.c.b16 %v4388, %v4382
    %v4833 = vpack.c.b16 %v4389, %v4383
    %v4834 = vpack.c.b16 %v4396, %v4390
    %v4835 = vpack.c.b16 %v4397, %v4391
    %v4836 = vpack.c.b16 %v4398, %v4392
    %v4837 = vpack.c.b16 %v4399, %v4393
    %v4838 = vpack.c.b16 %v4400, %v4394
    %v4839 = vpack.c.b16 %v4401, %v4395
    %v4840 = vpack.c.b16 %v4408, %v4402
    %v4841 = vpack.c.b16 %v4409, %v4403
    %v4842 = vpack.c.b16 %v4410, %v4404
    %v4843 = vpack.c.b16 %v4411, %v4405
    %v4844 = vpack.c.b16 %v4412, %v4406
    %v4845 = vpack.c.b16 %v4413, %v4407
    %v4846 = vpack.c.b16 %v4420, %v4414
    %v4847 = vpack.c.b16 %v4421, %v4415
    %v4848 = vpack.c.b16 %v4422, %v4416
    %v4849 = vpack.c.b16 %v4423, %v4417
    %v4850 = vpack.c.b16 %v4424, %v4418
    %v4851 = vpack.c.b16 %v4425, %v4419
    %v4852 = vpack.c.b16 %v4432, %v4426
    %v4853 = vpack.c.b16 %v4433, %v4427
    %v4854 = vpack.c.b16 %v4434, %v4428
    %v4855 = vpack.c.b16 %v4435, %v4429
    %v4856 = vpack.c.b16 %v4436, %v4430
    %v4857 = vpack.c.b16 %v4437, %v4431
    %v4858 = vpack.c.b16 %v4444, %v4438
    %v4859 = vpack.c.b16 %v4445, %v4439
    %v4860 = vpack.c.b16 %v4446, %v4440
    %v4861 = vpack.c.b16 %v4447, %v4441
    %v4862 = vpack.c.b16 %v4448, %v4442
    %v4863 = vpack.c.b16 %v4449, %v4443
    %v4864 = vpack.c.b16 %v4456, %v4450
    %v4865 = vpack.c.b16 %v4457, %v4451
    %v4866 = vpack.c.b16 %v4458, %v4452
    %v4867 = vpack.c.b16 %v4459, %v4453
    %v4868 = vpack.c.b16 %v4460, %v4454
    %v4869 = vpack.c.b16 %v4461, %v4455
    %v4870 = vpack.c.b16 %v4468, %v4462
    %v4871 = vpack.c.b16 %v4469, %v4463
    %v4872 = vpack.c.b16 %v4470, %v4464
    %v4873 = vpack.c.b16 %v4471, %v4465
    %v4874 = vpack.c.b16 %v4472, %v4466
    %v4875 = vpack.c.b16 %v4473, %v4467
    %v4876 = vpack.c.b16 %v4480, %v4474
    %v4877 = vpack.c.b16 %v4481, %v4475
    %v4878 = vpack.c.b16 %v4482, %v4476
    %v4879 = vpack.c.b16 %v4483, %v4477
    %v4880 = vpack.c.b16 %v4484, %v4478
    %v4881 = vpack.c.b16 %v4485, %v4479
    %v4882 = vpack.c.b16 %v4492, %v4486
    %v4883 = vpack.c.b16 %v4493, %v4487
    %v4884 = vpack.c.b16 %v4494, %v4488
    %v4885 = vpack.c.b16 %v4495, %v4489
    %v4886 = vpack.c.b16 %v4496, %v4490
    %v4887 = vpack.c.b16 %v4497, %v4491
    %v4888 = vpack.c.b16 %v4504, %v4498
    %v4889 = vpack.c.b16 %v4505, %v4499
    %v4890 = vpack.c.b16 %v4506, %v4500
    %v4891 = vpack.c.b16 %v4507, %v4501
    %v4892 = vpack.c.b16 %v4508, %v4502
    %v4893 = vpack.c.b16 %v4509, %v4503
    %v4894 = vpack.c.b16 %v4516, %v4510
    %v4895 = vpack.c.b16 %v4517, %v4511
    %v4896 = vpack.c.b16 %v4518, %v4512
    %v4897 = vpack.c.b16 %v4519, %v4513
    %v4898 = vpack.c.b16 %v4520, %v4514
    %v4899 = vpack.c.b16 %v4521, %v4515
    %v4900 = vpack.c.b16 %v4528, %v4522
    %v4901 = vpack.c.b16 %v4529, %v4523
    %v4902 = vpack.c.b16 %v4530, %v4524
    %v4903 = vpack.c.b16 %v4531, %v4525
    %v4904 = vpack.c.b16 %v4532, %v4526
    %v4905 = vpack.c.b16 %v4533, %v4527
    %v4906 = vpack.c.b16 %v4540, %v4534
    %v4907 = vpack.c.b16 %v4541, %v4535
    %v4908 = vpack.c.b16 %v4542, %v4536
    %v4909 = vpack.c.b16 %v4543, %v4537
    %v4910 = vpack.c.b16 %v4544, %v4538
    %v4911 = vpack.c.b16 %v4545, %v4539
    %v4912 = vpack.c.b16 %v4552, %v4546
    %v4913 = vpack.c.b16 %v4553, %v4547
    %v4914 = vpack.c.b16 %v4554, %v4548
    %v4915 = vpack.c.b16 %v4555, %v4549
    %v4916 = vpack.c.b16 %v4556, %v4550
    %v4917 = vpack.c.b16 %v4557, %v4551
    %v4918 = vpack.c.b16 %v4564, %v4558
    %v4919 = vpack.c.b16 %v4565, %v4559
    %v4920 = vpack.c.b16 %v4566, %v4560
    %v4921 = vpack.c.b16 %v4567, %v4561
    %v4922 = vpack.c.b16 %v4568, %v4562
    %v4923 = vpack.c.b16 %v4569, %v4563
    %v4924 = vpack.c.b16 %v4576, %v4570
    %v4925 = vpack.c.b16 %v4577, %v4571
    %v4926 = vpack.c.b16 %v4578, %v4572
    %v4927 = vpack.c.b16 %v4579, %v4573
    %v4928 = vpack.c.b16 %v4580, %v4574
    %v4929 = vpack.c.b16 %v4581, %v4575
    %v4930 = vpack.c.b16 %v4588, %v4582
    %v4931 = vpack.c.b16 %v4589, %v4583
    %v4932 = vpack.c.b16 %v4590, %v4584
    %v4933 = vpack.c.b16 %v4591, %v4585
    %v4934 = vpack.c.b16 %v4592, %v4586
    %v4935 = vpack.c.b16 %v4593, %v4587
    %v4936 = vpack.c.b16 %v4600, %v4594
    %v4937 = vpack.c.b16 %v4601, %v4595
    %v4938 = vpack.c.b16 %v4602, %v4596
    %v4939 = vpack.c.b16 %v4603, %v4597
    %v4940 = vpack.c.b16 %v4604, %v4598
    %v4941 = vpack.c.b16 %v4605, %v4599
    %v4942 = vpack.c.b16 %v4612, %v4606
    %v4943 = vpack.c.b16 %v4613, %v4607
    %v4944 = vpack.c.b16 %v4614, %v4608
    %v4945 = vpack.c.b16 %v4615, %v4609
    %v4946 = vpack.c.b16 %v4616, %v4610
    %v4947 = vpack.c.b16 %v4617, %v4611
    %v4948 = vpack.c.b16 %v4624, %v4618
    %v4949 = vpack.c.b16 %v4625, %v4619
    %v4950 = vpack.c.b16 %v4626, %v4620
    %v4951 = vpack.c.b16 %v4627, %v4621
    %v4952 = vpack.c.b16 %v4628, %v4622
    %v4953 = vpack.c.b16 %v4629, %v4623
    %v4954 = vpack.c.b16 %v4636, %v4630
    %v4955 = vpack.c.b16 %v4637, %v4631
    %v4956 = vpack.c.b16 %v4638, %v4632
    %v4957 = vpack.c.b16 %v4639, %v4633
    %v4958 = vpack.c.b16 %v4640, %v4634
    %v4959 = vpack.c.b16 %v4641, %v4635
    %v4960 = vpack.c.b16 %v4648, %v4642
    %v4961 = vpack.c.b16 %v4649, %v4643
    %v4962 = vpack.c.b16 %v4650, %v4644
    %v4963 = vpack.c.b16 %v4651, %v4645
    %v4964 = vpack.c.b16 %v4652, %v4646
    %v4965 = vpack.c.b16 %v4653, %v4647
    %v4966 = vpack.c.b16 %v4660, %v4654
    %v4967 = vpack.c.b16 %v4661, %v4655
    %v4968 = vpack.c.b16 %v4662, %v4656
    %v4969 = vpack.c.b16 %v4663, %v4657
    %v4970 = vpack.c.b16 %v4664, %v4658
    %v4971 = vpack.c.b16 %v4665, %v4659
    %v4972 = vpack.c.b16 %v4672, %v4666
    %v4973 = vpack.c.b16 %v4673, %v4667
    %v4974 = vpack.c.b16 %v4674, %v4668
    %v4975 = vpack.c.b16 %v4675, %v4669
    %v4976 = vpack.c.b16 %v4676, %v4670
    %v4977 = vpack.c.b16 %v4677, %v4671
    %v4978 = vpack.c.b16 %v4684, %v4678
    %v4979 = vpack.c.b16 %v4685, %v4679
    %v4980 = vpack.c.b16 %v4686, %v4680
    %v4981 = vpack.c.b16 %v4687, %v4681
    %v4982 = vpack.c.b16 %v4688, %v4682
    %v4983 = vpack.c.b16 %v4689, %v4683
    %v4984 = vpack.c.b16 %v4696, %v4690
    %v4985 = vpack.c.b16 %v4697, %v4691
    %v4986 = vpack.c.b16 %v4698, %v4692
    %v4987 = vpack.c.b16 %v4699, %v4693
    %v4988 = vpack.c.b16 %v4700, %v4694
    %v4989 = vpack.c.b16 %v4701, %v4695
    %5278 = vmatprep.subr.bf16.mxu0 %v4745
    %5279 = vmatpush1.bf16.msra.mxu0 %v4744
    %5280 = vmatprep.subr.bf16.mxu0 %v4739
    %5281 = vmatpush1.bf16.msra.mxu0 %v4738
    %5282 = vmatprep.subr.bf16.mxu0 %v4733
    %5283 = vmatpush1.bf16.msra.mxu0 %v4732
    %5284 = vmatprep.subr.bf16.mxu0 %v4727
    %5285 = vmatpush1.bf16.msra.mxu0 %v4726
    %5286 = vmatprep.subr.bf16.mxu0 %v4721
    %5287 = vmatpush1.bf16.msra.mxu0 %v4720
    %5288 = vmatprep.subr.bf16.mxu0 %v4715
    %5289 = vmatpush1.bf16.msra.mxu0 %v4714
    %5290 = vmatprep.subr.bf16.mxu0 %v4709
    %5291 = vmatpush1.bf16.msra.mxu0 %v4708
    %5292 = vmatprep.subr.bf16.mxu0 %v4703
    %5293 = vmatpush1.bf16.msra.mxu0 %v4702
    %5294 = vmatprep.subr.bf16.mxu0 %v4793
    %5295 = vmatpush2.bf16.msra.mxu0 %v4792
    %5296 = vmatprep.subr.bf16.mxu0 %v4787
    %5297 = vmatpush2.bf16.msra.mxu0 %v4786
    %5298 = vmatprep.subr.bf16.mxu0 %v4781
    %5299 = vmatpush2.bf16.msra.mxu0 %v4780
    %5300 = vmatprep.subr.bf16.mxu0 %v4775
    %5301 = vmatpush2.bf16.msra.mxu0 %v4774
    %5302 = vmatprep.subr.bf16.mxu0 %v4769
    %5303 = vmatpush2.bf16.msra.mxu0 %v4768
    %5304 = vmatprep.subr.bf16.mxu0 %v4763
    %5305 = vmatpush2.bf16.msra.mxu0 %v4762
    %5306 = vmatprep.subr.bf16.mxu0 %v4757
    %5307 = vmatpush2.bf16.msra.mxu0 %v4756
    %5308 = vmatprep.subr.bf16.mxu0 %v4751
    %5309 = vmatpush2.bf16.msra.mxu0 %v4750
    %5310 = vmatprep.mubr.bf16.mxu0 %v3513
    %5311 = vmatmul.mubr.bf16.gmra.mxu0 %v3512
    %v5312 = vpop.f32.mrf.mxu0
    %v5313 = vadd.f32 %v3811, %v5312
    %v5314 = vpop.f32.mrf.mxu0
    %v5315 = vadd.f32 %v3815, %v5314
    %v5316 = vpop.f32.mrf.mxu0
    %v5317 = vpop.f32.mrf.mxu0
    %5318 = vdwg.mxu0
    %5319 = vmatprep.subr.bf16.mxu0 %v4841
    %5320 = vmatpush1.bf16.msra.mxu0 %v4840
    %5321 = vmatprep.subr.bf16.mxu0 %v4835
    %5322 = vmatpush1.bf16.msra.mxu0 %v4834
    %5323 = vmatprep.subr.bf16.mxu0 %v4829
    %5324 = vmatpush1.bf16.msra.mxu0 %v4828
    %5325 = vmatprep.subr.bf16.mxu0 %v4823
    %5326 = vmatpush1.bf16.msra.mxu0 %v4822
    %5327 = vmatprep.subr.bf16.mxu0 %v4817
    %5328 = vmatpush1.bf16.msra.mxu0 %v4816
    %5329 = vmatprep.subr.bf16.mxu0 %v4811
    %5330 = vmatpush1.bf16.msra.mxu0 %v4810
    %5331 = vmatprep.subr.bf16.mxu0 %v4805
    %5332 = vmatpush1.bf16.msra.mxu0 %v4804
    %5333 = vmatprep.subr.bf16.mxu0 %v4799
    %5334 = vmatpush1.bf16.msra.mxu0 %v4798
    %5335 = vmatprep.subr.bf16.mxu0 %v4889
    %5336 = vmatpush2.bf16.msra.mxu0 %v4888
    %5337 = vmatprep.subr.bf16.mxu0 %v4883
    %5338 = vmatpush2.bf16.msra.mxu0 %v4882
    %5339 = vmatprep.subr.bf16.mxu0 %v4877
    %5340 = vmatpush2.bf16.msra.mxu0 %v4876
    %5341 = vmatprep.subr.bf16.mxu0 %v4871
    %5342 = vmatpush2.bf16.msra.mxu0 %v4870
    %5343 = vmatprep.subr.bf16.mxu0 %v4865
    %5344 = vmatpush2.bf16.msra.mxu0 %v4864
    %5345 = vmatprep.subr.bf16.mxu0 %v4859
    %5346 = vmatpush2.bf16.msra.mxu0 %v4858
    %5347 = vmatprep.subr.bf16.mxu0 %v4853
    %5348 = vmatpush2.bf16.msra.mxu0 %v4852
    %5349 = vmatprep.subr.bf16.mxu0 %v4847
    %5350 = vmatpush2.bf16.msra.mxu0 %v4846
    %5351 = vmatprep.mubr.bf16.mxu0 %v3515
    %5352 = vmatmul.mubr.bf16.gmra.mxu0 %v3514
    %v5353 = vpop.f32.mrf.mxu0
    %v5354 = vadd.f32 %v5313, %v5353
    %v5355 = vpop.f32.mrf.mxu0
    %v5356 = vadd.f32 %v5315, %v5355
    %v5357 = vpop.f32.mrf.mxu0
    %v5358 = vpop.f32.mrf.mxu0
    %5359 = vdwg.mxu0
    %5360 = vmatprep.subr.bf16.mxu0 %v4937
    %5361 = vmatpush1.bf16.msra.mxu0 %v4936
    %5362 = vmatprep.subr.bf16.mxu0 %v4931
    %5363 = vmatpush1.bf16.msra.mxu0 %v4930
    %5364 = vmatprep.subr.bf16.mxu0 %v4925
    %5365 = vmatpush1.bf16.msra.mxu0 %v4924
    %5366 = vmatprep.subr.bf16.mxu0 %v4919
    %5367 = vmatpush1.bf16.msra.mxu0 %v4918
    %5368 = vmatprep.subr.bf16.mxu0 %v4913
    %5369 = vmatpush1.bf16.msra.mxu0 %v4912
    %5370 = vmatprep.subr.bf16.mxu0 %v4907
    %5371 = vmatpush1.bf16.msra.mxu0 %v4906
    %5372 = vmatprep.subr.bf16.mxu0 %v4901
    %5373 = vmatpush1.bf16.msra.mxu0 %v4900
    %5374 = vmatprep.subr.bf16.mxu0 %v4895
    %5375 = vmatpush1.bf16.msra.mxu0 %v4894
    %5376 = vmatprep.subr.bf16.mxu0 %v4985
    %5377 = vmatpush2.bf16.msra.mxu0 %v4984
    %5378 = vmatprep.subr.bf16.mxu0 %v4979
    %5379 = vmatpush2.bf16.msra.mxu0 %v4978
    %5380 = vmatprep.subr.bf16.mxu0 %v4973
    %5381 = vmatpush2.bf16.msra.mxu0 %v4972
    %5382 = vmatprep.subr.bf16.mxu0 %v4967
    %5383 = vmatpush2.bf16.msra.mxu0 %v4966
    %5384 = vmatprep.subr.bf16.mxu0 %v4961
    %5385 = vmatpush2.bf16.msra.mxu0 %v4960
    %5386 = vmatprep.subr.bf16.mxu0 %v4955
    %5387 = vmatpush2.bf16.msra.mxu0 %v4954
    %5388 = vmatprep.subr.bf16.mxu0 %v4949
    %5389 = vmatpush2.bf16.msra.mxu0 %v4948
    %5390 = vmatprep.subr.bf16.mxu0 %v4943
    %5391 = vmatpush2.bf16.msra.mxu0 %v4942
    %5392 = vmatprep.mubr.bf16.mxu0 %v3517
    %5393 = vmatmul.mubr.bf16.gmra.mxu0 %v3516
    %v5394 = vpop.f32.mrf.mxu0
    %v5395 = vadd.f32 %v5354, %v5394
    %v5396 = vpop.f32.mrf.mxu0
    %v5397 = vadd.f32 %v5356, %v5396
    %v5398 = vpop.f32.mrf.mxu0
    %v5399 = vpop.f32.mrf.mxu0
    %5400 = vdwg.mxu0
    %5401 = vmatprep.subr.bf16.mxu0 %v4747
    %5402 = vmatpush1.bf16.msra.mxu0 %v4746
    %5403 = vmatprep.subr.bf16.mxu0 %v4741
    %5404 = vmatpush1.bf16.msra.mxu0 %v4740
    %5405 = vmatprep.subr.bf16.mxu0 %v4735
    %5406 = vmatpush1.bf16.msra.mxu0 %v4734
    %5407 = vmatprep.subr.bf16.mxu0 %v4729
    %5408 = vmatpush1.bf16.msra.mxu0 %v4728
    %5409 = vmatprep.subr.bf16.mxu0 %v4723
    %5410 = vmatpush1.bf16.msra.mxu0 %v4722
    %5411 = vmatprep.subr.bf16.mxu0 %v4717
    %5412 = vmatpush1.bf16.msra.mxu0 %v4716
    %5413 = vmatprep.subr.bf16.mxu0 %v4711
    %5414 = vmatpush1.bf16.msra.mxu0 %v4710
    %5415 = vmatprep.subr.bf16.mxu0 %v4705
    %5416 = vmatpush1.bf16.msra.mxu0 %v4704
    %5417 = vmatprep.subr.bf16.mxu0 %v4795
    %5418 = vmatpush2.bf16.msra.mxu0 %v4794
    %5419 = vmatprep.subr.bf16.mxu0 %v4789
    %5420 = vmatpush2.bf16.msra.mxu0 %v4788
    %5421 = vmatprep.subr.bf16.mxu0 %v4783
    %5422 = vmatpush2.bf16.msra.mxu0 %v4782
    %5423 = vmatprep.subr.bf16.mxu0 %v4777
    %5424 = vmatpush2.bf16.msra.mxu0 %v4776
    %5425 = vmatprep.subr.bf16.mxu0 %v4771
    %5426 = vmatpush2.bf16.msra.mxu0 %v4770
    %5427 = vmatprep.subr.bf16.mxu0 %v4765
    %5428 = vmatpush2.bf16.msra.mxu0 %v4764
    %5429 = vmatprep.subr.bf16.mxu0 %v4759
    %5430 = vmatpush2.bf16.msra.mxu0 %v4758
    %5431 = vmatprep.subr.bf16.mxu0 %v4753
    %5432 = vmatpush2.bf16.msra.mxu0 %v4752
    %5433 = vmatprep.mubr.bf16.mxu0 %v3513
    %5434 = vmatmul.mubr.bf16.gmra.mxu0 %v3512
    %v5435 = vpop.f32.mrf.mxu0
    %v5436 = vadd.f32 %v3819, %v5435
    %v5437 = vpop.f32.mrf.mxu0
    %v5438 = vadd.f32 %v3823, %v5437
    %v5439 = vpop.f32.mrf.mxu0
    %v5440 = vpop.f32.mrf.mxu0
    %5441 = vdwg.mxu0
    %5442 = vmatprep.subr.bf16.mxu0 %v4843
    %5443 = vmatpush1.bf16.msra.mxu0 %v4842
    %5444 = vmatprep.subr.bf16.mxu0 %v4837
    %5445 = vmatpush1.bf16.msra.mxu0 %v4836
    %5446 = vmatprep.subr.bf16.mxu0 %v4831
    %5447 = vmatpush1.bf16.msra.mxu0 %v4830
    %5448 = vmatprep.subr.bf16.mxu0 %v4825
    %5449 = vmatpush1.bf16.msra.mxu0 %v4824
    %5450 = vmatprep.subr.bf16.mxu0 %v4819
    %5451 = vmatpush1.bf16.msra.mxu0 %v4818
    %5452 = vmatprep.subr.bf16.mxu0 %v4813
    %5453 = vmatpush1.bf16.msra.mxu0 %v4812
    %5454 = vmatprep.subr.bf16.mxu0 %v4807
    %5455 = vmatpush1.bf16.msra.mxu0 %v4806
    %5456 = vmatprep.subr.bf16.mxu0 %v4801
    %5457 = vmatpush1.bf16.msra.mxu0 %v4800
    %5458 = vmatprep.subr.bf16.mxu0 %v4891
    %5459 = vmatpush2.bf16.msra.mxu0 %v4890
    %5460 = vmatprep.subr.bf16.mxu0 %v4885
    %5461 = vmatpush2.bf16.msra.mxu0 %v4884
    %5462 = vmatprep.subr.bf16.mxu0 %v4879
    %5463 = vmatpush2.bf16.msra.mxu0 %v4878
    %5464 = vmatprep.subr.bf16.mxu0 %v4873
    %5465 = vmatpush2.bf16.msra.mxu0 %v4872
    %5466 = vmatprep.subr.bf16.mxu0 %v4867
    %5467 = vmatpush2.bf16.msra.mxu0 %v4866
    %5468 = vmatprep.subr.bf16.mxu0 %v4861
    %5469 = vmatpush2.bf16.msra.mxu0 %v4860
    %5470 = vmatprep.subr.bf16.mxu0 %v4855
    %5471 = vmatpush2.bf16.msra.mxu0 %v4854
    %5472 = vmatprep.subr.bf16.mxu0 %v4849
    %5473 = vmatpush2.bf16.msra.mxu0 %v4848
    %5474 = vmatprep.mubr.bf16.mxu0 %v3515
    %5475 = vmatmul.mubr.bf16.gmra.mxu0 %v3514
    %v5476 = vpop.f32.mrf.mxu0
    %v5477 = vadd.f32 %v5436, %v5476
    %v5478 = vpop.f32.mrf.mxu0
    %v5479 = vadd.f32 %v5438, %v5478
    %v5480 = vpop.f32.mrf.mxu0
    %v5481 = vpop.f32.mrf.mxu0
    %5482 = vdwg.mxu0
    %5483 = vmatprep.subr.bf16.mxu0 %v4939
    %5484 = vmatpush1.bf16.msra.mxu0 %v4938
    %5485 = vmatprep.subr.bf16.mxu0 %v4933
    %5486 = vmatpush1.bf16.msra.mxu0 %v4932
    %5487 = vmatprep.subr.bf16.mxu0 %v4927
    %5488 = vmatpush1.bf16.msra.mxu0 %v4926
    %5489 = vmatprep.subr.bf16.mxu0 %v4921
    %5490 = vmatpush1.bf16.msra.mxu0 %v4920
    %5491 = vmatprep.subr.bf16.mxu0 %v4915
    %5492 = vmatpush1.bf16.msra.mxu0 %v4914
    %5493 = vmatprep.subr.bf16.mxu0 %v4909
    %5494 = vmatpush1.bf16.msra.mxu0 %v4908
    %5495 = vmatprep.subr.bf16.mxu0 %v4903
    %5496 = vmatpush1.bf16.msra.mxu0 %v4902
    %5497 = vmatprep.subr.bf16.mxu0 %v4897
    %5498 = vmatpush1.bf16.msra.mxu0 %v4896
    %5499 = vmatprep.subr.bf16.mxu0 %v4987
    %5500 = vmatpush2.bf16.msra.mxu0 %v4986
    %5501 = vmatprep.subr.bf16.mxu0 %v4981
    %5502 = vmatpush2.bf16.msra.mxu0 %v4980
    %5503 = vmatprep.subr.bf16.mxu0 %v4975
    %5504 = vmatpush2.bf16.msra.mxu0 %v4974
    %5505 = vmatprep.subr.bf16.mxu0 %v4969
    %5506 = vmatpush2.bf16.msra.mxu0 %v4968
    %5507 = vmatprep.subr.bf16.mxu0 %v4963
    %5508 = vmatpush2.bf16.msra.mxu0 %v4962
    %5509 = vmatprep.subr.bf16.mxu0 %v4957
    %5510 = vmatpush2.bf16.msra.mxu0 %v4956
    %5511 = vmatprep.subr.bf16.mxu0 %v4951
    %5512 = vmatpush2.bf16.msra.mxu0 %v4950
    %5513 = vmatprep.subr.bf16.mxu0 %v4945
    %5514 = vmatpush2.bf16.msra.mxu0 %v4944
    %5515 = vmatprep.mubr.bf16.mxu0 %v3517
    %5516 = vmatmul.mubr.bf16.gmra.mxu0 %v3516
    %v5517 = vpop.f32.mrf.mxu0
    %v5518 = vadd.f32 %v5477, %v5517
    %v5519 = vpop.f32.mrf.mxu0
    %v5520 = vadd.f32 %v5479, %v5519
    %v5521 = vpop.f32.mrf.mxu0
    %v5522 = vpop.f32.mrf.mxu0
    %5523 = vdwg.mxu0
    %5524 = vmatprep.subr.bf16.mxu0 %v4749
    %5525 = vmatpush1.bf16.msra.mxu0 %v4748
    %5526 = vmatprep.subr.bf16.mxu0 %v4743
    %5527 = vmatpush1.bf16.msra.mxu0 %v4742
    %5528 = vmatprep.subr.bf16.mxu0 %v4737
    %5529 = vmatpush1.bf16.msra.mxu0 %v4736
    %5530 = vmatprep.subr.bf16.mxu0 %v4731
    %5531 = vmatpush1.bf16.msra.mxu0 %v4730
    %5532 = vmatprep.subr.bf16.mxu0 %v4725
    %5533 = vmatpush1.bf16.msra.mxu0 %v4724
    %5534 = vmatprep.subr.bf16.mxu0 %v4719
    %5535 = vmatpush1.bf16.msra.mxu0 %v4718
    %5536 = vmatprep.subr.bf16.mxu0 %v4713
    %5537 = vmatpush1.bf16.msra.mxu0 %v4712
    %5538 = vmatprep.subr.bf16.mxu0 %v4707
    %5539 = vmatpush1.bf16.msra.mxu0 %v4706
    %5540 = vmatprep.subr.bf16.mxu0 %v4797
    %5541 = vmatpush2.bf16.msra.mxu0 %v4796
    %5542 = vmatprep.subr.bf16.mxu0 %v4791
    %5543 = vmatpush2.bf16.msra.mxu0 %v4790
    %5544 = vmatprep.subr.bf16.mxu0 %v4785
    %5545 = vmatpush2.bf16.msra.mxu0 %v4784
    %5546 = vmatprep.subr.bf16.mxu0 %v4779
    %5547 = vmatpush2.bf16.msra.mxu0 %v4778
    %5548 = vmatprep.subr.bf16.mxu0 %v4773
    %5549 = vmatpush2.bf16.msra.mxu0 %v4772
    %5550 = vmatprep.subr.bf16.mxu0 %v4767
    %5551 = vmatpush2.bf16.msra.mxu0 %v4766
    %5552 = vmatprep.subr.bf16.mxu0 %v4761
    %5553 = vmatpush2.bf16.msra.mxu0 %v4760
    %5554 = vmatprep.subr.bf16.mxu0 %v4755
    %5555 = vmatpush2.bf16.msra.mxu0 %v4754
    %5556 = vmatprep.mubr.bf16.mxu0 %v3513
    %5557 = vmatmul.mubr.bf16.gmra.mxu0 %v3512
    %v5558 = vpop.f32.mrf.mxu0
    %v5559 = vadd.f32 %v3827, %v5558
    %v5560 = vpop.f32.mrf.mxu0
    %v5561 = vadd.f32 %v3831, %v5560
    %v5562 = vpop.f32.mrf.mxu0
    %v5563 = vpop.f32.mrf.mxu0
    %5564 = vdwg.mxu0
    %5565 = vmatprep.subr.bf16.mxu0 %v4845
    %5566 = vmatpush1.bf16.msra.mxu0 %v4844
    %5567 = vmatprep.subr.bf16.mxu0 %v4839
    %5568 = vmatpush1.bf16.msra.mxu0 %v4838
    %5569 = vmatprep.subr.bf16.mxu0 %v4833
    %5570 = vmatpush1.bf16.msra.mxu0 %v4832
    %5571 = vmatprep.subr.bf16.mxu0 %v4827
    %5572 = vmatpush1.bf16.msra.mxu0 %v4826
    %5573 = vmatprep.subr.bf16.mxu0 %v4821
    %5574 = vmatpush1.bf16.msra.mxu0 %v4820
    %5575 = vmatprep.subr.bf16.mxu0 %v4815
    %5576 = vmatpush1.bf16.msra.mxu0 %v4814
    %5577 = vmatprep.subr.bf16.mxu0 %v4809
    %5578 = vmatpush1.bf16.msra.mxu0 %v4808
    %5579 = vmatprep.subr.bf16.mxu0 %v4803
    %5580 = vmatpush1.bf16.msra.mxu0 %v4802
    %5581 = vmatprep.subr.bf16.mxu0 %v4893
    %5582 = vmatpush2.bf16.msra.mxu0 %v4892
    %5583 = vmatprep.subr.bf16.mxu0 %v4887
    %5584 = vmatpush2.bf16.msra.mxu0 %v4886
    %5585 = vmatprep.subr.bf16.mxu0 %v4881
    %5586 = vmatpush2.bf16.msra.mxu0 %v4880
    %5587 = vmatprep.subr.bf16.mxu0 %v4875
    %5588 = vmatpush2.bf16.msra.mxu0 %v4874
    %5589 = vmatprep.subr.bf16.mxu0 %v4869
    %5590 = vmatpush2.bf16.msra.mxu0 %v4868
    %5591 = vmatprep.subr.bf16.mxu0 %v4863
    %5592 = vmatpush2.bf16.msra.mxu0 %v4862
    %5593 = vmatprep.subr.bf16.mxu0 %v4857
    %5594 = vmatpush2.bf16.msra.mxu0 %v4856
    %5595 = vmatprep.subr.bf16.mxu0 %v4851
    %5596 = vmatpush2.bf16.msra.mxu0 %v4850
    %5597 = vmatprep.mubr.bf16.mxu0 %v3515
    %5598 = vmatmul.mubr.bf16.gmra.mxu0 %v3514
    %v5599 = vpop.f32.mrf.mxu0
    %v5600 = vadd.f32 %v5559, %v5599
    %v5601 = vpop.f32.mrf.mxu0
    %v5602 = vadd.f32 %v5561, %v5601
    %v5603 = vpop.f32.mrf.mxu0
    %v5604 = vpop.f32.mrf.mxu0
    %5605 = vdwg.mxu0
    %5606 = vmatprep.subr.bf16.mxu0 %v4941
    %5607 = vmatpush1.bf16.msra.mxu0 %v4940
    %5608 = vmatprep.subr.bf16.mxu0 %v4935
    %5609 = vmatpush1.bf16.msra.mxu0 %v4934
    %5610 = vmatprep.subr.bf16.mxu0 %v4929
    %5611 = vmatpush1.bf16.msra.mxu0 %v4928
    %5612 = vmatprep.subr.bf16.mxu0 %v4923
    %5613 = vmatpush1.bf16.msra.mxu0 %v4922
    %5614 = vmatprep.subr.bf16.mxu0 %v4917
    %5615 = vmatpush1.bf16.msra.mxu0 %v4916
    %5616 = vmatprep.subr.bf16.mxu0 %v4911
    %5617 = vmatpush1.bf16.msra.mxu0 %v4910
    %5618 = vmatprep.subr.bf16.mxu0 %v4905
    %5619 = vmatpush1.bf16.msra.mxu0 %v4904
    %5620 = vmatprep.subr.bf16.mxu0 %v4899
    %5621 = vmatpush1.bf16.msra.mxu0 %v4898
    %5622 = vmatprep.subr.bf16.mxu0 %v4989
    %5623 = vmatpush2.bf16.msra.mxu0 %v4988
    %5624 = vmatprep.subr.bf16.mxu0 %v4983
    %5625 = vmatpush2.bf16.msra.mxu0 %v4982
    %5626 = vmatprep.subr.bf16.mxu0 %v4977
    %5627 = vmatpush2.bf16.msra.mxu0 %v4976
    %5628 = vmatprep.subr.bf16.mxu0 %v4971
    %5629 = vmatpush2.bf16.msra.mxu0 %v4970
    %5630 = vmatprep.subr.bf16.mxu0 %v4965
    %5631 = vmatpush2.bf16.msra.mxu0 %v4964
    %5632 = vmatprep.subr.bf16.mxu0 %v4959
    %5633 = vmatpush2.bf16.msra.mxu0 %v4958
    %5634 = vmatprep.subr.bf16.mxu0 %v4953
    %5635 = vmatpush2.bf16.msra.mxu0 %v4952
    %5636 = vmatprep.subr.bf16.mxu0 %v4947
    %5637 = vmatpush2.bf16.msra.mxu0 %v4946
    %5638 = vmatprep.mubr.bf16.mxu0 %v3517
    %5639 = vmatmul.mubr.bf16.gmra.mxu0 %v3516
    %v5640 = vpop.f32.mrf.mxu0
    %v5641 = vadd.f32 %v5600, %v5640
    %v5642 = vpop.f32.mrf.mxu0
    %v5643 = vadd.f32 %v5602, %v5642
    %v5644 = vpop.f32.mrf.mxu0
    %v5645 = vpop.f32.mrf.mxu0
    %5646 = vdwg.mxu0
    %v5647 = vmax.f32 %v5395, 0.0
    %v5648 = vmax.f32 %v5397, 0.0
    %v5649 = vmax.f32 %v5518, 0.0
    %v5650 = vmax.f32 %v5520, 0.0
    %v5651 = vmax.f32 %v5641, 0.0
    %v5652 = vmax.f32 %v5643, 0.0
    %v5653 = vpack.c.bf16 %v5647, %v5647
    %v5654 = vpack.c.bf16 %v5648, %v5648
    %v5655 = vpack.c.bf16 %v5649, %v5649
    %v5656 = vpack.c.bf16 %v5650, %v5650
    %v5657 = vpack.c.bf16 %v5651, %v5651
    %v5658 = vpack.c.bf16 %v5652, %v5652
    %v5659 = vld [vmem:[%s14] sm:$0xf]
    %v5660 = vld [vmem:[%s14 + $0x4] sm:$0xf]
    %v5661 = vld [vmem:[%s14 + $0x8] sm:$0xf]
    %v5662 = vld [vmem:[%s14 + $0xc] sm:$0xf]
    %v5663 = vld [vmem:[%s14 + $0x10] sm:$0xf]
    %v5664 = vld [vmem:[%s14 + $0x14] sm:$0xf]
    %v5665 = vld [vmem:[%s14 + $0x18] sm:$0xf]
    %v5666 = vld [vmem:[%s14 + $0x1c] sm:$0xf]
    %v5667 = vld [vmem:[%s14 + $0x20] sm:$0xf]
    %v5668 = vld [vmem:[%s14 + $0x24] sm:$0xf]
    %v5669 = vld [vmem:[%s14 + $0x28] sm:$0xf]
    %v5670 = vld [vmem:[%s14 + $0x2c] sm:$0xf]
    %v5671 = vld [vmem:[%s14 + $0x30] sm:$0xf]
    %v5672 = vld [vmem:[%s14 + $0x34] sm:$0xf]
    %v5673 = vld [vmem:[%s14 + $0x38] sm:$0xf]
    %v5674 = vld [vmem:[%s14 + $0x3c] sm:$0xf]
    %v5675 = vld [vmem:[%s14 + $0x40] sm:$0xf]
    %v5676 = vld [vmem:[%s14 + $0x44] sm:$0xf]
    %v5677 = vld [vmem:[%s14 + $0x48] sm:$0xf]
    %v5678 = vld [vmem:[%s14 + $0x4c] sm:$0xf]
    %v5679 = vld [vmem:[%s14 + $0x50] sm:$0xf]
    %v5680 = vld [vmem:[%s14 + $0x54] sm:$0xf]
    %v5681 = vld [vmem:[%s14 + $0x58] sm:$0xf]
    %v5682 = vld [vmem:[%s14 + $0x5c] sm:$0xf]
    %v5683 = vld [vmem:[%s14 + $0x60] sm:$0xf]
    %v5684 = vld [vmem:[%s14 + $0x64] sm:$0xf]
    %v5685 = vld [vmem:[%s14 + $0x68] sm:$0xf]
    %v5686 = vld [vmem:[%s14 + $0x6c] sm:$0xf]
    %v5687 = vld [vmem:[%s14 + $0x70] sm:$0xf]
    %v5688 = vld [vmem:[%s14 + $0x74] sm:$0xf]
    %v5689 = vld [vmem:[%s14 + $0x78] sm:$0xf]
    %v5690 = vld [vmem:[%s14 + $0x7c] sm:$0xf]
    %v5691 = vld [vmem:[%s14 + $0x80] sm:$0xf]
    %v5692 = vld [vmem:[%s14 + $0x84] sm:$0xf]
    %v5693 = vld [vmem:[%s14 + $0x88] sm:$0xf]
    %v5694 = vld [vmem:[%s14 + $0x8c] sm:$0xf]
    %v5695 = vld [vmem:[%s14 + $0x90] sm:$0xf]
    %v5696 = vld [vmem:[%s14 + $0x94] sm:$0xf]
    %v5697 = vld [vmem:[%s14 + $0x98] sm:$0xf]
    %v5698 = vld [vmem:[%s14 + $0x9c] sm:$0xf]
    %v5699 = vld [vmem:[%s14 + $0xa0] sm:$0xf]
    %v5700 = vld [vmem:[%s14 + $0xa4] sm:$0xf]
    %v5701 = vld [vmem:[%s14 + $0xa8] sm:$0xf]
    %v5702 = vld [vmem:[%s14 + $0xac] sm:$0xf]
    %v5703 = vld [vmem:[%s14 + $0xb0] sm:$0xf]
    %v5704 = vld [vmem:[%s14 + $0xb4] sm:$0xf]
    %v5705 = vld [vmem:[%s14 + $0xb8] sm:$0xf]
    %v5706 = vld [vmem:[%s14 + $0xbc] sm:$0xf]
    %v5707 = vld [vmem:[%s14 + $0xc0] sm:$0xf]
    %v5708 = vld [vmem:[%s14 + $0xc4] sm:$0xf]
    %v5709 = vld [vmem:[%s14 + $0xc8] sm:$0xf]
    %v5710 = vld [vmem:[%s14 + $0xcc] sm:$0xf]
    %v5711 = vld [vmem:[%s14 + $0xd0] sm:$0xf]
    %v5712 = vld [vmem:[%s14 + $0xd4] sm:$0xf]
    %v5713 = vld [vmem:[%s14 + $0xd8] sm:$0xf]
    %v5714 = vld [vmem:[%s14 + $0xdc] sm:$0xf]
    %v5715 = vld [vmem:[%s14 + $0xe0] sm:$0xf]
    %v5716 = vld [vmem:[%s14 + $0xe4] sm:$0xf]
    %v5717 = vld [vmem:[%s14 + $0xe8] sm:$0xf]
    %v5718 = vld [vmem:[%s14 + $0xec] sm:$0xf]
    %v5719 = vld [vmem:[%s14 + $0xf0] sm:$0xf]
    %v5720 = vld [vmem:[%s14 + $0xf4] sm:$0xf]
    %v5721 = vld [vmem:[%s14 + $0xf8] sm:$0xf]
    %v5722 = vld [vmem:[%s14 + $0xfc] sm:$0xf]
    %v5723 = vld [vmem:[%s14 + $0x100] sm:$0xf]
    %v5724 = vld [vmem:[%s14 + $0x104] sm:$0xf]
    %v5725 = vld [vmem:[%s14 + $0x108] sm:$0xf]
    %v5726 = vld [vmem:[%s14 + $0x10c] sm:$0xf]
    %v5727 = vld [vmem:[%s14 + $0x110] sm:$0xf]
    %v5728 = vld [vmem:[%s14 + $0x114] sm:$0xf]
    %v5729 = vld [vmem:[%s14 + $0x118] sm:$0xf]
    %v5730 = vld [vmem:[%s14 + $0x11c] sm:$0xf]
    %v5731 = vld [vmem:[%s14 + $0x120] sm:$0xf]
    %v5732 = vld [vmem:[%s14 + $0x124] sm:$0xf]
    %v5733 = vld [vmem:[%s14 + $0x128] sm:$0xf]
    %v5734 = vld [vmem:[%s14 + $0x12c] sm:$0xf]
    %v5735 = vld [vmem:[%s14 + $0x130] sm:$0xf]
    %v5736 = vld [vmem:[%s14 + $0x134] sm:$0xf]
    %v5737 = vld [vmem:[%s14 + $0x138] sm:$0xf]
    %v5738 = vld [vmem:[%s14 + $0x13c] sm:$0xf]
    %v5739 = vld [vmem:[%s14 + $0x140] sm:$0xf]
    %v5740 = vld [vmem:[%s14 + $0x144] sm:$0xf]
    %v5741 = vld [vmem:[%s14 + $0x148] sm:$0xf]
    %v5742 = vld [vmem:[%s14 + $0x14c] sm:$0xf]
    %v5743 = vld [vmem:[%s14 + $0x150] sm:$0xf]
    %v5744 = vld [vmem:[%s14 + $0x154] sm:$0xf]
    %v5745 = vld [vmem:[%s14 + $0x158] sm:$0xf]
    %v5746 = vld [vmem:[%s14 + $0x15c] sm:$0xf]
    %v5747 = vld [vmem:[%s14 + $0x160] sm:$0xf]
    %v5748 = vld [vmem:[%s14 + $0x164] sm:$0xf]
    %v5749 = vld [vmem:[%s14 + $0x168] sm:$0xf]
    %v5750 = vld [vmem:[%s14 + $0x16c] sm:$0xf]
    %v5751 = vld [vmem:[%s14 + $0x170] sm:$0xf]
    %v5752 = vld [vmem:[%s14 + $0x174] sm:$0xf]
    %v5753 = vld [vmem:[%s14 + $0x178] sm:$0xf]
    %v5754 = vld [vmem:[%s14 + $0x17c] sm:$0xf]
    %v5755 = vld [vmem:[#allocation23] sm:$0x1]
    %v5757 = vlaneseq
    %v5758 = vshrl.u32 %v5757, 7
    %v5759 = vsub.s32 0, %v5758
    %v5760 = vrot.slane %v5755, %v5759
    %v5858 = vunpack.c.l.b16 %v5659
    %v5859 = vunpack.c.l.b16 %v5660
    %v5860 = vunpack.c.l.b16 %v5661
    %v5861 = vunpack.c.l.b16 %v5662
    %v5862 = vunpack.c.l.b16 %v5663
    %v5863 = vunpack.c.l.b16 %v5664
    %v5864 = vunpack.c.l.b16 %v5665
    %v5865 = vunpack.c.l.b16 %v5666
    %v5866 = vunpack.c.l.b16 %v5667
    %v5867 = vunpack.c.l.b16 %v5668
    %v5868 = vunpack.c.l.b16 %v5669
    %v5869 = vunpack.c.l.b16 %v5670
    %v5870 = vunpack.c.l.b16 %v5671
    %v5871 = vunpack.c.l.b16 %v5672
    %v5872 = vunpack.c.l.b16 %v5673
    %v5873 = vunpack.c.l.b16 %v5674
    %v5874 = vunpack.c.l.b16 %v5675
    %v5875 = vunpack.c.l.b16 %v5676
    %v5876 = vunpack.c.l.b16 %v5677
    %v5877 = vunpack.c.l.b16 %v5678
    %v5878 = vunpack.c.l.b16 %v5679
    %v5879 = vunpack.c.l.b16 %v5680
    %v5880 = vunpack.c.l.b16 %v5681
    %v5881 = vunpack.c.l.b16 %v5682
    %v5882 = vunpack.c.l.b16 %v5683
    %v5883 = vunpack.c.l.b16 %v5684
    %v5884 = vunpack.c.l.b16 %v5685
    %v5885 = vunpack.c.l.b16 %v5686
    %v5886 = vunpack.c.l.b16 %v5687
    %v5887 = vunpack.c.l.b16 %v5688
    %v5888 = vunpack.c.l.b16 %v5689
    %v5889 = vunpack.c.l.b16 %v5690
    %v5890 = vunpack.c.l.b16 %v5691
    %v5891 = vunpack.c.l.b16 %v5692
    %v5892 = vunpack.c.l.b16 %v5693
    %v5893 = vunpack.c.l.b16 %v5694
    %v5894 = vunpack.c.l.b16 %v5695
    %v5895 = vunpack.c.l.b16 %v5696
    %v5896 = vunpack.c.l.b16 %v5697
    %v5897 = vunpack.c.l.b16 %v5698
    %v5898 = vunpack.c.l.b16 %v5699
    %v5899 = vunpack.c.l.b16 %v5700
    %v5900 = vunpack.c.l.b16 %v5701
    %v5901 = vunpack.c.l.b16 %v5702
    %v5902 = vunpack.c.l.b16 %v5703
    %v5903 = vunpack.c.l.b16 %v5704
    %v5904 = vunpack.c.l.b16 %v5705
    %v5905 = vunpack.c.l.b16 %v5706
    %v5906 = vunpack.c.l.b16 %v5707
    %v5907 = vunpack.c.l.b16 %v5708
    %v5908 = vunpack.c.l.b16 %v5709
    %v5909 = vunpack.c.l.b16 %v5710
    %v5910 = vunpack.c.l.b16 %v5711
    %v5911 = vunpack.c.l.b16 %v5712
    %v5912 = vunpack.c.l.b16 %v5713
    %v5913 = vunpack.c.l.b16 %v5714
    %v5914 = vunpack.c.l.b16 %v5715
    %v5915 = vunpack.c.l.b16 %v5716
    %v5916 = vunpack.c.l.b16 %v5717
    %v5917 = vunpack.c.l.b16 %v5718
    %v5918 = vunpack.c.l.b16 %v5719
    %v5919 = vunpack.c.l.b16 %v5720
    %v5920 = vunpack.c.l.b16 %v5721
    %v5921 = vunpack.c.l.b16 %v5722
    %v5922 = vunpack.c.l.b16 %v5723
    %v5923 = vunpack.c.l.b16 %v5724
    %v5924 = vunpack.c.l.b16 %v5725
    %v5925 = vunpack.c.l.b16 %v5726
    %v5926 = vunpack.c.l.b16 %v5727
    %v5927 = vunpack.c.l.b16 %v5728
    %v5928 = vunpack.c.l.b16 %v5729
    %v5929 = vunpack.c.l.b16 %v5730
    %v5930 = vunpack.c.l.b16 %v5731
    %v5931 = vunpack.c.l.b16 %v5732
    %v5932 = vunpack.c.l.b16 %v5733
    %v5933 = vunpack.c.l.b16 %v5734
    %v5934 = vunpack.c.l.b16 %v5735
    %v5935 = vunpack.c.l.b16 %v5736
    %v5936 = vunpack.c.l.b16 %v5737
    %v5937 = vunpack.c.l.b16 %v5738
    %v5938 = vunpack.c.l.b16 %v5739
    %v5939 = vunpack.c.l.b16 %v5740
    %v5940 = vunpack.c.l.b16 %v5741
    %v5941 = vunpack.c.l.b16 %v5742
    %v5942 = vunpack.c.l.b16 %v5743
    %v5943 = vunpack.c.l.b16 %v5744
    %v5944 = vunpack.c.l.b16 %v5745
    %v5945 = vunpack.c.l.b16 %v5746
    %v5946 = vunpack.c.l.b16 %v5747
    %v5947 = vunpack.c.l.b16 %v5748
    %v5948 = vunpack.c.l.b16 %v5749
    %v5949 = vunpack.c.l.b16 %v5750
    %v5950 = vunpack.c.l.b16 %v5751
    %v5951 = vunpack.c.l.b16 %v5752
    %v5952 = vunpack.c.l.b16 %v5753
    %v5953 = vunpack.c.l.b16 %v5754
    %v5954 = vpack.c.b16 %v5859, %v5858
    %v5955 = vpack.c.b16 %v5861, %v5860
    %v5956 = vpack.c.b16 %v5863, %v5862
    %v5957 = vpack.c.b16 %v5865, %v5864
    %v5958 = vpack.c.b16 %v5867, %v5866
    %v5959 = vpack.c.b16 %v5869, %v5868
    %v5960 = vpack.c.b16 %v5871, %v5870
    %v5961 = vpack.c.b16 %v5873, %v5872
    %v5962 = vpack.c.b16 %v5875, %v5874
    %v5963 = vpack.c.b16 %v5877, %v5876
    %v5964 = vpack.c.b16 %v5879, %v5878
    %v5965 = vpack.c.b16 %v5881, %v5880
    %v5966 = vpack.c.b16 %v5883, %v5882
    %v5967 = vpack.c.b16 %v5885, %v5884
    %v5968 = vpack.c.b16 %v5887, %v5886
    %v5969 = vpack.c.b16 %v5889, %v5888
    %v5970 = vpack.c.b16 %v5891, %v5890
    %v5971 = vpack.c.b16 %v5893, %v5892
    %v5972 = vpack.c.b16 %v5895, %v5894
    %v5973 = vpack.c.b16 %v5897, %v5896
    %v5974 = vpack.c.b16 %v5899, %v5898
    %v5975 = vpack.c.b16 %v5901, %v5900
    %v5976 = vpack.c.b16 %v5903, %v5902
    %v5977 = vpack.c.b16 %v5905, %v5904
    %v5978 = vpack.c.b16 %v5907, %v5906
    %v5979 = vpack.c.b16 %v5909, %v5908
    %v5980 = vpack.c.b16 %v5911, %v5910
    %v5981 = vpack.c.b16 %v5913, %v5912
    %v5982 = vpack.c.b16 %v5915, %v5914
    %v5983 = vpack.c.b16 %v5917, %v5916
    %v5984 = vpack.c.b16 %v5919, %v5918
    %v5985 = vpack.c.b16 %v5921, %v5920
    %v5986 = vpack.c.b16 %v5923, %v5922
    %v5987 = vpack.c.b16 %v5925, %v5924
    %v5988 = vpack.c.b16 %v5927, %v5926
    %v5989 = vpack.c.b16 %v5929, %v5928
    %v5990 = vpack.c.b16 %v5931, %v5930
    %v5991 = vpack.c.b16 %v5933, %v5932
    %v5992 = vpack.c.b16 %v5935, %v5934
    %v5993 = vpack.c.b16 %v5937, %v5936
    %v5994 = vpack.c.b16 %v5939, %v5938
    %v5995 = vpack.c.b16 %v5941, %v5940
    %v5996 = vpack.c.b16 %v5943, %v5942
    %v5997 = vpack.c.b16 %v5945, %v5944
    %v5998 = vpack.c.b16 %v5947, %v5946
    %v5999 = vpack.c.b16 %v5949, %v5948
    %v6000 = vpack.c.b16 %v5951, %v5950
    %v6001 = vpack.c.b16 %v5953, %v5952
    %6050 = vmatprep.subr.bf16.mxu0 0
    %6051 = vmatpush1.bf16.msra.mxu0 %v5961
    %6052 = vmatprep.subr.bf16.mxu0 0
    %6053 = vmatpush1.bf16.msra.mxu0 %v5960
    %6054 = vmatprep.subr.bf16.mxu0 0
    %6055 = vmatpush1.bf16.msra.mxu0 %v5959
    %6056 = vmatprep.subr.bf16.mxu0 0
    %6057 = vmatpush1.bf16.msra.mxu0 %v5958
    %6058 = vmatprep.subr.bf16.mxu0 0
    %6059 = vmatpush1.bf16.msra.mxu0 %v5957
    %6060 = vmatprep.subr.bf16.mxu0 0
    %6061 = vmatpush1.bf16.msra.mxu0 %v5956
    %6062 = vmatprep.subr.bf16.mxu0 0
    %6063 = vmatpush1.bf16.msra.mxu0 %v5955
    %6064 = vmatprep.subr.bf16.mxu0 0
    %6065 = vmatpush1.bf16.msra.mxu0 %v5954
    %6066 = vmatprep.subr.bf16.mxu0 0
    %6067 = vmatpush2.bf16.msra.mxu0 %v5969
    %6068 = vmatprep.subr.bf16.mxu0 0
    %6069 = vmatpush2.bf16.msra.mxu0 %v5968
    %6070 = vmatprep.subr.bf16.mxu0 0
    %6071 = vmatpush2.bf16.msra.mxu0 %v5967
    %6072 = vmatprep.subr.bf16.mxu0 0
    %6073 = vmatpush2.bf16.msra.mxu0 %v5966
    %6074 = vmatprep.subr.bf16.mxu0 0
    %6075 = vmatpush2.bf16.msra.mxu0 %v5965
    %6076 = vmatprep.subr.bf16.mxu0 0
    %6077 = vmatpush2.bf16.msra.mxu0 %v5964
    %6078 = vmatprep.subr.bf16.mxu0 0
    %6079 = vmatpush2.bf16.msra.mxu0 %v5963
    %6080 = vmatprep.subr.bf16.mxu0 0
    %6081 = vmatpush2.bf16.msra.mxu0 %v5962
    %6082 = vmatprep.mubr.bf16.mxu0 %v5654
    %6083 = vmatmul.mubr.bf16.gmra.mxu0 %v5653
    %v6084 = vpop.f32.mrf.mxu0
    %v6085 = vadd.f32 %v5760, %v6084
    %v6086 = vpop.f32.mrf.mxu0
    %v6087 = vpop.f32.mrf.mxu0
    %v6088 = vpop.f32.mrf.mxu0
    %6089 = vdwg.mxu0
    %6090 = vmatprep.subr.bf16.mxu0 0
    %6091 = vmatpush1.bf16.msra.mxu0 %v5977
    %6092 = vmatprep.subr.bf16.mxu0 0
    %6093 = vmatpush1.bf16.msra.mxu0 %v5976
    %6094 = vmatprep.subr.bf16.mxu0 0
    %6095 = vmatpush1.bf16.msra.mxu0 %v5975
    %6096 = vmatprep.subr.bf16.mxu0 0
    %6097 = vmatpush1.bf16.msra.mxu0 %v5974
    %6098 = vmatprep.subr.bf16.mxu0 0
    %6099 = vmatpush1.bf16.msra.mxu0 %v5973
    %6100 = vmatprep.subr.bf16.mxu0 0
    %6101 = vmatpush1.bf16.msra.mxu0 %v5972
    %6102 = vmatprep.subr.bf16.mxu0 0
    %6103 = vmatpush1.bf16.msra.mxu0 %v5971
    %6104 = vmatprep.subr.bf16.mxu0 0
    %6105 = vmatpush1.bf16.msra.mxu0 %v5970
    %6106 = vmatprep.subr.bf16.mxu0 0
    %6107 = vmatpush2.bf16.msra.mxu0 %v5985
    %6108 = vmatprep.subr.bf16.mxu0 0
    %6109 = vmatpush2.bf16.msra.mxu0 %v5984
    %6110 = vmatprep.subr.bf16.mxu0 0
    %6111 = vmatpush2.bf16.msra.mxu0 %v5983
    %6112 = vmatprep.subr.bf16.mxu0 0
    %6113 = vmatpush2.bf16.msra.mxu0 %v5982
    %6114 = vmatprep.subr.bf16.mxu0 0
    %6115 = vmatpush2.bf16.msra.mxu0 %v5981
    %6116 = vmatprep.subr.bf16.mxu0 0
    %6117 = vmatpush2.bf16.msra.mxu0 %v5980
    %6118 = vmatprep.subr.bf16.mxu0 0
    %6119 = vmatpush2.bf16.msra.mxu0 %v5979
    %6120 = vmatprep.subr.bf16.mxu0 0
    %6121 = vmatpush2.bf16.msra.mxu0 %v5978
    %6122 = vmatprep.mubr.bf16.mxu0 %v5656
    %6123 = vmatmul.mubr.bf16.gmra.mxu0 %v5655
    %v6124 = vpop.f32.mrf.mxu0
    %v6125 = vadd.f32 %v6085, %v6124
    %v6126 = vpop.f32.mrf.mxu0
    %v6127 = vpop.f32.mrf.mxu0
    %v6128 = vpop.f32.mrf.mxu0
    %6129 = vdwg.mxu0
    %6130 = vmatprep.subr.bf16.mxu0 0
    %6131 = vmatpush1.bf16.msra.mxu0 %v5993
    %6132 = vmatprep.subr.bf16.mxu0 0
    %6133 = vmatpush1.bf16.msra.mxu0 %v5992
    %6134 = vmatprep.subr.bf16.mxu0 0
    %6135 = vmatpush1.bf16.msra.mxu0 %v5991
    %6136 = vmatprep.subr.bf16.mxu0 0
    %6137 = vmatpush1.bf16.msra.mxu0 %v5990
    %6138 = vmatprep.subr.bf16.mxu0 0
    %6139 = vmatpush1.bf16.msra.mxu0 %v5989
    %6140 = vmatprep.subr.bf16.mxu0 0
    %6141 = vmatpush1.bf16.msra.mxu0 %v5988
    %6142 = vmatprep.subr.bf16.mxu0 0
    %6143 = vmatpush1.bf16.msra.mxu0 %v5987
    %6144 = vmatprep.subr.bf16.mxu0 0
    %6145 = vmatpush1.bf16.msra.mxu0 %v5986
    %6146 = vmatprep.subr.bf16.mxu0 0
    %6147 = vmatpush2.bf16.msra.mxu0 %v6001
    %6148 = vmatprep.subr.bf16.mxu0 0
    %6149 = vmatpush2.bf16.msra.mxu0 %v6000
    %6150 = vmatprep.subr.bf16.mxu0 0
    %6151 = vmatpush2.bf16.msra.mxu0 %v5999
    %6152 = vmatprep.subr.bf16.mxu0 0
    %6153 = vmatpush2.bf16.msra.mxu0 %v5998
    %6154 = vmatprep.subr.bf16.mxu0 0
    %6155 = vmatpush2.bf16.msra.mxu0 %v5997
    %6156 = vmatprep.subr.bf16.mxu0 0
    %6157 = vmatpush2.bf16.msra.mxu0 %v5996
    %6158 = vmatprep.subr.bf16.mxu0 0
    %6159 = vmatpush2.bf16.msra.mxu0 %v5995
    %6160 = vmatprep.subr.bf16.mxu0 0
    %6161 = vmatpush2.bf16.msra.mxu0 %v5994
    %6162 = vmatprep.mubr.bf16.mxu0 %v5658
    %6163 = vmatmul.mubr.bf16.gmra.mxu0 %v5657
    %v6164 = vpop.f32.mrf.mxu0
    %v6165 = vadd.f32 %v6125, %v6164
    %v6166 = vpop.f32.mrf.mxu0
    %v6167 = vpop.f32.mrf.mxu0
    %v6168 = vpop.f32.mrf.mxu0
    %6169 = vdwg.mxu0
    %v6170 = vtanh.pop %v6165
    %6172 = vrot.lane.b32.xlu0 %v3118, 4
    %v6173 = vpop.permute.xlu0 %6172
    %6176 = vrot.lane.b32.xlu0 %v3126, 4
    %v6177 = vpop.permute.xlu0 %6176
    %vm6179 = vcmask 31744
    %v6180 = vsel %vm6179, %v6170, %v6173
    %vm6181 = vcmask 97280
    %v6182 = vsel %vm6181, %v6180, %v6177
    %v6183 = vsel %vm313, %v6182, 0.0
    %6184 = vst [vmem:[#allocation25] sm:$0xff] %v6183
    // Predicated region
    $region122: #{tpu_custom_call.1} parent=1 // pred_check
      _
    $region123: #{tpu_custom_call.1} parent=1 // pred_check_branch
      %6186 = sbr.rel (0) target = $region125
    $region124: #{tpu_custom_call.1} parent=1 // pred_region
      %s6188 = ssub.s32 128, 128
      %6189 = vsyncadd [#allocation4], %s6188
      %s6191 = sshll.u32 [#allocation25], 4
      %s6192 = int_to_ptr.vmem [resolvable:$true] %s6191
      %6194 = dma.vmem_to_hbm [thread:$0]  %s6192, 128, %s16, [#allocation4]
    $region125: #{tpu_custom_call.1} parent=1 // pred_fallthru
      _
    // Predicated region
    $region126: #{tpu_custom_call.1} parent=1 // pred_check
      _
    $region127: #{tpu_custom_call.1} parent=1 // pred_check_branch
      %6196 = sbr.rel (0) target = $region129
    $region128: #{tpu_custom_call.1} parent=1 // pred_region
      %6197 = dma.done [#allocation4], 128
    $region129: #{tpu_custom_call.1} parent=1 // pred_fallthru
      _
    %6198 = vsyncpa [#allocation3], 1
    %6199 = vsyncpa [#allocation6], 1
    %6200 = vsyncpa [#allocation9], 1
    %6201 = vsyncpa [#allocation12], 1
    %6202 = vsyncpa [#allocation15], 1
    %6203 = vsyncpa [#allocation18], 1
    %6204 = vsyncpa [#allocation21], 1
    %6205 = vsyncpa [#allocation24], 1
    %6206 = vsyncpa [#allocation4], 1

</llo_original>
